<compile_context>
chip_gen: v7x
topology: tpu7x:2x2x1
jax: 0.10.0
libtpu: 0.0.40
codegen_flags: <defaults>
</compile_context>

<pallas_src>
import math

import jax
import jax.numpy as jnp
from jax import lax
from jax.experimental import pallas as pl
from jax.experimental.pallas import tpu as pltpu

# ----------------------------- config (small) --------------------------------
VOCAB = 128          # vocab_size (global in the reference module; chosen here)
HIDDEN = 64          # hidden_size
LAYERS = 2           # num_layers
HEADS = 4            # num_heads
FFN = 4 * HIDDEN     # dim_feedforward
HEAD_DIM = HIDDEN // HEADS
LN_EPS = 1e-5
B, S = 2, 8          # batch, sequence
M = B * S            # flattened rows


def _erf(z):
    """erf via Abramowitz & Stegun 7.1.26 (|abs err| < 1.5e-7).

    Uses only abs/mul/add/div/exp/where, all of which have Mosaic lowerings,
    so exact-GELU semantics are preserved to ~f32 round-off without relying on
    a lax.erf lowering rule.
    """
    a1, a2, a3, a4, a5 = (0.254829592, -0.284496736, 1.421413741,
                          -1.453152027, 1.061405429)
    p = 0.3275911
    az = jnp.abs(z)
    t = 1.0 / (1.0 + p * az)
    poly = ((((a5 * t + a4) * t + a3) * t + a2) * t + a1) * t
    e = 1.0 - poly * jnp.exp(-az * az)
    return jnp.where(z < 0.0, -e, e)


# ------------------------------ fused Pallas kernel ---------------------------
def _fused_model_kernel(ids_ref, emb_ref,
                        w_in_ref, b_in_ref, w_out_ref, b_out_ref,
                        ln1_g_ref, ln1_b_ref,
                        w_ff1_ref, b_ff1_ref, w_ff2_ref, b_ff2_ref,
                        ln2_g_ref, ln2_b_ref,
                        norm_g_ref, norm_b_ref, fc_w_ref, fc_b_ref,
                        o_ref):
    """Whole TinyLLM forward on VMEM-resident data.

    ids_ref: (B*S, 1) int32 token ids. emb_ref: (VOCAB, D) embedding table.
    Per-layer weight refs are stacked along a leading LAYERS axis.
    Output o_ref: (B*S, VOCAB) f32 logits.
    """
    inv_sqrt2 = 1.0 / math.sqrt(2.0)
    qk_scale = 1.0 / math.sqrt(HEAD_DIM)

    def layer_norm(x, g, b):
        mean = jnp.mean(x, axis=-1, keepdims=True)
        xc = x - mean
        var = jnp.mean(xc * xc, axis=-1, keepdims=True)
        return xc * lax.rsqrt(var + LN_EPS) * g + b

    def gelu(x):                              # exact (erf) gelu, matching F.gelu
        return 0.5 * x * (1.0 + _erf(x * inv_sqrt2))

    # --- embedding: one-hot row gather as an MXU matmul (no XLA gather) ---
    ids = ids_ref[...]                                                  # (M, 1)
    vocab_iota = lax.broadcasted_iota(jnp.int32, (M, VOCAB), 1)
    onehot = jnp.where(ids == vocab_iota, 1.0, 0.0)                     # (M, V) f32
    x = jnp.dot(onehot, emb_ref[...],
                preferred_element_type=jnp.float32)                     # (M, D)

    for l in range(LAYERS):                   # static unroll (LAYERS = 2)
        # Hoist all per-layer params once (no re-broadcast inside inner loops).
        w_in = w_in_ref[l]
        b_in = b_in_ref[l]                                              # (1, 3D)
        w_out = w_out_ref[l]
        b_out = b_out_ref[l]                                            # (1, D)
        ln1_g = ln1_g_ref[l]
        ln1_b = ln1_b_ref[l]
        w_ff1 = w_ff1_ref[l]
        b_ff1 = b_ff1_ref[l]                                            # (1, FFN)
        w_ff2 = w_ff2_ref[l]
        b_ff2 = b_ff2_ref[l]                                            # (1, D)
        ln2_g = ln2_g_ref[l]
        ln2_b = ln2_b_ref[l]

        # --- multi-head self-attention (full, no mask) ---
        qkv = jnp.dot(x, w_in, preferred_element_type=jnp.float32) + b_in  # (M, 3D)
        q = qkv[:, 0:HIDDEN] * qk_scale          # fold 1/sqrt(Dh) into q once
        k = qkv[:, HIDDEN:2 * HIDDEN]
        v = qkv[:, 2 * HIDDEN:3 * HIDDEN]

        batch_rows = []
        for bi in range(B):                      # static unroll over batch
            r0 = bi * S
            head_cols = []
            for hi in range(HEADS):              # static unroll over heads
                c0 = hi * HEAD_DIM
                qh = q[r0:r0 + S, c0:c0 + HEAD_DIM]                     # (S, Dh)
                kh = k[r0:r0 + S, c0:c0 + HEAD_DIM]
                vh = v[r0:r0 + S, c0:c0 + HEAD_DIM]
                # scores = qh @ kh^T without an explicit transpose.
                sc = lax.dot_general(qh, kh, (((1,), (1,)), ((), ())),
                                     preferred_element_type=jnp.float32)  # (S, S)
                sc = sc - jnp.max(sc, axis=-1, keepdims=True)
                p = jnp.exp(sc)
                p = p * pl.reciprocal(jnp.sum(p, axis=-1, keepdims=True),
                                      approx=True)
                oh = jnp.dot(p, vh, preferred_element_type=jnp.float32)  # (S, Dh)
                head_cols.append(oh)
            batch_rows.append(jnp.concatenate(head_cols, axis=-1))       # (S, D)
        attn = jnp.concatenate(batch_rows, axis=0)                       # (M, D)
        attn = jnp.dot(attn, w_out, preferred_element_type=jnp.float32) + b_out

        # residual + LayerNorm1 (post-norm; dropout = identity in eval)
        h1 = layer_norm(x + attn, ln1_g, ln1_b)

        # --- feed-forward: linear1 -> gelu -> linear2 ---
        ff = gelu(jnp.dot(h1, w_ff1, preferred_element_type=jnp.float32) + b_ff1)
        ff = jnp.dot(ff, w_ff2, preferred_element_type=jnp.float32) + b_ff2

        # residual + LayerNorm2
        x = layer_norm(h1 + ff, ln2_g, ln2_b)

    # --- final LayerNorm + vocab projection (lane-dense N = 128 output) ---
    xf = layer_norm(x, norm_g_ref[...], norm_b_ref[...])
    logits = jnp.dot(xf, fc_w_ref[...],
                     preferred_element_type=jnp.float32) + fc_b_ref[...]
    o_ref[...] = logits.astype(o_ref.dtype)


def tiny_llm_forward(token_ids, params):
    """token_ids: (B, S) int32 -> logits (B, S, VOCAB) f32."""
    ids2d = token_ids.reshape(M, 1).astype(jnp.int32)

    stk = params["stacked"]
    logits2d = pl.pallas_call(
        _fused_model_kernel,
        out_shape=jax.ShapeDtypeStruct((M, VOCAB), jnp.float32),
        compiler_params=pltpu.CompilerParams(
            vmem_limit_bytes=16 * 1024 * 1024),   # resident set << 1 MiB
    )(
        ids2d, params["embedding"],
        stk["w_in"], stk["b_in"], stk["w_out"], stk["b_out"],
        stk["ln1_g"], stk["ln1_b"],
        stk["w_ff1"], stk["b_ff1"], stk["w_ff2"], stk["b_ff2"],
        stk["ln2_g"], stk["ln2_b"],
        params["norm_g"], params["norm_b"], params["fc_w"], params["fc_b"],
    )
    return logits2d.reshape(B, S, VOCAB)


# ------------------------------ parameter init ---------------------------------
def init_params(key):
    def nrm(k, shape, scale=0.02):
        return scale * jax.random.normal(k, shape, dtype=jnp.float32)

    keys = jax.random.split(key, 2 + LAYERS)
    params = {
        "embedding": nrm(keys[0], (VOCAB, HIDDEN)),
        "norm_g": jnp.ones((1, HIDDEN), jnp.float32),
        "norm_b": jnp.zeros((1, HIDDEN), jnp.float32),
        "fc_w": nrm(keys[1], (HIDDEN, VOCAB)),
        "fc_b": jnp.zeros((1, VOCAB), jnp.float32),
    }

    names = ["w_in", "b_in", "w_out", "b_out", "ln1_g", "ln1_b",
             "w_ff1", "b_ff1", "w_ff2", "b_ff2", "ln2_g", "ln2_b"]
    per = {n: [] for n in names}
    for l in range(LAYERS):
        k = jax.random.split(keys[2 + l], 4)
        per["w_in"].append(nrm(k[0], (HIDDEN, 3 * HIDDEN)))
        per["b_in"].append(jnp.zeros((1, 3 * HIDDEN), jnp.float32))
        per["w_out"].append(nrm(k[1], (HIDDEN, HIDDEN)))
        per["b_out"].append(jnp.zeros((1, HIDDEN), jnp.float32))
        per["ln1_g"].append(jnp.ones((1, HIDDEN), jnp.float32))
        per["ln1_b"].append(jnp.zeros((1, HIDDEN), jnp.float32))
        per["w_ff1"].append(nrm(k[2], (HIDDEN, FFN)))
        per["b_ff1"].append(jnp.zeros((1, FFN), jnp.float32))
        per["w_ff2"].append(nrm(k[3], (FFN, HIDDEN)))
        per["b_ff2"].append(jnp.zeros((1, HIDDEN), jnp.float32))
        per["ln2_g"].append(jnp.ones((1, HIDDEN), jnp.float32))
        per["ln2_b"].append(jnp.zeros((1, HIDDEN), jnp.float32))
    params["stacked"] = {n: jnp.stack(v) for n, v in per.items()}
    return params


# ----------------------------------- main --------------------------------------
if __name__ == "__main__":
    key = jax.random.PRNGKey(0)
    pkey, xkey = jax.random.split(key)
    params = init_params(pkey)
    token_ids = jax.random.randint(xkey, (B, S), 0, VOCAB, dtype=jnp.int32)

    logits = jax.jit(tiny_llm_forward)(token_ids, params)
    jax.block_until_ready(logits)
    assert logits.shape == (B, S, VOCAB) and logits.dtype == jnp.float32
    assert bool(jnp.all(jnp.isfinite(logits)))
    print("KERNEL_OK")
</pallas_src>

<mosaic_0001>
module attributes {stable_mosaic.version = 11 : i64} {
  func.func @_fused_model_kernel(%arg0: memref<16x1xi32, #tpu.memory_space<vmem>>, %arg1: memref<128x64xf32, #tpu.memory_space<vmem>>, %arg2: memref<2x64x192xf32, #tpu.memory_space<vmem>>, %arg3: memref<2x1x192xf32, #tpu.memory_space<vmem>>, %arg4: memref<2x64x64xf32, #tpu.memory_space<vmem>>, %arg5: memref<2x1x64xf32, #tpu.memory_space<vmem>>, %arg6: memref<2x1x64xf32, #tpu.memory_space<vmem>>, %arg7: memref<2x1x64xf32, #tpu.memory_space<vmem>>, %arg8: memref<2x64x256xf32, #tpu.memory_space<vmem>>, %arg9: memref<2x1x256xf32, #tpu.memory_space<vmem>>, %arg10: memref<2x256x64xf32, #tpu.memory_space<vmem>>, %arg11: memref<2x1x64xf32, #tpu.memory_space<vmem>>, %arg12: memref<2x1x64xf32, #tpu.memory_space<vmem>>, %arg13: memref<2x1x64xf32, #tpu.memory_space<vmem>>, %arg14: memref<1x64xf32, #tpu.memory_space<vmem>>, %arg15: memref<1x64xf32, #tpu.memory_space<vmem>>, %arg16: memref<64x128xf32, #tpu.memory_space<vmem>>, %arg17: memref<1x128xf32, #tpu.memory_space<vmem>>, %arg18: memref<16x128xf32, #tpu.memory_space<vmem>>) attributes {dimension_semantics = [], scalar_prefetch = 0 : i64, scratch_operands = 0 : i64, tpu.core_type = #tpu.core_type<tc>} {
    %c0 = arith.constant 0 : index
    %c0_0 = arith.constant 0 : index
    %0 = vector.load %arg0[%c0, %c0_0] : memref<16x1xi32, #tpu.memory_space<vmem>>, vector<16x1xi32>
    %1 = tpu.iota {dimensions = array<i32: 1>} : vector<16x128xi32>
    %2 = vector.broadcast %0 : vector<16x1xi32> to vector<16x128xi32>
    %3 = arith.cmpi eq, %2, %1 : vector<16x128xi32>
    %cst = arith.constant 1.000000e+00 : f32
    %cst_1 = arith.constant 0.000000e+00 : f32
    %4 = vector.broadcast %cst : f32 to vector<16x128xf32>
    %5 = vector.broadcast %cst_1 : f32 to vector<16x128xf32>
    %6 = arith.select %3, %4, %5 : vector<16x128xi1>, vector<16x128xf32>
    %c0_2 = arith.constant 0 : index
    %c0_3 = arith.constant 0 : index
    %7 = vector.load %arg1[%c0_2, %c0_3] : memref<128x64xf32, #tpu.memory_space<vmem>>, vector<128x64xf32>
    %cst_4 = arith.constant dense<0.000000e+00> : vector<16x64xf32>
    %8 = tpu.matmul %6, %7, %cst_4 {dimension_numbers = #tpu.dot_dimension_numbers<[1], [0], [0], [1], [0, 0, 1, 1], [], []>} : vector<16x128xf32>, vector<128x64xf32>, vector<16x64xf32> -> vector<16x64xf32>
    %c0_5 = arith.constant 0 : index
    %c0_6 = arith.constant 0 : index
    %c0_7 = arith.constant 0 : index
    %9 = vector.load %arg2[%c0_5, %c0_6, %c0_7] : memref<2x64x192xf32, #tpu.memory_space<vmem>>, vector<1x64x192xf32>
    %10 = vector.shape_cast %9 : vector<1x64x192xf32> to vector<64x192xf32>
    %c0_8 = arith.constant 0 : index
    %c0_9 = arith.constant 0 : index
    %c0_10 = arith.constant 0 : index
    %11 = vector.load %arg3[%c0_8, %c0_9, %c0_10] : memref<2x1x192xf32, #tpu.memory_space<vmem>>, vector<1x1x192xf32>
    %12 = vector.shape_cast %11 : vector<1x1x192xf32> to vector<1x192xf32>
    %c0_11 = arith.constant 0 : index
    %c0_12 = arith.constant 0 : index
    %c0_13 = arith.constant 0 : index
    %13 = vector.load %arg4[%c0_11, %c0_12, %c0_13] : memref<2x64x64xf32, #tpu.memory_space<vmem>>, vector<1x64x64xf32>
    %14 = vector.shape_cast %13 : vector<1x64x64xf32> to vector<64x64xf32>
    %c0_14 = arith.constant 0 : index
    %c0_15 = arith.constant 0 : index
    %c0_16 = arith.constant 0 : index
    %15 = vector.load %arg5[%c0_14, %c0_15, %c0_16] : memref<2x1x64xf32, #tpu.memory_space<vmem>>, vector<1x1x64xf32>
    %16 = vector.shape_cast %15 : vector<1x1x64xf32> to vector<1x64xf32>
    %c0_17 = arith.constant 0 : index
    %c0_18 = arith.constant 0 : index
    %c0_19 = arith.constant 0 : index
    %17 = vector.load %arg6[%c0_17, %c0_18, %c0_19] : memref<2x1x64xf32, #tpu.memory_space<vmem>>, vector<1x1x64xf32>
    %18 = vector.shape_cast %17 : vector<1x1x64xf32> to vector<1x64xf32>
    %c0_20 = arith.constant 0 : index
    %c0_21 = arith.constant 0 : index
    %c0_22 = arith.constant 0 : index
    %19 = vector.load %arg7[%c0_20, %c0_21, %c0_22] : memref<2x1x64xf32, #tpu.memory_space<vmem>>, vector<1x1x64xf32>
    %20 = vector.shape_cast %19 : vector<1x1x64xf32> to vector<1x64xf32>
    %c0_23 = arith.constant 0 : index
    %c0_24 = arith.constant 0 : index
    %c0_25 = arith.constant 0 : index
    %21 = vector.load %arg8[%c0_23, %c0_24, %c0_25] : memref<2x64x256xf32, #tpu.memory_space<vmem>>, vector<1x64x256xf32>
    %22 = vector.shape_cast %21 : vector<1x64x256xf32> to vector<64x256xf32>
    %c0_26 = arith.constant 0 : index
    %c0_27 = arith.constant 0 : index
    %c0_28 = arith.constant 0 : index
    %23 = vector.load %arg9[%c0_26, %c0_27, %c0_28] : memref<2x1x256xf32, #tpu.memory_space<vmem>>, vector<1x1x256xf32>
    %24 = vector.shape_cast %23 : vector<1x1x256xf32> to vector<1x256xf32>
    %c0_29 = arith.constant 0 : index
    %c0_30 = arith.constant 0 : index
    %c0_31 = arith.constant 0 : index
    %25 = vector.load %arg10[%c0_29, %c0_30, %c0_31] : memref<2x256x64xf32, #tpu.memory_space<vmem>>, vector<1x256x64xf32>
    %26 = vector.shape_cast %25 : vector<1x256x64xf32> to vector<256x64xf32>
    %c0_32 = arith.constant 0 : index
    %c0_33 = arith.constant 0 : index
    %c0_34 = arith.constant 0 : index
    %27 = vector.load %arg11[%c0_32, %c0_33, %c0_34] : memref<2x1x64xf32, #tpu.memory_space<vmem>>, vector<1x1x64xf32>
    %28 = vector.shape_cast %27 : vector<1x1x64xf32> to vector<1x64xf32>
    %c0_35 = arith.constant 0 : index
    %c0_36 = arith.constant 0 : index
    %c0_37 = arith.constant 0 : index
    %29 = vector.load %arg12[%c0_35, %c0_36, %c0_37] : memref<2x1x64xf32, #tpu.memory_space<vmem>>, vector<1x1x64xf32>
    %30 = vector.shape_cast %29 : vector<1x1x64xf32> to vector<1x64xf32>
    %c0_38 = arith.constant 0 : index
    %c0_39 = arith.constant 0 : index
    %c0_40 = arith.constant 0 : index
    %31 = vector.load %arg13[%c0_38, %c0_39, %c0_40] : memref<2x1x64xf32, #tpu.memory_space<vmem>>, vector<1x1x64xf32>
    %32 = vector.shape_cast %31 : vector<1x1x64xf32> to vector<1x64xf32>
    %cst_41 = arith.constant dense<0.000000e+00> : vector<16x192xf32>
    %33 = tpu.matmul %8, %10, %cst_41 {dimension_numbers = #tpu.dot_dimension_numbers<[1], [0], [0], [1], [0, 0, 1, 1], [], []>} : vector<16x64xf32>, vector<64x192xf32>, vector<16x192xf32> -> vector<16x192xf32>
    %34 = vector.broadcast %12 : vector<1x192xf32> to vector<16x192xf32>
    %35 = arith.addf %33, %34 : vector<16x192xf32>
    %36 = vector.extract_strided_slice %35 {offsets = [0, 0], sizes = [16, 64], strides = [1, 1]} : vector<16x192xf32> to vector<16x64xf32>
    %cst_42 = arith.constant 2.500000e-01 : f32
    %37 = vector.broadcast %cst_42 : f32 to vector<16x64xf32>
    %38 = arith.mulf %36, %37 : vector<16x64xf32>
    %39 = vector.extract_strided_slice %35 {offsets = [0, 64], sizes = [16, 64], strides = [1, 1]} : vector<16x192xf32> to vector<16x64xf32>
    %40 = vector.extract_strided_slice %35 {offsets = [0, 128], sizes = [16, 64], strides = [1, 1]} : vector<16x192xf32> to vector<16x64xf32>
    %41 = vector.extract_strided_slice %38 {offsets = [0, 0], sizes = [8, 16], strides = [1, 1]} : vector<16x64xf32> to vector<8x16xf32>
    %42 = vector.extract_strided_slice %39 {offsets = [0, 0], sizes = [8, 16], strides = [1, 1]} : vector<16x64xf32> to vector<8x16xf32>
    %43 = vector.extract_strided_slice %40 {offsets = [0, 0], sizes = [8, 16], strides = [1, 1]} : vector<16x64xf32> to vector<8x16xf32>
    %cst_43 = arith.constant dense<0.000000e+00> : vector<8x8xf32>
    %44 = tpu.matmul %41, %42, %cst_43 {dimension_numbers = #tpu.dot_dimension_numbers<[1], [1], [0], [0], [0, 0, 1, 0], [], []>} : vector<8x16xf32>, vector<8x16xf32>, vector<8x8xf32> -> vector<8x8xf32>
    %cst_44 = arith.constant dense<0xFF800000> : vector<8xf32>
    %45 = vector.multi_reduction <maximumf>, %44, %cst_44 [1] : vector<8x8xf32> to vector<8xf32>
    %46 = vector.shape_cast %45 : vector<8xf32> to vector<8x1xf32>
    %47 = vector.broadcast %46 : vector<8x1xf32> to vector<8x8xf32>
    %48 = arith.subf %44, %47 : vector<8x8xf32>
    %49 = math.exp %48 : vector<8x8xf32>
    %cst_45 = arith.constant dense<0.000000e+00> : vector<8xf32>
    %50 = vector.multi_reduction <add>, %49, %cst_45 [1] : vector<8x8xf32> to vector<8xf32>
    %51 = vector.shape_cast %50 : vector<8xf32> to vector<8x1xf32>
    %52 = tpu.reciprocal %51 {approx = true} : vector<8x1xf32> -> vector<8x1xf32>
    %53 = vector.broadcast %52 : vector<8x1xf32> to vector<8x8xf32>
    %54 = arith.mulf %49, %53 : vector<8x8xf32>
    %cst_46 = arith.constant dense<0.000000e+00> : vector<8x16xf32>
    %55 = tpu.matmul %54, %43, %cst_46 {dimension_numbers = #tpu.dot_dimension_numbers<[1], [0], [0], [1], [0, 0, 1, 1], [], []>} : vector<8x8xf32>, vector<8x16xf32>, vector<8x16xf32> -> vector<8x16xf32>
    %56 = vector.extract_strided_slice %38 {offsets = [0, 16], sizes = [8, 16], strides = [1, 1]} : vector<16x64xf32> to vector<8x16xf32>
    %57 = vector.extract_strided_slice %39 {offsets = [0, 16], sizes = [8, 16], strides = [1, 1]} : vector<16x64xf32> to vector<8x16xf32>
    %58 = vector.extract_strided_slice %40 {offsets = [0, 16], sizes = [8, 16], strides = [1, 1]} : vector<16x64xf32> to vector<8x16xf32>
    %cst_47 = arith.constant dense<0.000000e+00> : vector<8x8xf32>
    %59 = tpu.matmul %56, %57, %cst_47 {dimension_numbers = #tpu.dot_dimension_numbers<[1], [1], [0], [0], [0, 0, 1, 0], [], []>} : vector<8x16xf32>, vector<8x16xf32>, vector<8x8xf32> -> vector<8x8xf32>
    %cst_48 = arith.constant dense<0xFF800000> : vector<8xf32>
    %60 = vector.multi_reduction <maximumf>, %59, %cst_48 [1] : vector<8x8xf32> to vector<8xf32>
    %61 = vector.shape_cast %60 : vector<8xf32> to vector<8x1xf32>
    %62 = vector.broadcast %61 : vector<8x1xf32> to vector<8x8xf32>
    %63 = arith.subf %59, %62 : vector<8x8xf32>
    %64 = math.exp %63 : vector<8x8xf32>
    %cst_49 = arith.constant dense<0.000000e+00> : vector<8xf32>
    %65 = vector.multi_reduction <add>, %64, %cst_49 [1] : vector<8x8xf32> to vector<8xf32>
    %66 = vector.shape_cast %65 : vector<8xf32> to vector<8x1xf32>
    %67 = tpu.reciprocal %66 {approx = true} : vector<8x1xf32> -> vector<8x1xf32>
    %68 = vector.broadcast %67 : vector<8x1xf32> to vector<8x8xf32>
    %69 = arith.mulf %64, %68 : vector<8x8xf32>
    %cst_50 = arith.constant dense<0.000000e+00> : vector<8x16xf32>
    %70 = tpu.matmul %69, %58, %cst_50 {dimension_numbers = #tpu.dot_dimension_numbers<[1], [0], [0], [1], [0, 0, 1, 1], [], []>} : vector<8x8xf32>, vector<8x16xf32>, vector<8x16xf32> -> vector<8x16xf32>
    %71 = vector.extract_strided_slice %38 {offsets = [0, 32], sizes = [8, 16], strides = [1, 1]} : vector<16x64xf32> to vector<8x16xf32>
    %72 = vector.extract_strided_slice %39 {offsets = [0, 32], sizes = [8, 16], strides = [1, 1]} : vector<16x64xf32> to vector<8x16xf32>
    %73 = vector.extract_strided_slice %40 {offsets = [0, 32], sizes = [8, 16], strides = [1, 1]} : vector<16x64xf32> to vector<8x16xf32>
    %cst_51 = arith.constant dense<0.000000e+00> : vector<8x8xf32>
    %74 = tpu.matmul %71, %72, %cst_51 {dimension_numbers = #tpu.dot_dimension_numbers<[1], [1], [0], [0], [0, 0, 1, 0], [], []>} : vector<8x16xf32>, vector<8x16xf32>, vector<8x8xf32> -> vector<8x8xf32>
    %cst_52 = arith.constant dense<0xFF800000> : vector<8xf32>
    %75 = vector.multi_reduction <maximumf>, %74, %cst_52 [1] : vector<8x8xf32> to vector<8xf32>
    %76 = vector.shape_cast %75 : vector<8xf32> to vector<8x1xf32>
    %77 = vector.broadcast %76 : vector<8x1xf32> to vector<8x8xf32>
    %78 = arith.subf %74, %77 : vector<8x8xf32>
    %79 = math.exp %78 : vector<8x8xf32>
    %cst_53 = arith.constant dense<0.000000e+00> : vector<8xf32>
    %80 = vector.multi_reduction <add>, %79, %cst_53 [1] : vector<8x8xf32> to vector<8xf32>
    %81 = vector.shape_cast %80 : vector<8xf32> to vector<8x1xf32>
    %82 = tpu.reciprocal %81 {approx = true} : vector<8x1xf32> -> vector<8x1xf32>
    %83 = vector.broadcast %82 : vector<8x1xf32> to vector<8x8xf32>
    %84 = arith.mulf %79, %83 : vector<8x8xf32>
    %cst_54 = arith.constant dense<0.000000e+00> : vector<8x16xf32>
    %85 = tpu.matmul %84, %73, %cst_54 {dimension_numbers = #tpu.dot_dimension_numbers<[1], [0], [0], [1], [0, 0, 1, 1], [], []>} : vector<8x8xf32>, vector<8x16xf32>, vector<8x16xf32> -> vector<8x16xf32>
    %86 = vector.extract_strided_slice %38 {offsets = [0, 48], sizes = [8, 16], strides = [1, 1]} : vector<16x64xf32> to vector<8x16xf32>
    %87 = vector.extract_strided_slice %39 {offsets = [0, 48], sizes = [8, 16], strides = [1, 1]} : vector<16x64xf32> to vector<8x16xf32>
    %88 = vector.extract_strided_slice %40 {offsets = [0, 48], sizes = [8, 16], strides = [1, 1]} : vector<16x64xf32> to vector<8x16xf32>
    %cst_55 = arith.constant dense<0.000000e+00> : vector<8x8xf32>
    %89 = tpu.matmul %86, %87, %cst_55 {dimension_numbers = #tpu.dot_dimension_numbers<[1], [1], [0], [0], [0, 0, 1, 0], [], []>} : vector<8x16xf32>, vector<8x16xf32>, vector<8x8xf32> -> vector<8x8xf32>
    %cst_56 = arith.constant dense<0xFF800000> : vector<8xf32>
    %90 = vector.multi_reduction <maximumf>, %89, %cst_56 [1] : vector<8x8xf32> to vector<8xf32>
    %91 = vector.shape_cast %90 : vector<8xf32> to vector<8x1xf32>
    %92 = vector.broadcast %91 : vector<8x1xf32> to vector<8x8xf32>
    %93 = arith.subf %89, %92 : vector<8x8xf32>
    %94 = math.exp %93 : vector<8x8xf32>
    %cst_57 = arith.constant dense<0.000000e+00> : vector<8xf32>
    %95 = vector.multi_reduction <add>, %94, %cst_57 [1] : vector<8x8xf32> to vector<8xf32>
    %96 = vector.shape_cast %95 : vector<8xf32> to vector<8x1xf32>
    %97 = tpu.reciprocal %96 {approx = true} : vector<8x1xf32> -> vector<8x1xf32>
    %98 = vector.broadcast %97 : vector<8x1xf32> to vector<8x8xf32>
    %99 = arith.mulf %94, %98 : vector<8x8xf32>
    %cst_58 = arith.constant dense<0.000000e+00> : vector<8x16xf32>
    %100 = tpu.matmul %99, %88, %cst_58 {dimension_numbers = #tpu.dot_dimension_numbers<[1], [0], [0], [1], [0, 0, 1, 1], [], []>} : vector<8x8xf32>, vector<8x16xf32>, vector<8x16xf32> -> vector<8x16xf32>
    %101 = tpu.concatenate %55, %70, %85, %100 in 1 : vector<8x16xf32>, vector<8x16xf32>, vector<8x16xf32>, vector<8x16xf32> -> vector<8x64xf32>
    %102 = vector.extract_strided_slice %38 {offsets = [8, 0], sizes = [8, 16], strides = [1, 1]} : vector<16x64xf32> to vector<8x16xf32>
    %103 = vector.extract_strided_slice %39 {offsets = [8, 0], sizes = [8, 16], strides = [1, 1]} : vector<16x64xf32> to vector<8x16xf32>
    %104 = vector.extract_strided_slice %40 {offsets = [8, 0], sizes = [8, 16], strides = [1, 1]} : vector<16x64xf32> to vector<8x16xf32>
    %cst_59 = arith.constant dense<0.000000e+00> : vector<8x8xf32>
    %105 = tpu.matmul %102, %103, %cst_59 {dimension_numbers = #tpu.dot_dimension_numbers<[1], [1], [0], [0], [0, 0, 1, 0], [], []>} : vector<8x16xf32>, vector<8x16xf32>, vector<8x8xf32> -> vector<8x8xf32>
    %cst_60 = arith.constant dense<0xFF800000> : vector<8xf32>
    %106 = vector.multi_reduction <maximumf>, %105, %cst_60 [1] : vector<8x8xf32> to vector<8xf32>
    %107 = vector.shape_cast %106 : vector<8xf32> to vector<8x1xf32>
    %108 = vector.broadcast %107 : vector<8x1xf32> to vector<8x8xf32>
    %109 = arith.subf %105, %108 : vector<8x8xf32>
    %110 = math.exp %109 : vector<8x8xf32>
    %cst_61 = arith.constant dense<0.000000e+00> : vector<8xf32>
    %111 = vector.multi_reduction <add>, %110, %cst_61 [1] : vector<8x8xf32> to vector<8xf32>
    %112 = vector.shape_cast %111 : vector<8xf32> to vector<8x1xf32>
    %113 = tpu.reciprocal %112 {approx = true} : vector<8x1xf32> -> vector<8x1xf32>
    %114 = vector.broadcast %113 : vector<8x1xf32> to vector<8x8xf32>
    %115 = arith.mulf %110, %114 : vector<8x8xf32>
    %cst_62 = arith.constant dense<0.000000e+00> : vector<8x16xf32>
    %116 = tpu.matmul %115, %104, %cst_62 {dimension_numbers = #tpu.dot_dimension_numbers<[1], [0], [0], [1], [0, 0, 1, 1], [], []>} : vector<8x8xf32>, vector<8x16xf32>, vector<8x16xf32> -> vector<8x16xf32>
    %117 = vector.extract_strided_slice %38 {offsets = [8, 16], sizes = [8, 16], strides = [1, 1]} : vector<16x64xf32> to vector<8x16xf32>
    %118 = vector.extract_strided_slice %39 {offsets = [8, 16], sizes = [8, 16], strides = [1, 1]} : vector<16x64xf32> to vector<8x16xf32>
    %119 = vector.extract_strided_slice %40 {offsets = [8, 16], sizes = [8, 16], strides = [1, 1]} : vector<16x64xf32> to vector<8x16xf32>
    %cst_63 = arith.constant dense<0.000000e+00> : vector<8x8xf32>
    %120 = tpu.matmul %117, %118, %cst_63 {dimension_numbers = #tpu.dot_dimension_numbers<[1], [1], [0], [0], [0, 0, 1, 0], [], []>} : vector<8x16xf32>, vector<8x16xf32>, vector<8x8xf32> -> vector<8x8xf32>
    %cst_64 = arith.constant dense<0xFF800000> : vector<8xf32>
    %121 = vector.multi_reduction <maximumf>, %120, %cst_64 [1] : vector<8x8xf32> to vector<8xf32>
    %122 = vector.shape_cast %121 : vector<8xf32> to vector<8x1xf32>
    %123 = vector.broadcast %122 : vector<8x1xf32> to vector<8x8xf32>
    %124 = arith.subf %120, %123 : vector<8x8xf32>
    %125 = math.exp %124 : vector<8x8xf32>
    %cst_65 = arith.constant dense<0.000000e+00> : vector<8xf32>
    %126 = vector.multi_reduction <add>, %125, %cst_65 [1] : vector<8x8xf32> to vector<8xf32>
    %127 = vector.shape_cast %126 : vector<8xf32> to vector<8x1xf32>
    %128 = tpu.reciprocal %127 {approx = true} : vector<8x1xf32> -> vector<8x1xf32>
    %129 = vector.broadcast %128 : vector<8x1xf32> to vector<8x8xf32>
    %130 = arith.mulf %125, %129 : vector<8x8xf32>
    %cst_66 = arith.constant dense<0.000000e+00> : vector<8x16xf32>
    %131 = tpu.matmul %130, %119, %cst_66 {dimension_numbers = #tpu.dot_dimension_numbers<[1], [0], [0], [1], [0, 0, 1, 1], [], []>} : vector<8x8xf32>, vector<8x16xf32>, vector<8x16xf32> -> vector<8x16xf32>
    %132 = vector.extract_strided_slice %38 {offsets = [8, 32], sizes = [8, 16], strides = [1, 1]} : vector<16x64xf32> to vector<8x16xf32>
    %133 = vector.extract_strided_slice %39 {offsets = [8, 32], sizes = [8, 16], strides = [1, 1]} : vector<16x64xf32> to vector<8x16xf32>
    %134 = vector.extract_strided_slice %40 {offsets = [8, 32], sizes = [8, 16], strides = [1, 1]} : vector<16x64xf32> to vector<8x16xf32>
    %cst_67 = arith.constant dense<0.000000e+00> : vector<8x8xf32>
    %135 = tpu.matmul %132, %133, %cst_67 {dimension_numbers = #tpu.dot_dimension_numbers<[1], [1], [0], [0], [0, 0, 1, 0], [], []>} : vector<8x16xf32>, vector<8x16xf32>, vector<8x8xf32> -> vector<8x8xf32>
    %cst_68 = arith.constant dense<0xFF800000> : vector<8xf32>
    %136 = vector.multi_reduction <maximumf>, %135, %cst_68 [1] : vector<8x8xf32> to vector<8xf32>
    %137 = vector.shape_cast %136 : vector<8xf32> to vector<8x1xf32>
    %138 = vector.broadcast %137 : vector<8x1xf32> to vector<8x8xf32>
    %139 = arith.subf %135, %138 : vector<8x8xf32>
    %140 = math.exp %139 : vector<8x8xf32>
    %cst_69 = arith.constant dense<0.000000e+00> : vector<8xf32>
    %141 = vector.multi_reduction <add>, %140, %cst_69 [1] : vector<8x8xf32> to vector<8xf32>
    %142 = vector.shape_cast %141 : vector<8xf32> to vector<8x1xf32>
    %143 = tpu.reciprocal %142 {approx = true} : vector<8x1xf32> -> vector<8x1xf32>
    %144 = vector.broadcast %143 : vector<8x1xf32> to vector<8x8xf32>
    %145 = arith.mulf %140, %144 : vector<8x8xf32>
    %cst_70 = arith.constant dense<0.000000e+00> : vector<8x16xf32>
    %146 = tpu.matmul %145, %134, %cst_70 {dimension_numbers = #tpu.dot_dimension_numbers<[1], [0], [0], [1], [0, 0, 1, 1], [], []>} : vector<8x8xf32>, vector<8x16xf32>, vector<8x16xf32> -> vector<8x16xf32>
    %147 = vector.extract_strided_slice %38 {offsets = [8, 48], sizes = [8, 16], strides = [1, 1]} : vector<16x64xf32> to vector<8x16xf32>
    %148 = vector.extract_strided_slice %39 {offsets = [8, 48], sizes = [8, 16], strides = [1, 1]} : vector<16x64xf32> to vector<8x16xf32>
    %149 = vector.extract_strided_slice %40 {offsets = [8, 48], sizes = [8, 16], strides = [1, 1]} : vector<16x64xf32> to vector<8x16xf32>
    %cst_71 = arith.constant dense<0.000000e+00> : vector<8x8xf32>
    %150 = tpu.matmul %147, %148, %cst_71 {dimension_numbers = #tpu.dot_dimension_numbers<[1], [1], [0], [0], [0, 0, 1, 0], [], []>} : vector<8x16xf32>, vector<8x16xf32>, vector<8x8xf32> -> vector<8x8xf32>
    %cst_72 = arith.constant dense<0xFF800000> : vector<8xf32>
    %151 = vector.multi_reduction <maximumf>, %150, %cst_72 [1] : vector<8x8xf32> to vector<8xf32>
    %152 = vector.shape_cast %151 : vector<8xf32> to vector<8x1xf32>
    %153 = vector.broadcast %152 : vector<8x1xf32> to vector<8x8xf32>
    %154 = arith.subf %150, %153 : vector<8x8xf32>
    %155 = math.exp %154 : vector<8x8xf32>
    %cst_73 = arith.constant dense<0.000000e+00> : vector<8xf32>
    %156 = vector.multi_reduction <add>, %155, %cst_73 [1] : vector<8x8xf32> to vector<8xf32>
    %157 = vector.shape_cast %156 : vector<8xf32> to vector<8x1xf32>
    %158 = tpu.reciprocal %157 {approx = true} : vector<8x1xf32> -> vector<8x1xf32>
    %159 = vector.broadcast %158 : vector<8x1xf32> to vector<8x8xf32>
    %160 = arith.mulf %155, %159 : vector<8x8xf32>
    %cst_74 = arith.constant dense<0.000000e+00> : vector<8x16xf32>
    %161 = tpu.matmul %160, %149, %cst_74 {dimension_numbers = #tpu.dot_dimension_numbers<[1], [0], [0], [1], [0, 0, 1, 1], [], []>} : vector<8x8xf32>, vector<8x16xf32>, vector<8x16xf32> -> vector<8x16xf32>
    %162 = tpu.concatenate %116, %131, %146, %161 in 1 : vector<8x16xf32>, vector<8x16xf32>, vector<8x16xf32>, vector<8x16xf32> -> vector<8x64xf32>
    %163 = tpu.concatenate %101, %162 in 0 : vector<8x64xf32>, vector<8x64xf32> -> vector<16x64xf32>
    %cst_75 = arith.constant dense<0.000000e+00> : vector<16x64xf32>
    %164 = tpu.matmul %163, %14, %cst_75 {dimension_numbers = #tpu.dot_dimension_numbers<[1], [0], [0], [1], [0, 0, 1, 1], [], []>} : vector<16x64xf32>, vector<64x64xf32>, vector<16x64xf32> -> vector<16x64xf32>
    %165 = vector.broadcast %16 : vector<1x64xf32> to vector<16x64xf32>
    %166 = arith.addf %164, %165 : vector<16x64xf32>
    %167 = arith.addf %8, %166 : vector<16x64xf32>
    %cst_76 = arith.constant dense<0.000000e+00> : vector<16xf32>
    %168 = vector.multi_reduction <add>, %167, %cst_76 [1] : vector<16x64xf32> to vector<16xf32>
    %169 = vector.shape_cast %168 : vector<16xf32> to vector<16x1xf32>
    %cst_77 = arith.constant 6.400000e+01 : f32
    %170 = vector.broadcast %cst_77 : f32 to vector<16x1xf32>
    %171 = arith.divf %169, %170 : vector<16x1xf32>
    %172 = vector.broadcast %171 : vector<16x1xf32> to vector<16x64xf32>
    %173 = arith.subf %167, %172 : vector<16x64xf32>
    %174 = arith.mulf %173, %173 : vector<16x64xf32>
    %cst_78 = arith.constant dense<0.000000e+00> : vector<16xf32>
    %175 = vector.multi_reduction <add>, %174, %cst_78 [1] : vector<16x64xf32> to vector<16xf32>
    %176 = vector.shape_cast %175 : vector<16xf32> to vector<16x1xf32>
    %cst_79 = arith.constant 6.400000e+01 : f32
    %177 = vector.broadcast %cst_79 : f32 to vector<16x1xf32>
    %178 = arith.divf %176, %177 : vector<16x1xf32>
    %cst_80 = arith.constant 9.99999974E-6 : f32
    %179 = vector.broadcast %cst_80 : f32 to vector<16x1xf32>
    %180 = arith.addf %178, %179 : vector<16x1xf32>
    %181 = math.rsqrt %180 : vector<16x1xf32>
    %182 = vector.broadcast %181 : vector<16x1xf32> to vector<16x64xf32>
    %183 = arith.mulf %173, %182 : vector<16x64xf32>
    %184 = vector.broadcast %18 : vector<1x64xf32> to vector<16x64xf32>
    %185 = arith.mulf %183, %184 : vector<16x64xf32>
    %186 = vector.broadcast %20 : vector<1x64xf32> to vector<16x64xf32>
    %187 = arith.addf %185, %186 : vector<16x64xf32>
    %cst_81 = arith.constant dense<0.000000e+00> : vector<16x256xf32>
    %188 = tpu.matmul %187, %22, %cst_81 {dimension_numbers = #tpu.dot_dimension_numbers<[1], [0], [0], [1], [0, 0, 1, 1], [], []>} : vector<16x64xf32>, vector<64x256xf32>, vector<16x256xf32> -> vector<16x256xf32>
    %189 = vector.broadcast %24 : vector<1x256xf32> to vector<16x256xf32>
    %190 = arith.addf %188, %189 : vector<16x256xf32>
    %cst_82 = arith.constant 5.000000e-01 : f32
    %191 = vector.broadcast %cst_82 : f32 to vector<16x256xf32>
    %192 = arith.mulf %191, %190 : vector<16x256xf32>
    %cst_83 = arith.constant 0.707106769 : f32
    %193 = vector.broadcast %cst_83 : f32 to vector<16x256xf32>
    %194 = arith.mulf %190, %193 : vector<16x256xf32>
    %195 = math.absf %194 : vector<16x256xf32>
    %cst_84 = arith.constant 0.327591091 : f32
    %196 = vector.broadcast %cst_84 : f32 to vector<16x256xf32>
    %197 = arith.mulf %196, %195 : vector<16x256xf32>
    %cst_85 = arith.constant 1.000000e+00 : f32
    %198 = vector.broadcast %cst_85 : f32 to vector<16x256xf32>
    %199 = arith.addf %198, %197 : vector<16x256xf32>
    %cst_86 = arith.constant 1.000000e+00 : f32
    %200 = vector.broadcast %cst_86 : f32 to vector<16x256xf32>
    %201 = arith.divf %200, %199 : vector<16x256xf32>
    %cst_87 = arith.constant 1.06140542 : f32
    %202 = vector.broadcast %cst_87 : f32 to vector<16x256xf32>
    %203 = arith.mulf %202, %201 : vector<16x256xf32>
    %cst_88 = arith.constant -1.45315206 : f32
    %204 = vector.broadcast %cst_88 : f32 to vector<16x256xf32>
    %205 = arith.addf %203, %204 : vector<16x256xf32>
    %206 = arith.mulf %205, %201 : vector<16x256xf32>
    %cst_89 = arith.constant 1.42141378 : f32
    %207 = vector.broadcast %cst_89 : f32 to vector<16x256xf32>
    %208 = arith.addf %206, %207 : vector<16x256xf32>
    %209 = arith.mulf %208, %201 : vector<16x256xf32>
    %cst_90 = arith.constant -0.284496725 : f32
    %210 = vector.broadcast %cst_90 : f32 to vector<16x256xf32>
    %211 = arith.addf %209, %210 : vector<16x256xf32>
    %212 = arith.mulf %211, %201 : vector<16x256xf32>
    %cst_91 = arith.constant 0.254829586 : f32
    %213 = vector.broadcast %cst_91 : f32 to vector<16x256xf32>
    %214 = arith.addf %212, %213 : vector<16x256xf32>
    %215 = arith.mulf %214, %201 : vector<16x256xf32>
    %cst_92 = arith.constant 0.000000e+00 : f32
    %216 = vector.broadcast %cst_92 : f32 to vector<16x256xf32>
    %217 = arith.subf %216, %195 : vector<16x256xf32>
    %218 = arith.mulf %217, %195 : vector<16x256xf32>
    %219 = math.exp %218 : vector<16x256xf32>
    %220 = arith.mulf %215, %219 : vector<16x256xf32>
    %cst_93 = arith.constant 1.000000e+00 : f32
    %221 = vector.broadcast %cst_93 : f32 to vector<16x256xf32>
    %222 = arith.subf %221, %220 : vector<16x256xf32>
    %cst_94 = arith.constant 0.000000e+00 : f32
    %223 = vector.broadcast %cst_94 : f32 to vector<16x256xf32>
    %224 = arith.cmpf olt, %194, %223 : vector<16x256xf32>
    %cst_95 = arith.constant 0.000000e+00 : f32
    %225 = vector.broadcast %cst_95 : f32 to vector<16x256xf32>
    %226 = arith.subf %225, %222 : vector<16x256xf32>
    %227 = arith.select %224, %226, %222 : vector<16x256xi1>, vector<16x256xf32>
    %cst_96 = arith.constant 1.000000e+00 : f32
    %228 = vector.broadcast %cst_96 : f32 to vector<16x256xf32>
    %229 = arith.addf %228, %227 : vector<16x256xf32>
    %230 = arith.mulf %192, %229 : vector<16x256xf32>
    %cst_97 = arith.constant dense<0.000000e+00> : vector<16x64xf32>
    %231 = tpu.matmul %230, %26, %cst_97 {dimension_numbers = #tpu.dot_dimension_numbers<[1], [0], [0], [1], [0, 0, 1, 1], [], []>} : vector<16x256xf32>, vector<256x64xf32>, vector<16x64xf32> -> vector<16x64xf32>
    %232 = vector.broadcast %28 : vector<1x64xf32> to vector<16x64xf32>
    %233 = arith.addf %231, %232 : vector<16x64xf32>
    %234 = arith.addf %187, %233 : vector<16x64xf32>
    %cst_98 = arith.constant dense<0.000000e+00> : vector<16xf32>
    %235 = vector.multi_reduction <add>, %234, %cst_98 [1] : vector<16x64xf32> to vector<16xf32>
    %236 = vector.shape_cast %235 : vector<16xf32> to vector<16x1xf32>
    %cst_99 = arith.constant 6.400000e+01 : f32
    %237 = vector.broadcast %cst_99 : f32 to vector<16x1xf32>
    %238 = arith.divf %236, %237 : vector<16x1xf32>
    %239 = vector.broadcast %238 : vector<16x1xf32> to vector<16x64xf32>
    %240 = arith.subf %234, %239 : vector<16x64xf32>
    %241 = arith.mulf %240, %240 : vector<16x64xf32>
    %cst_100 = arith.constant dense<0.000000e+00> : vector<16xf32>
    %242 = vector.multi_reduction <add>, %241, %cst_100 [1] : vector<16x64xf32> to vector<16xf32>
    %243 = vector.shape_cast %242 : vector<16xf32> to vector<16x1xf32>
    %cst_101 = arith.constant 6.400000e+01 : f32
    %244 = vector.broadcast %cst_101 : f32 to vector<16x1xf32>
    %245 = arith.divf %243, %244 : vector<16x1xf32>
    %cst_102 = arith.constant 9.99999974E-6 : f32
    %246 = vector.broadcast %cst_102 : f32 to vector<16x1xf32>
    %247 = arith.addf %245, %246 : vector<16x1xf32>
    %248 = math.rsqrt %247 : vector<16x1xf32>
    %249 = vector.broadcast %248 : vector<16x1xf32> to vector<16x64xf32>
    %250 = arith.mulf %240, %249 : vector<16x64xf32>
    %251 = vector.broadcast %30 : vector<1x64xf32> to vector<16x64xf32>
    %252 = arith.mulf %250, %251 : vector<16x64xf32>
    %253 = vector.broadcast %32 : vector<1x64xf32> to vector<16x64xf32>
    %254 = arith.addf %252, %253 : vector<16x64xf32>
    %c1 = arith.constant 1 : index
    %c0_103 = arith.constant 0 : index
    %c0_104 = arith.constant 0 : index
    %255 = vector.load %arg2[%c1, %c0_103, %c0_104] : memref<2x64x192xf32, #tpu.memory_space<vmem>>, vector<1x64x192xf32>
    %256 = vector.shape_cast %255 : vector<1x64x192xf32> to vector<64x192xf32>
    %c1_105 = arith.constant 1 : index
    %c0_106 = arith.constant 0 : index
    %c0_107 = arith.constant 0 : index
    %257 = vector.load %arg3[%c1_105, %c0_106, %c0_107] : memref<2x1x192xf32, #tpu.memory_space<vmem>>, vector<1x1x192xf32>
    %258 = vector.shape_cast %257 : vector<1x1x192xf32> to vector<1x192xf32>
    %c1_108 = arith.constant 1 : index
    %c0_109 = arith.constant 0 : index
    %c0_110 = arith.constant 0 : index
    %259 = vector.load %arg4[%c1_108, %c0_109, %c0_110] : memref<2x64x64xf32, #tpu.memory_space<vmem>>, vector<1x64x64xf32>
    %260 = vector.shape_cast %259 : vector<1x64x64xf32> to vector<64x64xf32>
    %c1_111 = arith.constant 1 : index
    %c0_112 = arith.constant 0 : index
    %c0_113 = arith.constant 0 : index
    %261 = vector.load %arg5[%c1_111, %c0_112, %c0_113] : memref<2x1x64xf32, #tpu.memory_space<vmem>>, vector<1x1x64xf32>
    %262 = vector.shape_cast %261 : vector<1x1x64xf32> to vector<1x64xf32>
    %c1_114 = arith.constant 1 : index
    %c0_115 = arith.constant 0 : index
    %c0_116 = arith.constant 0 : index
    %263 = vector.load %arg6[%c1_114, %c0_115, %c0_116] : memref<2x1x64xf32, #tpu.memory_space<vmem>>, vector<1x1x64xf32>
    %264 = vector.shape_cast %263 : vector<1x1x64xf32> to vector<1x64xf32>
    %c1_117 = arith.constant 1 : index
    %c0_118 = arith.constant 0 : index
    %c0_119 = arith.constant 0 : index
    %265 = vector.load %arg7[%c1_117, %c0_118, %c0_119] : memref<2x1x64xf32, #tpu.memory_space<vmem>>, vector<1x1x64xf32>
    %266 = vector.shape_cast %265 : vector<1x1x64xf32> to vector<1x64xf32>
    %c1_120 = arith.constant 1 : index
    %c0_121 = arith.constant 0 : index
    %c0_122 = arith.constant 0 : index
    %267 = vector.load %arg8[%c1_120, %c0_121, %c0_122] : memref<2x64x256xf32, #tpu.memory_space<vmem>>, vector<1x64x256xf32>
    %268 = vector.shape_cast %267 : vector<1x64x256xf32> to vector<64x256xf32>
    %c1_123 = arith.constant 1 : index
    %c0_124 = arith.constant 0 : index
    %c0_125 = arith.constant 0 : index
    %269 = vector.load %arg9[%c1_123, %c0_124, %c0_125] : memref<2x1x256xf32, #tpu.memory_space<vmem>>, vector<1x1x256xf32>
    %270 = vector.shape_cast %269 : vector<1x1x256xf32> to vector<1x256xf32>
    %c1_126 = arith.constant 1 : index
    %c0_127 = arith.constant 0 : index
    %c0_128 = arith.constant 0 : index
    %271 = vector.load %arg10[%c1_126, %c0_127, %c0_128] : memref<2x256x64xf32, #tpu.memory_space<vmem>>, vector<1x256x64xf32>
    %272 = vector.shape_cast %271 : vector<1x256x64xf32> to vector<256x64xf32>
    %c1_129 = arith.constant 1 : index
    %c0_130 = arith.constant 0 : index
    %c0_131 = arith.constant 0 : index
    %273 = vector.load %arg11[%c1_129, %c0_130, %c0_131] : memref<2x1x64xf32, #tpu.memory_space<vmem>>, vector<1x1x64xf32>
    %274 = vector.shape_cast %273 : vector<1x1x64xf32> to vector<1x64xf32>
    %c1_132 = arith.constant 1 : index
    %c0_133 = arith.constant 0 : index
    %c0_134 = arith.constant 0 : index
    %275 = vector.load %arg12[%c1_132, %c0_133, %c0_134] : memref<2x1x64xf32, #tpu.memory_space<vmem>>, vector<1x1x64xf32>
    %276 = vector.shape_cast %275 : vector<1x1x64xf32> to vector<1x64xf32>
    %c1_135 = arith.constant 1 : index
    %c0_136 = arith.constant 0 : index
    %c0_137 = arith.constant 0 : index
    %277 = vector.load %arg13[%c1_135, %c0_136, %c0_137] : memref<2x1x64xf32, #tpu.memory_space<vmem>>, vector<1x1x64xf32>
    %278 = vector.shape_cast %277 : vector<1x1x64xf32> to vector<1x64xf32>
    %cst_138 = arith.constant dense<0.000000e+00> : vector<16x192xf32>
    %279 = tpu.matmul %254, %256, %cst_138 {dimension_numbers = #tpu.dot_dimension_numbers<[1], [0], [0], [1], [0, 0, 1, 1], [], []>} : vector<16x64xf32>, vector<64x192xf32>, vector<16x192xf32> -> vector<16x192xf32>
    %280 = vector.broadcast %258 : vector<1x192xf32> to vector<16x192xf32>
    %281 = arith.addf %279, %280 : vector<16x192xf32>
    %282 = vector.extract_strided_slice %281 {offsets = [0, 0], sizes = [16, 64], strides = [1, 1]} : vector<16x192xf32> to vector<16x64xf32>
    %cst_139 = arith.constant 2.500000e-01 : f32
    %283 = vector.broadcast %cst_139 : f32 to vector<16x64xf32>
    %284 = arith.mulf %282, %283 : vector<16x64xf32>
    %285 = vector.extract_strided_slice %281 {offsets = [0, 64], sizes = [16, 64], strides = [1, 1]} : vector<16x192xf32> to vector<16x64xf32>
    %286 = vector.extract_strided_slice %281 {offsets = [0, 128], sizes = [16, 64], strides = [1, 1]} : vector<16x192xf32> to vector<16x64xf32>
    %287 = vector.extract_strided_slice %284 {offsets = [0, 0], sizes = [8, 16], strides = [1, 1]} : vector<16x64xf32> to vector<8x16xf32>
    %288 = vector.extract_strided_slice %285 {offsets = [0, 0], sizes = [8, 16], strides = [1, 1]} : vector<16x64xf32> to vector<8x16xf32>
    %289 = vector.extract_strided_slice %286 {offsets = [0, 0], sizes = [8, 16], strides = [1, 1]} : vector<16x64xf32> to vector<8x16xf32>
    %cst_140 = arith.constant dense<0.000000e+00> : vector<8x8xf32>
    %290 = tpu.matmul %287, %288, %cst_140 {dimension_numbers = #tpu.dot_dimension_numbers<[1], [1], [0], [0], [0, 0, 1, 0], [], []>} : vector<8x16xf32>, vector<8x16xf32>, vector<8x8xf32> -> vector<8x8xf32>
    %cst_141 = arith.constant dense<0xFF800000> : vector<8xf32>
    %291 = vector.multi_reduction <maximumf>, %290, %cst_141 [1] : vector<8x8xf32> to vector<8xf32>
    %292 = vector.shape_cast %291 : vector<8xf32> to vector<8x1xf32>
    %293 = vector.broadcast %292 : vector<8x1xf32> to vector<8x8xf32>
    %294 = arith.subf %290, %293 : vector<8x8xf32>
    %295 = math.exp %294 : vector<8x8xf32>
    %cst_142 = arith.constant dense<0.000000e+00> : vector<8xf32>
    %296 = vector.multi_reduction <add>, %295, %cst_142 [1] : vector<8x8xf32> to vector<8xf32>
    %297 = vector.shape_cast %296 : vector<8xf32> to vector<8x1xf32>
    %298 = tpu.reciprocal %297 {approx = true} : vector<8x1xf32> -> vector<8x1xf32>
    %299 = vector.broadcast %298 : vector<8x1xf32> to vector<8x8xf32>
    %300 = arith.mulf %295, %299 : vector<8x8xf32>
    %cst_143 = arith.constant dense<0.000000e+00> : vector<8x16xf32>
    %301 = tpu.matmul %300, %289, %cst_143 {dimension_numbers = #tpu.dot_dimension_numbers<[1], [0], [0], [1], [0, 0, 1, 1], [], []>} : vector<8x8xf32>, vector<8x16xf32>, vector<8x16xf32> -> vector<8x16xf32>
    %302 = vector.extract_strided_slice %284 {offsets = [0, 16], sizes = [8, 16], strides = [1, 1]} : vector<16x64xf32> to vector<8x16xf32>
    %303 = vector.extract_strided_slice %285 {offsets = [0, 16], sizes = [8, 16], strides = [1, 1]} : vector<16x64xf32> to vector<8x16xf32>
    %304 = vector.extract_strided_slice %286 {offsets = [0, 16], sizes = [8, 16], strides = [1, 1]} : vector<16x64xf32> to vector<8x16xf32>
    %cst_144 = arith.constant dense<0.000000e+00> : vector<8x8xf32>
    %305 = tpu.matmul %302, %303, %cst_144 {dimension_numbers = #tpu.dot_dimension_numbers<[1], [1], [0], [0], [0, 0, 1, 0], [], []>} : vector<8x16xf32>, vector<8x16xf32>, vector<8x8xf32> -> vector<8x8xf32>
    %cst_145 = arith.constant dense<0xFF800000> : vector<8xf32>
    %306 = vector.multi_reduction <maximumf>, %305, %cst_145 [1] : vector<8x8xf32> to vector<8xf32>
    %307 = vector.shape_cast %306 : vector<8xf32> to vector<8x1xf32>
    %308 = vector.broadcast %307 : vector<8x1xf32> to vector<8x8xf32>
    %309 = arith.subf %305, %308 : vector<8x8xf32>
    %310 = math.exp %309 : vector<8x8xf32>
    %cst_146 = arith.constant dense<0.000000e+00> : vector<8xf32>
    %311 = vector.multi_reduction <add>, %310, %cst_146 [1] : vector<8x8xf32> to vector<8xf32>
    %312 = vector.shape_cast %311 : vector<8xf32> to vector<8x1xf32>
    %313 = tpu.reciprocal %312 {approx = true} : vector<8x1xf32> -> vector<8x1xf32>
    %314 = vector.broadcast %313 : vector<8x1xf32> to vector<8x8xf32>
    %315 = arith.mulf %310, %314 : vector<8x8xf32>
    %cst_147 = arith.constant dense<0.000000e+00> : vector<8x16xf32>
    %316 = tpu.matmul %315, %304, %cst_147 {dimension_numbers = #tpu.dot_dimension_numbers<[1], [0], [0], [1], [0, 0, 1, 1], [], []>} : vector<8x8xf32>, vector<8x16xf32>, vector<8x16xf32> -> vector<8x16xf32>
    %317 = vector.extract_strided_slice %284 {offsets = [0, 32], sizes = [8, 16], strides = [1, 1]} : vector<16x64xf32> to vector<8x16xf32>
    %318 = vector.extract_strided_slice %285 {offsets = [0, 32], sizes = [8, 16], strides = [1, 1]} : vector<16x64xf32> to vector<8x16xf32>
    %319 = vector.extract_strided_slice %286 {offsets = [0, 32], sizes = [8, 16], strides = [1, 1]} : vector<16x64xf32> to vector<8x16xf32>
    %cst_148 = arith.constant dense<0.000000e+00> : vector<8x8xf32>
    %320 = tpu.matmul %317, %318, %cst_148 {dimension_numbers = #tpu.dot_dimension_numbers<[1], [1], [0], [0], [0, 0, 1, 0], [], []>} : vector<8x16xf32>, vector<8x16xf32>, vector<8x8xf32> -> vector<8x8xf32>
    %cst_149 = arith.constant dense<0xFF800000> : vector<8xf32>
    %321 = vector.multi_reduction <maximumf>, %320, %cst_149 [1] : vector<8x8xf32> to vector<8xf32>
    %322 = vector.shape_cast %321 : vector<8xf32> to vector<8x1xf32>
    %323 = vector.broadcast %322 : vector<8x1xf32> to vector<8x8xf32>
    %324 = arith.subf %320, %323 : vector<8x8xf32>
    %325 = math.exp %324 : vector<8x8xf32>
    %cst_150 = arith.constant dense<0.000000e+00> : vector<8xf32>
    %326 = vector.multi_reduction <add>, %325, %cst_150 [1] : vector<8x8xf32> to vector<8xf32>
    %327 = vector.shape_cast %326 : vector<8xf32> to vector<8x1xf32>
    %328 = tpu.reciprocal %327 {approx = true} : vector<8x1xf32> -> vector<8x1xf32>
    %329 = vector.broadcast %328 : vector<8x1xf32> to vector<8x8xf32>
    %330 = arith.mulf %325, %329 : vector<8x8xf32>
    %cst_151 = arith.constant dense<0.000000e+00> : vector<8x16xf32>
    %331 = tpu.matmul %330, %319, %cst_151 {dimension_numbers = #tpu.dot_dimension_numbers<[1], [0], [0], [1], [0, 0, 1, 1], [], []>} : vector<8x8xf32>, vector<8x16xf32>, vector<8x16xf32> -> vector<8x16xf32>
    %332 = vector.extract_strided_slice %284 {offsets = [0, 48], sizes = [8, 16], strides = [1, 1]} : vector<16x64xf32> to vector<8x16xf32>
    %333 = vector.extract_strided_slice %285 {offsets = [0, 48], sizes = [8, 16], strides = [1, 1]} : vector<16x64xf32> to vector<8x16xf32>
    %334 = vector.extract_strided_slice %286 {offsets = [0, 48], sizes = [8, 16], strides = [1, 1]} : vector<16x64xf32> to vector<8x16xf32>
    %cst_152 = arith.constant dense<0.000000e+00> : vector<8x8xf32>
    %335 = tpu.matmul %332, %333, %cst_152 {dimension_numbers = #tpu.dot_dimension_numbers<[1], [1], [0], [0], [0, 0, 1, 0], [], []>} : vector<8x16xf32>, vector<8x16xf32>, vector<8x8xf32> -> vector<8x8xf32>
    %cst_153 = arith.constant dense<0xFF800000> : vector<8xf32>
    %336 = vector.multi_reduction <maximumf>, %335, %cst_153 [1] : vector<8x8xf32> to vector<8xf32>
    %337 = vector.shape_cast %336 : vector<8xf32> to vector<8x1xf32>
    %338 = vector.broadcast %337 : vector<8x1xf32> to vector<8x8xf32>
    %339 = arith.subf %335, %338 : vector<8x8xf32>
    %340 = math.exp %339 : vector<8x8xf32>
    %cst_154 = arith.constant dense<0.000000e+00> : vector<8xf32>
    %341 = vector.multi_reduction <add>, %340, %cst_154 [1] : vector<8x8xf32> to vector<8xf32>
    %342 = vector.shape_cast %341 : vector<8xf32> to vector<8x1xf32>
    %343 = tpu.reciprocal %342 {approx = true} : vector<8x1xf32> -> vector<8x1xf32>
    %344 = vector.broadcast %343 : vector<8x1xf32> to vector<8x8xf32>
    %345 = arith.mulf %340, %344 : vector<8x8xf32>
    %cst_155 = arith.constant dense<0.000000e+00> : vector<8x16xf32>
    %346 = tpu.matmul %345, %334, %cst_155 {dimension_numbers = #tpu.dot_dimension_numbers<[1], [0], [0], [1], [0, 0, 1, 1], [], []>} : vector<8x8xf32>, vector<8x16xf32>, vector<8x16xf32> -> vector<8x16xf32>
    %347 = tpu.concatenate %301, %316, %331, %346 in 1 : vector<8x16xf32>, vector<8x16xf32>, vector<8x16xf32>, vector<8x16xf32> -> vector<8x64xf32>
    %348 = vector.extract_strided_slice %284 {offsets = [8, 0], sizes = [8, 16], strides = [1, 1]} : vector<16x64xf32> to vector<8x16xf32>
    %349 = vector.extract_strided_slice %285 {offsets = [8, 0], sizes = [8, 16], strides = [1, 1]} : vector<16x64xf32> to vector<8x16xf32>
    %350 = vector.extract_strided_slice %286 {offsets = [8, 0], sizes = [8, 16], strides = [1, 1]} : vector<16x64xf32> to vector<8x16xf32>
    %cst_156 = arith.constant dense<0.000000e+00> : vector<8x8xf32>
    %351 = tpu.matmul %348, %349, %cst_156 {dimension_numbers = #tpu.dot_dimension_numbers<[1], [1], [0], [0], [0, 0, 1, 0], [], []>} : vector<8x16xf32>, vector<8x16xf32>, vector<8x8xf32> -> vector<8x8xf32>
    %cst_157 = arith.constant dense<0xFF800000> : vector<8xf32>
    %352 = vector.multi_reduction <maximumf>, %351, %cst_157 [1] : vector<8x8xf32> to vector<8xf32>
    %353 = vector.shape_cast %352 : vector<8xf32> to vector<8x1xf32>
    %354 = vector.broadcast %353 : vector<8x1xf32> to vector<8x8xf32>
    %355 = arith.subf %351, %354 : vector<8x8xf32>
    %356 = math.exp %355 : vector<8x8xf32>
    %cst_158 = arith.constant dense<0.000000e+00> : vector<8xf32>
    %357 = vector.multi_reduction <add>, %356, %cst_158 [1] : vector<8x8xf32> to vector<8xf32>
    %358 = vector.shape_cast %357 : vector<8xf32> to vector<8x1xf32>
    %359 = tpu.reciprocal %358 {approx = true} : vector<8x1xf32> -> vector<8x1xf32>
    %360 = vector.broadcast %359 : vector<8x1xf32> to vector<8x8xf32>
    %361 = arith.mulf %356, %360 : vector<8x8xf32>
    %cst_159 = arith.constant dense<0.000000e+00> : vector<8x16xf32>
    %362 = tpu.matmul %361, %350, %cst_159 {dimension_numbers = #tpu.dot_dimension_numbers<[1], [0], [0], [1], [0, 0, 1, 1], [], []>} : vector<8x8xf32>, vector<8x16xf32>, vector<8x16xf32> -> vector<8x16xf32>
    %363 = vector.extract_strided_slice %284 {offsets = [8, 16], sizes = [8, 16], strides = [1, 1]} : vector<16x64xf32> to vector<8x16xf32>
    %364 = vector.extract_strided_slice %285 {offsets = [8, 16], sizes = [8, 16], strides = [1, 1]} : vector<16x64xf32> to vector<8x16xf32>
    %365 = vector.extract_strided_slice %286 {offsets = [8, 16], sizes = [8, 16], strides = [1, 1]} : vector<16x64xf32> to vector<8x16xf32>
    %cst_160 = arith.constant dense<0.000000e+00> : vector<8x8xf32>
    %366 = tpu.matmul %363, %364, %cst_160 {dimension_numbers = #tpu.dot_dimension_numbers<[1], [1], [0], [0], [0, 0, 1, 0], [], []>} : vector<8x16xf32>, vector<8x16xf32>, vector<8x8xf32> -> vector<8x8xf32>
    %cst_161 = arith.constant dense<0xFF800000> : vector<8xf32>
    %367 = vector.multi_reduction <maximumf>, %366, %cst_161 [1] : vector<8x8xf32> to vector<8xf32>
    %368 = vector.shape_cast %367 : vector<8xf32> to vector<8x1xf32>
    %369 = vector.broadcast %368 : vector<8x1xf32> to vector<8x8xf32>
    %370 = arith.subf %366, %369 : vector<8x8xf32>
    %371 = math.exp %370 : vector<8x8xf32>
    %cst_162 = arith.constant dense<0.000000e+00> : vector<8xf32>
    %372 = vector.multi_reduction <add>, %371, %cst_162 [1] : vector<8x8xf32> to vector<8xf32>
    %373 = vector.shape_cast %372 : vector<8xf32> to vector<8x1xf32>
    %374 = tpu.reciprocal %373 {approx = true} : vector<8x1xf32> -> vector<8x1xf32>
    %375 = vector.broadcast %374 : vector<8x1xf32> to vector<8x8xf32>
    %376 = arith.mulf %371, %375 : vector<8x8xf32>
    %cst_163 = arith.constant dense<0.000000e+00> : vector<8x16xf32>
    %377 = tpu.matmul %376, %365, %cst_163 {dimension_numbers = #tpu.dot_dimension_numbers<[1], [0], [0], [1], [0, 0, 1, 1], [], []>} : vector<8x8xf32>, vector<8x16xf32>, vector<8x16xf32> -> vector<8x16xf32>
    %378 = vector.extract_strided_slice %284 {offsets = [8, 32], sizes = [8, 16], strides = [1, 1]} : vector<16x64xf32> to vector<8x16xf32>
    %379 = vector.extract_strided_slice %285 {offsets = [8, 32], sizes = [8, 16], strides = [1, 1]} : vector<16x64xf32> to vector<8x16xf32>
    %380 = vector.extract_strided_slice %286 {offsets = [8, 32], sizes = [8, 16], strides = [1, 1]} : vector<16x64xf32> to vector<8x16xf32>
    %cst_164 = arith.constant dense<0.000000e+00> : vector<8x8xf32>
    %381 = tpu.matmul %378, %379, %cst_164 {dimension_numbers = #tpu.dot_dimension_numbers<[1], [1], [0], [0], [0, 0, 1, 0], [], []>} : vector<8x16xf32>, vector<8x16xf32>, vector<8x8xf32> -> vector<8x8xf32>
    %cst_165 = arith.constant dense<0xFF800000> : vector<8xf32>
    %382 = vector.multi_reduction <maximumf>, %381, %cst_165 [1] : vector<8x8xf32> to vector<8xf32>
    %383 = vector.shape_cast %382 : vector<8xf32> to vector<8x1xf32>
    %384 = vector.broadcast %383 : vector<8x1xf32> to vector<8x8xf32>
    %385 = arith.subf %381, %384 : vector<8x8xf32>
    %386 = math.exp %385 : vector<8x8xf32>
    %cst_166 = arith.constant dense<0.000000e+00> : vector<8xf32>
    %387 = vector.multi_reduction <add>, %386, %cst_166 [1] : vector<8x8xf32> to vector<8xf32>
    %388 = vector.shape_cast %387 : vector<8xf32> to vector<8x1xf32>
    %389 = tpu.reciprocal %388 {approx = true} : vector<8x1xf32> -> vector<8x1xf32>
    %390 = vector.broadcast %389 : vector<8x1xf32> to vector<8x8xf32>
    %391 = arith.mulf %386, %390 : vector<8x8xf32>
    %cst_167 = arith.constant dense<0.000000e+00> : vector<8x16xf32>
    %392 = tpu.matmul %391, %380, %cst_167 {dimension_numbers = #tpu.dot_dimension_numbers<[1], [0], [0], [1], [0, 0, 1, 1], [], []>} : vector<8x8xf32>, vector<8x16xf32>, vector<8x16xf32> -> vector<8x16xf32>
    %393 = vector.extract_strided_slice %284 {offsets = [8, 48], sizes = [8, 16], strides = [1, 1]} : vector<16x64xf32> to vector<8x16xf32>
    %394 = vector.extract_strided_slice %285 {offsets = [8, 48], sizes = [8, 16], strides = [1, 1]} : vector<16x64xf32> to vector<8x16xf32>
    %395 = vector.extract_strided_slice %286 {offsets = [8, 48], sizes = [8, 16], strides = [1, 1]} : vector<16x64xf32> to vector<8x16xf32>
    %cst_168 = arith.constant dense<0.000000e+00> : vector<8x8xf32>
    %396 = tpu.matmul %393, %394, %cst_168 {dimension_numbers = #tpu.dot_dimension_numbers<[1], [1], [0], [0], [0, 0, 1, 0], [], []>} : vector<8x16xf32>, vector<8x16xf32>, vector<8x8xf32> -> vector<8x8xf32>
    %cst_169 = arith.constant dense<0xFF800000> : vector<8xf32>
    %397 = vector.multi_reduction <maximumf>, %396, %cst_169 [1] : vector<8x8xf32> to vector<8xf32>
    %398 = vector.shape_cast %397 : vector<8xf32> to vector<8x1xf32>
    %399 = vector.broadcast %398 : vector<8x1xf32> to vector<8x8xf32>
    %400 = arith.subf %396, %399 : vector<8x8xf32>
    %401 = math.exp %400 : vector<8x8xf32>
    %cst_170 = arith.constant dense<0.000000e+00> : vector<8xf32>
    %402 = vector.multi_reduction <add>, %401, %cst_170 [1] : vector<8x8xf32> to vector<8xf32>
    %403 = vector.shape_cast %402 : vector<8xf32> to vector<8x1xf32>
    %404 = tpu.reciprocal %403 {approx = true} : vector<8x1xf32> -> vector<8x1xf32>
    %405 = vector.broadcast %404 : vector<8x1xf32> to vector<8x8xf32>
    %406 = arith.mulf %401, %405 : vector<8x8xf32>
    %cst_171 = arith.constant dense<0.000000e+00> : vector<8x16xf32>
    %407 = tpu.matmul %406, %395, %cst_171 {dimension_numbers = #tpu.dot_dimension_numbers<[1], [0], [0], [1], [0, 0, 1, 1], [], []>} : vector<8x8xf32>, vector<8x16xf32>, vector<8x16xf32> -> vector<8x16xf32>
    %408 = tpu.concatenate %362, %377, %392, %407 in 1 : vector<8x16xf32>, vector<8x16xf32>, vector<8x16xf32>, vector<8x16xf32> -> vector<8x64xf32>
    %409 = tpu.concatenate %347, %408 in 0 : vector<8x64xf32>, vector<8x64xf32> -> vector<16x64xf32>
    %cst_172 = arith.constant dense<0.000000e+00> : vector<16x64xf32>
    %410 = tpu.matmul %409, %260, %cst_172 {dimension_numbers = #tpu.dot_dimension_numbers<[1], [0], [0], [1], [0, 0, 1, 1], [], []>} : vector<16x64xf32>, vector<64x64xf32>, vector<16x64xf32> -> vector<16x64xf32>
    %411 = vector.broadcast %262 : vector<1x64xf32> to vector<16x64xf32>
    %412 = arith.addf %410, %411 : vector<16x64xf32>
    %413 = arith.addf %254, %412 : vector<16x64xf32>
    %cst_173 = arith.constant dense<0.000000e+00> : vector<16xf32>
    %414 = vector.multi_reduction <add>, %413, %cst_173 [1] : vector<16x64xf32> to vector<16xf32>
    %415 = vector.shape_cast %414 : vector<16xf32> to vector<16x1xf32>
    %cst_174 = arith.constant 6.400000e+01 : f32
    %416 = vector.broadcast %cst_174 : f32 to vector<16x1xf32>
    %417 = arith.divf %415, %416 : vector<16x1xf32>
    %418 = vector.broadcast %417 : vector<16x1xf32> to vector<16x64xf32>
    %419 = arith.subf %413, %418 : vector<16x64xf32>
    %420 = arith.mulf %419, %419 : vector<16x64xf32>
    %cst_175 = arith.constant dense<0.000000e+00> : vector<16xf32>
    %421 = vector.multi_reduction <add>, %420, %cst_175 [1] : vector<16x64xf32> to vector<16xf32>
    %422 = vector.shape_cast %421 : vector<16xf32> to vector<16x1xf32>
    %cst_176 = arith.constant 6.400000e+01 : f32
    %423 = vector.broadcast %cst_176 : f32 to vector<16x1xf32>
    %424 = arith.divf %422, %423 : vector<16x1xf32>
    %cst_177 = arith.constant 9.99999974E-6 : f32
    %425 = vector.broadcast %cst_177 : f32 to vector<16x1xf32>
    %426 = arith.addf %424, %425 : vector<16x1xf32>
    %427 = math.rsqrt %426 : vector<16x1xf32>
    %428 = vector.broadcast %427 : vector<16x1xf32> to vector<16x64xf32>
    %429 = arith.mulf %419, %428 : vector<16x64xf32>
    %430 = vector.broadcast %264 : vector<1x64xf32> to vector<16x64xf32>
    %431 = arith.mulf %429, %430 : vector<16x64xf32>
    %432 = vector.broadcast %266 : vector<1x64xf32> to vector<16x64xf32>
    %433 = arith.addf %431, %432 : vector<16x64xf32>
    %cst_178 = arith.constant dense<0.000000e+00> : vector<16x256xf32>
    %434 = tpu.matmul %433, %268, %cst_178 {dimension_numbers = #tpu.dot_dimension_numbers<[1], [0], [0], [1], [0, 0, 1, 1], [], []>} : vector<16x64xf32>, vector<64x256xf32>, vector<16x256xf32> -> vector<16x256xf32>
    %435 = vector.broadcast %270 : vector<1x256xf32> to vector<16x256xf32>
    %436 = arith.addf %434, %435 : vector<16x256xf32>
    %cst_179 = arith.constant 5.000000e-01 : f32
    %437 = vector.broadcast %cst_179 : f32 to vector<16x256xf32>
    %438 = arith.mulf %437, %436 : vector<16x256xf32>
    %cst_180 = arith.constant 0.707106769 : f32
    %439 = vector.broadcast %cst_180 : f32 to vector<16x256xf32>
    %440 = arith.mulf %436, %439 : vector<16x256xf32>
    %441 = math.absf %440 : vector<16x256xf32>
    %cst_181 = arith.constant 0.327591091 : f32
    %442 = vector.broadcast %cst_181 : f32 to vector<16x256xf32>
    %443 = arith.mulf %442, %441 : vector<16x256xf32>
    %cst_182 = arith.constant 1.000000e+00 : f32
    %444 = vector.broadcast %cst_182 : f32 to vector<16x256xf32>
    %445 = arith.addf %444, %443 : vector<16x256xf32>
    %cst_183 = arith.constant 1.000000e+00 : f32
    %446 = vector.broadcast %cst_183 : f32 to vector<16x256xf32>
    %447 = arith.divf %446, %445 : vector<16x256xf32>
    %cst_184 = arith.constant 1.06140542 : f32
    %448 = vector.broadcast %cst_184 : f32 to vector<16x256xf32>
    %449 = arith.mulf %448, %447 : vector<16x256xf32>
    %cst_185 = arith.constant -1.45315206 : f32
    %450 = vector.broadcast %cst_185 : f32 to vector<16x256xf32>
    %451 = arith.addf %449, %450 : vector<16x256xf32>
    %452 = arith.mulf %451, %447 : vector<16x256xf32>
    %cst_186 = arith.constant 1.42141378 : f32
    %453 = vector.broadcast %cst_186 : f32 to vector<16x256xf32>
    %454 = arith.addf %452, %453 : vector<16x256xf32>
    %455 = arith.mulf %454, %447 : vector<16x256xf32>
    %cst_187 = arith.constant -0.284496725 : f32
    %456 = vector.broadcast %cst_187 : f32 to vector<16x256xf32>
    %457 = arith.addf %455, %456 : vector<16x256xf32>
    %458 = arith.mulf %457, %447 : vector<16x256xf32>
    %cst_188 = arith.constant 0.254829586 : f32
    %459 = vector.broadcast %cst_188 : f32 to vector<16x256xf32>
    %460 = arith.addf %458, %459 : vector<16x256xf32>
    %461 = arith.mulf %460, %447 : vector<16x256xf32>
    %cst_189 = arith.constant 0.000000e+00 : f32
    %462 = vector.broadcast %cst_189 : f32 to vector<16x256xf32>
    %463 = arith.subf %462, %441 : vector<16x256xf32>
    %464 = arith.mulf %463, %441 : vector<16x256xf32>
    %465 = math.exp %464 : vector<16x256xf32>
    %466 = arith.mulf %461, %465 : vector<16x256xf32>
    %cst_190 = arith.constant 1.000000e+00 : f32
    %467 = vector.broadcast %cst_190 : f32 to vector<16x256xf32>
    %468 = arith.subf %467, %466 : vector<16x256xf32>
    %cst_191 = arith.constant 0.000000e+00 : f32
    %469 = vector.broadcast %cst_191 : f32 to vector<16x256xf32>
    %470 = arith.cmpf olt, %440, %469 : vector<16x256xf32>
    %cst_192 = arith.constant 0.000000e+00 : f32
    %471 = vector.broadcast %cst_192 : f32 to vector<16x256xf32>
    %472 = arith.subf %471, %468 : vector<16x256xf32>
    %473 = arith.select %470, %472, %468 : vector<16x256xi1>, vector<16x256xf32>
    %cst_193 = arith.constant 1.000000e+00 : f32
    %474 = vector.broadcast %cst_193 : f32 to vector<16x256xf32>
    %475 = arith.addf %474, %473 : vector<16x256xf32>
    %476 = arith.mulf %438, %475 : vector<16x256xf32>
    %cst_194 = arith.constant dense<0.000000e+00> : vector<16x64xf32>
    %477 = tpu.matmul %476, %272, %cst_194 {dimension_numbers = #tpu.dot_dimension_numbers<[1], [0], [0], [1], [0, 0, 1, 1], [], []>} : vector<16x256xf32>, vector<256x64xf32>, vector<16x64xf32> -> vector<16x64xf32>
    %478 = vector.broadcast %274 : vector<1x64xf32> to vector<16x64xf32>
    %479 = arith.addf %477, %478 : vector<16x64xf32>
    %480 = arith.addf %433, %479 : vector<16x64xf32>
    %cst_195 = arith.constant dense<0.000000e+00> : vector<16xf32>
    %481 = vector.multi_reduction <add>, %480, %cst_195 [1] : vector<16x64xf32> to vector<16xf32>
    %482 = vector.shape_cast %481 : vector<16xf32> to vector<16x1xf32>
    %cst_196 = arith.constant 6.400000e+01 : f32
    %483 = vector.broadcast %cst_196 : f32 to vector<16x1xf32>
    %484 = arith.divf %482, %483 : vector<16x1xf32>
    %485 = vector.broadcast %484 : vector<16x1xf32> to vector<16x64xf32>
    %486 = arith.subf %480, %485 : vector<16x64xf32>
    %487 = arith.mulf %486, %486 : vector<16x64xf32>
    %cst_197 = arith.constant dense<0.000000e+00> : vector<16xf32>
    %488 = vector.multi_reduction <add>, %487, %cst_197 [1] : vector<16x64xf32> to vector<16xf32>
    %489 = vector.shape_cast %488 : vector<16xf32> to vector<16x1xf32>
    %cst_198 = arith.constant 6.400000e+01 : f32
    %490 = vector.broadcast %cst_198 : f32 to vector<16x1xf32>
    %491 = arith.divf %489, %490 : vector<16x1xf32>
    %cst_199 = arith.constant 9.99999974E-6 : f32
    %492 = vector.broadcast %cst_199 : f32 to vector<16x1xf32>
    %493 = arith.addf %491, %492 : vector<16x1xf32>
    %494 = math.rsqrt %493 : vector<16x1xf32>
    %495 = vector.broadcast %494 : vector<16x1xf32> to vector<16x64xf32>
    %496 = arith.mulf %486, %495 : vector<16x64xf32>
    %497 = vector.broadcast %276 : vector<1x64xf32> to vector<16x64xf32>
    %498 = arith.mulf %496, %497 : vector<16x64xf32>
    %499 = vector.broadcast %278 : vector<1x64xf32> to vector<16x64xf32>
    %500 = arith.addf %498, %499 : vector<16x64xf32>
    %c0_200 = arith.constant 0 : index
    %c0_201 = arith.constant 0 : index
    %501 = vector.load %arg14[%c0_200, %c0_201] : memref<1x64xf32, #tpu.memory_space<vmem>>, vector<1x64xf32>
    %c0_202 = arith.constant 0 : index
    %c0_203 = arith.constant 0 : index
    %502 = vector.load %arg15[%c0_202, %c0_203] : memref<1x64xf32, #tpu.memory_space<vmem>>, vector<1x64xf32>
    %cst_204 = arith.constant dense<0.000000e+00> : vector<16xf32>
    %503 = vector.multi_reduction <add>, %500, %cst_204 [1] : vector<16x64xf32> to vector<16xf32>
    %504 = vector.shape_cast %503 : vector<16xf32> to vector<16x1xf32>
    %cst_205 = arith.constant 6.400000e+01 : f32
    %505 = vector.broadcast %cst_205 : f32 to vector<16x1xf32>
    %506 = arith.divf %504, %505 : vector<16x1xf32>
    %507 = vector.broadcast %506 : vector<16x1xf32> to vector<16x64xf32>
    %508 = arith.subf %500, %507 : vector<16x64xf32>
    %509 = arith.mulf %508, %508 : vector<16x64xf32>
    %cst_206 = arith.constant dense<0.000000e+00> : vector<16xf32>
    %510 = vector.multi_reduction <add>, %509, %cst_206 [1] : vector<16x64xf32> to vector<16xf32>
    %511 = vector.shape_cast %510 : vector<16xf32> to vector<16x1xf32>
    %cst_207 = arith.constant 6.400000e+01 : f32
    %512 = vector.broadcast %cst_207 : f32 to vector<16x1xf32>
    %513 = arith.divf %511, %512 : vector<16x1xf32>
    %cst_208 = arith.constant 9.99999974E-6 : f32
    %514 = vector.broadcast %cst_208 : f32 to vector<16x1xf32>
    %515 = arith.addf %513, %514 : vector<16x1xf32>
    %516 = math.rsqrt %515 : vector<16x1xf32>
    %517 = vector.broadcast %516 : vector<16x1xf32> to vector<16x64xf32>
    %518 = arith.mulf %508, %517 : vector<16x64xf32>
    %519 = vector.broadcast %501 : vector<1x64xf32> to vector<16x64xf32>
    %520 = arith.mulf %518, %519 : vector<16x64xf32>
    %521 = vector.broadcast %502 : vector<1x64xf32> to vector<16x64xf32>
    %522 = arith.addf %520, %521 : vector<16x64xf32>
    %c0_209 = arith.constant 0 : index
    %c0_210 = arith.constant 0 : index
    %523 = vector.load %arg16[%c0_209, %c0_210] : memref<64x128xf32, #tpu.memory_space<vmem>>, vector<64x128xf32>
    %cst_211 = arith.constant dense<0.000000e+00> : vector<16x128xf32>
    %524 = tpu.matmul %522, %523, %cst_211 {dimension_numbers = #tpu.dot_dimension_numbers<[1], [0], [0], [1], [0, 0, 1, 1], [], []>} : vector<16x64xf32>, vector<64x128xf32>, vector<16x128xf32> -> vector<16x128xf32>
    %c0_212 = arith.constant 0 : index
    %c0_213 = arith.constant 0 : index
    %525 = vector.load %arg17[%c0_212, %c0_213] : memref<1x128xf32, #tpu.memory_space<vmem>>, vector<1x128xf32>
    %526 = vector.broadcast %525 : vector<1x128xf32> to vector<16x128xf32>
    %527 = arith.addf %524, %526 : vector<16x128xf32>
    %c0_214 = arith.constant 0 : index
    %c0_215 = arith.constant 0 : index
    %528 = vector.load %arg18[%c0_214, %c0_215] : memref<16x128xf32, #tpu.memory_space<vmem>>, vector<16x128xf32>
    tpu.vector_store %arg18[%c0_214, %c0_215], %527 {strides = array<i32>} : memref<16x128xf32, #tpu.memory_space<vmem>>, vector<16x128xf32>,
    return
  }
}

</mosaic_0001>

<llo_original>
// kernel: tiny_llm_forward.1
$region0: #{tiny_llm_forward.1}
  #allocation0 [shape = 'u32[]', space=smem, size = 0x4, offset = 0x4, fixed_abs, tag = 'smem constant byte address 0x4 - core index']
  #allocation1 [shape = 'u32[144,128]{1,0:T(1,128)}', space=vmem, size = 0x12000, scoped, tag = 'internal scratch']
  %s0 = inlined_call_operand.vmem [shape: s32[16,1], index: 0, kind: input, shape index: {}]
  %s1 = inlined_call_operand.vmem [shape: f32[128,64], index: 1, kind: input, shape index: {}]
  %s2 = inlined_call_operand.vmem [shape: f32[2,64,192], index: 2, kind: input, shape index: {}]
  %s3 = inlined_call_operand.vmem [shape: f32[2,1,192], index: 3, kind: input, shape index: {}]
  %s4 = inlined_call_operand.vmem [shape: f32[2,64,64], index: 4, kind: input, shape index: {}]
  %s5 = inlined_call_operand.vmem [shape: f32[2,1,64], index: 5, kind: input, shape index: {}]
  %s6 = inlined_call_operand.vmem [shape: f32[2,1,64], index: 6, kind: input, shape index: {}]
  %s7 = inlined_call_operand.vmem [shape: f32[2,1,64], index: 7, kind: input, shape index: {}]
  %s8 = inlined_call_operand.vmem [shape: f32[2,64,256], index: 8, kind: input, shape index: {}]
  %s9 = inlined_call_operand.vmem [shape: f32[2,1,256], index: 9, kind: input, shape index: {}]
  %s10 = inlined_call_operand.vmem [shape: f32[2,256,64], index: 10, kind: input, shape index: {}]
  %s11 = inlined_call_operand.vmem [shape: f32[2,1,64], index: 11, kind: input, shape index: {}]
  %s12 = inlined_call_operand.vmem [shape: f32[2,1,64], index: 12, kind: input, shape index: {}]
  %s13 = inlined_call_operand.vmem [shape: f32[2,1,64], index: 13, kind: input, shape index: {}]
  %s14 = inlined_call_operand.vmem [shape: f32[1,64], index: 14, kind: input, shape index: {}]
  %s15 = inlined_call_operand.vmem [shape: f32[1,64], index: 15, kind: input, shape index: {}]
  %s16 = inlined_call_operand.vmem [shape: f32[64,128], index: 16, kind: input, shape index: {}]
  %s17 = inlined_call_operand.vmem [shape: f32[1,128], index: 17, kind: input, shape index: {}]
  %s18 = inlined_call_operand.hbm [shape: f32[16,128], index: 18, kind: output, shape index: {}]
  %s19 = sld [smem:[#allocation0]]
  $region82: #{tiny_llm_forward.1} parent=0
    _
  %s21 = ssub.s32 1, %s19
  %s22 = scalar_select 0, %s21, %s19
  $region1: #{tiny_llm_forward.1} parent=0
    #allocation2 [shape = 'u8[8192]{0}', space=vmem, size = 0x2000, scoped, tag = 'output window, operand 0, single buffered']
    #allocation3 [shape = 's32[1]{0}', space=sflag, size = 0x4, scoped, tag = 'scoped memory for tiny_llm_forward.1']
    %23 = vsyncpa [#allocation3], 0
    // Predicated region
    $region2: #{tiny_llm_forward.1} parent=1 // pred_check
      _
    $region3: #{tiny_llm_forward.1} parent=1 // pred_check_branch
      %25 = sbr.rel (0) target = $region5
    $region4: #{tiny_llm_forward.1} parent=1 // pred_region
      _
    $region5: #{tiny_llm_forward.1} parent=1 // pred_fallthru
      _
    // Predicated region
    $region6: #{tiny_llm_forward.1} parent=1 // pred_check
      _
    $region7: #{tiny_llm_forward.1} parent=1 // pred_check_branch
      %27 = sbr.rel (0) target = $region9
    $region8: #{tiny_llm_forward.1} parent=1 // pred_region
      _
    $region9: #{tiny_llm_forward.1} parent=1 // pred_fallthru
      _
    // Predicated region
    $region10: #{tiny_llm_forward.1} parent=1 // pred_check
      _
    $region11: #{tiny_llm_forward.1} parent=1 // pred_check_branch
      %29 = sbr.rel (0) target = $region13
    $region12: #{tiny_llm_forward.1} parent=1 // pred_region
      _
    $region13: #{tiny_llm_forward.1} parent=1 // pred_fallthru
      _
    // Predicated region
    $region14: #{tiny_llm_forward.1} parent=1 // pred_check
      _
    $region15: #{tiny_llm_forward.1} parent=1 // pred_check_branch
      %31 = sbr.rel (0) target = $region17
    $region16: #{tiny_llm_forward.1} parent=1 // pred_region
      _
    $region17: #{tiny_llm_forward.1} parent=1 // pred_fallthru
      _
    // Predicated region
    $region18: #{tiny_llm_forward.1} parent=1 // pred_check
      _
    $region19: #{tiny_llm_forward.1} parent=1 // pred_check_branch
      %33 = sbr.rel (0) target = $region21
    $region20: #{tiny_llm_forward.1} parent=1 // pred_region
      _
    $region21: #{tiny_llm_forward.1} parent=1 // pred_fallthru
      _
    // Predicated region
    $region22: #{tiny_llm_forward.1} parent=1 // pred_check
      _
    $region23: #{tiny_llm_forward.1} parent=1 // pred_check_branch
      %35 = sbr.rel (0) target = $region25
    $region24: #{tiny_llm_forward.1} parent=1 // pred_region
      _
    $region25: #{tiny_llm_forward.1} parent=1 // pred_fallthru
      _
    // Predicated region
    $region26: #{tiny_llm_forward.1} parent=1 // pred_check
      _
    $region27: #{tiny_llm_forward.1} parent=1 // pred_check_branch
      %37 = sbr.rel (0) target = $region29
    $region28: #{tiny_llm_forward.1} parent=1 // pred_region
      _
    $region29: #{tiny_llm_forward.1} parent=1 // pred_fallthru
      _
    // Predicated region
    $region30: #{tiny_llm_forward.1} parent=1 // pred_check
      _
    $region31: #{tiny_llm_forward.1} parent=1 // pred_check_branch
      %39 = sbr.rel (0) target = $region33
    $region32: #{tiny_llm_forward.1} parent=1 // pred_region
      _
    $region33: #{tiny_llm_forward.1} parent=1 // pred_fallthru
      _
    // Predicated region
    $region34: #{tiny_llm_forward.1} parent=1 // pred_check
      _
    $region35: #{tiny_llm_forward.1} parent=1 // pred_check_branch
      %41 = sbr.rel (0) target = $region37
    $region36: #{tiny_llm_forward.1} parent=1 // pred_region
      _
    $region37: #{tiny_llm_forward.1} parent=1 // pred_fallthru
      _
    // Predicated region
    $region38: #{tiny_llm_forward.1} parent=1 // pred_check
      _
    $region39: #{tiny_llm_forward.1} parent=1 // pred_check_branch
      %43 = sbr.rel (0) target = $region41
    $region40: #{tiny_llm_forward.1} parent=1 // pred_region
      _
    $region41: #{tiny_llm_forward.1} parent=1 // pred_fallthru
      _
    // Predicated region
    $region42: #{tiny_llm_forward.1} parent=1 // pred_check
      _
    $region43: #{tiny_llm_forward.1} parent=1 // pred_check_branch
      %45 = sbr.rel (0) target = $region45
    $region44: #{tiny_llm_forward.1} parent=1 // pred_region
      _
    $region45: #{tiny_llm_forward.1} parent=1 // pred_fallthru
      _
    // Predicated region
    $region46: #{tiny_llm_forward.1} parent=1 // pred_check
      _
    $region47: #{tiny_llm_forward.1} parent=1 // pred_check_branch
      %47 = sbr.rel (0) target = $region49
    $region48: #{tiny_llm_forward.1} parent=1 // pred_region
      _
    $region49: #{tiny_llm_forward.1} parent=1 // pred_fallthru
      _
    // Predicated region
    $region50: #{tiny_llm_forward.1} parent=1 // pred_check
      _
    $region51: #{tiny_llm_forward.1} parent=1 // pred_check_branch
      %49 = sbr.rel (0) target = $region53
    $region52: #{tiny_llm_forward.1} parent=1 // pred_region
      _
    $region53: #{tiny_llm_forward.1} parent=1 // pred_fallthru
      _
    // Predicated region
    $region54: #{tiny_llm_forward.1} parent=1 // pred_check
      _
    $region55: #{tiny_llm_forward.1} parent=1 // pred_check_branch
      %51 = sbr.rel (0) target = $region57
    $region56: #{tiny_llm_forward.1} parent=1 // pred_region
      _
    $region57: #{tiny_llm_forward.1} parent=1 // pred_fallthru
      _
    // Predicated region
    $region58: #{tiny_llm_forward.1} parent=1 // pred_check
      _
    $region59: #{tiny_llm_forward.1} parent=1 // pred_check_branch
      %53 = sbr.rel (0) target = $region61
    $region60: #{tiny_llm_forward.1} parent=1 // pred_region
      _
    $region61: #{tiny_llm_forward.1} parent=1 // pred_fallthru
      _
    // Predicated region
    $region62: #{tiny_llm_forward.1} parent=1 // pred_check
      _
    $region63: #{tiny_llm_forward.1} parent=1 // pred_check_branch
      %55 = sbr.rel (0) target = $region65
    $region64: #{tiny_llm_forward.1} parent=1 // pred_region
      _
    $region65: #{tiny_llm_forward.1} parent=1 // pred_fallthru
      _
    // Predicated region
    $region66: #{tiny_llm_forward.1} parent=1 // pred_check
      _
    $region67: #{tiny_llm_forward.1} parent=1 // pred_check_branch
      %57 = sbr.rel (0) target = $region69
    $region68: #{tiny_llm_forward.1} parent=1 // pred_region
      _
    $region69: #{tiny_llm_forward.1} parent=1 // pred_fallthru
      _
    // Predicated region
    $region70: #{tiny_llm_forward.1} parent=1 // pred_check
      _
    $region71: #{tiny_llm_forward.1} parent=1 // pred_check_branch
      %59 = sbr.rel (0) target = $region73
    $region72: #{tiny_llm_forward.1} parent=1 // pred_region
      _
    $region73: #{tiny_llm_forward.1} parent=1 // pred_fallthru
      _
    %v60 = vld [vmem:[%s0] sm:$0xff]
    %v61 = vld [vmem:[%s0 + $0x8] sm:$0xff]
    %v62 = vlaneseq
    %v63 = vand.u32 %v62, 127
    %64 = vset.pattern.permute.xlu0 0
    %65 = vperm.xlu0 %64, %v60
    %v66 = vpop.permute.xlu0 %65
    %67 = vset.pattern.permute.xlu0 0
    %68 = vperm.xlu0 %67, %v61
    %v69 = vpop.permute.xlu0 %68
    %vm70 = vcmp.eq.s32.totalorder %v66, %v63
    %vm71 = vcmp.eq.s32.totalorder %v69, %v63
    %v72 = vsel %vm70, 1.0, 0.0
    %v73 = vsel %vm71, 1.0, 0.0
    %v74 = vld [vmem:[%s1] sm:$0xff]
    %v75 = vld [vmem:[%s1 + $0x8] sm:$0xff]
    %v76 = vld [vmem:[%s1 + $0x10] sm:$0xff]
    %v77 = vld [vmem:[%s1 + $0x18] sm:$0xff]
    %v78 = vld [vmem:[%s1 + $0x20] sm:$0xff]
    %v79 = vld [vmem:[%s1 + $0x28] sm:$0xff]
    %v80 = vld [vmem:[%s1 + $0x30] sm:$0xff]
    %v81 = vld [vmem:[%s1 + $0x38] sm:$0xff]
    %v82 = vld [vmem:[%s1 + $0x40] sm:$0xff]
    %v83 = vld [vmem:[%s1 + $0x48] sm:$0xff]
    %v84 = vld [vmem:[%s1 + $0x50] sm:$0xff]
    %v85 = vld [vmem:[%s1 + $0x58] sm:$0xff]
    %v86 = vld [vmem:[%s1 + $0x60] sm:$0xff]
    %v87 = vld [vmem:[%s1 + $0x68] sm:$0xff]
    %v88 = vld [vmem:[%s1 + $0x70] sm:$0xff]
    %v89 = vld [vmem:[%s1 + $0x78] sm:$0xff]
    %90 = vmatprep.subr.mxu0 0.0
    %91 = vmatpush1.msra.mxu0 %v74
    %92 = vmatprep.subr.mxu0 0.0
    %93 = vmatpush1.msra.mxu0 %v75
    %94 = vmatprep.subr.mxu0 0.0
    %95 = vmatpush1.msra.mxu0 %v76
    %96 = vmatprep.subr.mxu0 0.0
    %97 = vmatpush1.msra.mxu0 %v77
    %98 = vmatprep.subr.mxu0 0.0
    %99 = vmatpush1.msra.mxu0 %v78
    %100 = vmatprep.subr.mxu0 0.0
    %101 = vmatpush1.msra.mxu0 %v79
    %102 = vmatprep.subr.mxu0 0.0
    %103 = vmatpush1.msra.mxu0 %v80
    %104 = vmatprep.subr.mxu0 0.0
    %105 = vmatpush1.msra.mxu0 %v81
    %106 = vmatprep.subr.mxu0 0.0
    %107 = vmatpush1.msra.mxu0 %v82
    %108 = vmatprep.subr.mxu0 0.0
    %109 = vmatpush1.msra.mxu0 %v83
    %110 = vmatprep.subr.mxu0 0.0
    %111 = vmatpush1.msra.mxu0 %v84
    %112 = vmatprep.subr.mxu0 0.0
    %113 = vmatpush1.msra.mxu0 %v85
    %114 = vmatprep.subr.mxu0 0.0
    %115 = vmatpush1.msra.mxu0 %v86
    %116 = vmatprep.subr.mxu0 0.0
    %117 = vmatpush1.msra.mxu0 %v87
    %118 = vmatprep.subr.mxu0 0.0
    %119 = vmatpush1.msra.mxu0 %v88
    %120 = vmatprep.subr.mxu0 0.0
    %121 = vmatpush1.msra.mxu0 %v89
    %122 = vmatprep.subr.mxu0 0.0
    %123 = vmatpush1.msra.mxu0 0.0
    %124 = vmatprep.subr.mxu0 0.0
    %125 = vmatpush1.msra.mxu0 0.0
    %126 = vmatprep.subr.mxu0 0.0
    %127 = vmatpush1.msra.mxu0 0.0
    %128 = vmatprep.subr.mxu0 0.0
    %129 = vmatpush1.msra.mxu0 0.0
    %130 = vmatprep.subr.mxu0 0.0
    %131 = vmatpush1.msra.mxu0 0.0
    %132 = vmatprep.subr.mxu0 0.0
    %133 = vmatpush1.msra.mxu0 0.0
    %134 = vmatprep.subr.mxu0 0.0
    %135 = vmatpush1.msra.mxu0 0.0
    %136 = vmatprep.subr.mxu0 0.0
    %137 = vmatpush1.msra.mxu0 0.0
    %138 = vmatprep.subr.mxu0 0.0
    %139 = vmatpush1.msra.mxu0 0.0
    %140 = vmatprep.subr.mxu0 0.0
    %141 = vmatpush1.msra.mxu0 0.0
    %142 = vmatprep.subr.mxu0 0.0
    %143 = vmatpush1.msra.mxu0 0.0
    %144 = vmatprep.subr.mxu0 0.0
    %145 = vmatpush1.msra.mxu0 0.0
    %146 = vmatprep.subr.mxu0 0.0
    %147 = vmatpush1.msra.mxu0 0.0
    %148 = vmatprep.subr.mxu0 0.0
    %149 = vmatpush1.msra.mxu0 0.0
    %150 = vmatprep.subr.mxu0 0.0
    %151 = vmatpush1.msra.mxu0 0.0
    %152 = vmatprep.subr.mxu0 0.0
    %153 = vmatpush1.msra.mxu0 0.0
    %154 = vmatprep.mubr.f32.mxu0 0.0
    %155 = vmatmul.mubr.f32.gmra.mrb[0].mxu0 %v72
    %v156 = vpop.f32.mrb[0].mxu0
    %v157 = vadd.f32 0.0, %v156
    %v158 = vpop.f32.mrb[0].mxu0
    %159 = vmatprep.mubr.f32.mxu0 0.0
    %160 = vmatmul.mubr.f32.gmra.mrb[0].mxu0 %v73
    %v161 = vpop.f32.mrb[0].mxu0
    %v162 = vadd.f32 0.0, %v161
    %v163 = vpop.f32.mrb[0].mxu0
    %164 = vdwg.mxu0
    %v165 = vld [vmem:[%s2] sm:$0xff]
    %v166 = vld [vmem:[%s2 + $0x8] sm:$0xff]
    %v167 = vld [vmem:[%s2 + $0x10] sm:$0xff]
    %v168 = vld [vmem:[%s2 + $0x18] sm:$0xff]
    %v169 = vld [vmem:[%s2 + $0x20] sm:$0xff]
    %v170 = vld [vmem:[%s2 + $0x28] sm:$0xff]
    %v171 = vld [vmem:[%s2 + $0x30] sm:$0xff]
    %v172 = vld [vmem:[%s2 + $0x38] sm:$0xff]
    %v173 = vld [vmem:[%s2 + $0x40] sm:$0xff]
    %v174 = vld [vmem:[%s2 + $0x48] sm:$0xff]
    %v175 = vld [vmem:[%s2 + $0x50] sm:$0xff]
    %v176 = vld [vmem:[%s2 + $0x58] sm:$0xff]
    %v177 = vld [vmem:[%s2 + $0x60] sm:$0xff]
    %v178 = vld [vmem:[%s2 + $0x68] sm:$0xff]
    %v179 = vld [vmem:[%s2 + $0x70] sm:$0xff]
    %v180 = vld [vmem:[%s2 + $0x78] sm:$0xff]
    %v181 = vld [vmem:[%s3] sm:$0x3]
    %v182 = vld [vmem:[%s4] sm:$0xff]
    %v183 = vld [vmem:[%s4 + $0x8] sm:$0xff]
    %v184 = vld [vmem:[%s4 + $0x10] sm:$0xff]
    %v185 = vld [vmem:[%s4 + $0x18] sm:$0xff]
    %v186 = vld [vmem:[%s4 + $0x20] sm:$0xff]
    %v187 = vld [vmem:[%s4 + $0x28] sm:$0xff]
    %v188 = vld [vmem:[%s4 + $0x30] sm:$0xff]
    %v189 = vld [vmem:[%s4 + $0x38] sm:$0xff]
    %v190 = vld [vmem:[%s5] sm:$0x1]
    %v191 = vld [vmem:[%s6] sm:$0x1]
    %v192 = vld [vmem:[%s7] sm:$0x1]
    %v193 = vld [vmem:[%s8] sm:$0xff]
    %v194 = vld [vmem:[%s8 + $0x8] sm:$0xff]
    %v195 = vld [vmem:[%s8 + $0x10] sm:$0xff]
    %v196 = vld [vmem:[%s8 + $0x18] sm:$0xff]
    %v197 = vld [vmem:[%s8 + $0x20] sm:$0xff]
    %v198 = vld [vmem:[%s8 + $0x28] sm:$0xff]
    %v199 = vld [vmem:[%s8 + $0x30] sm:$0xff]
    %v200 = vld [vmem:[%s8 + $0x38] sm:$0xff]
    %v201 = vld [vmem:[%s8 + $0x40] sm:$0xff]
    %v202 = vld [vmem:[%s8 + $0x48] sm:$0xff]
    %v203 = vld [vmem:[%s8 + $0x50] sm:$0xff]
    %v204 = vld [vmem:[%s8 + $0x58] sm:$0xff]
    %v205 = vld [vmem:[%s8 + $0x60] sm:$0xff]
    %v206 = vld [vmem:[%s8 + $0x68] sm:$0xff]
    %v207 = vld [vmem:[%s8 + $0x70] sm:$0xff]
    %v208 = vld [vmem:[%s8 + $0x78] sm:$0xff]
    %v209 = vld [vmem:[%s9] sm:$0x3]
    %v210 = vld [vmem:[%s10] sm:$0xff]
    %v211 = vld [vmem:[%s10 + $0x8] sm:$0xff]
    %v212 = vld [vmem:[%s10 + $0x10] sm:$0xff]
    %v213 = vld [vmem:[%s10 + $0x18] sm:$0xff]
    %v214 = vld [vmem:[%s10 + $0x20] sm:$0xff]
    %v215 = vld [vmem:[%s10 + $0x28] sm:$0xff]
    %v216 = vld [vmem:[%s10 + $0x30] sm:$0xff]
    %v217 = vld [vmem:[%s10 + $0x38] sm:$0xff]
    %v218 = vld [vmem:[%s10 + $0x40] sm:$0xff]
    %v219 = vld [vmem:[%s10 + $0x48] sm:$0xff]
    %v220 = vld [vmem:[%s10 + $0x50] sm:$0xff]
    %v221 = vld [vmem:[%s10 + $0x58] sm:$0xff]
    %v222 = vld [vmem:[%s10 + $0x60] sm:$0xff]
    %v223 = vld [vmem:[%s10 + $0x68] sm:$0xff]
    %v224 = vld [vmem:[%s10 + $0x70] sm:$0xff]
    %v225 = vld [vmem:[%s10 + $0x78] sm:$0xff]
    %v226 = vld [vmem:[%s10 + $0x80] sm:$0xff]
    %v227 = vld [vmem:[%s10 + $0x88] sm:$0xff]
    %v228 = vld [vmem:[%s10 + $0x90] sm:$0xff]
    %v229 = vld [vmem:[%s10 + $0x98] sm:$0xff]
    %v230 = vld [vmem:[%s10 + $0xa0] sm:$0xff]
    %v231 = vld [vmem:[%s10 + $0xa8] sm:$0xff]
    %v232 = vld [vmem:[%s10 + $0xb0] sm:$0xff]
    %v233 = vld [vmem:[%s10 + $0xb8] sm:$0xff]
    %v234 = vld [vmem:[%s10 + $0xc0] sm:$0xff]
    %v235 = vld [vmem:[%s10 + $0xc8] sm:$0xff]
    %v236 = vld [vmem:[%s10 + $0xd0] sm:$0xff]
    %v237 = vld [vmem:[%s10 + $0xd8] sm:$0xff]
    %v238 = vld [vmem:[%s10 + $0xe0] sm:$0xff]
    %v239 = vld [vmem:[%s10 + $0xe8] sm:$0xff]
    %v240 = vld [vmem:[%s10 + $0xf0] sm:$0xff]
    %v241 = vld [vmem:[%s10 + $0xf8] sm:$0xff]
    %v242 = vld [vmem:[%s11] sm:$0x1]
    %v243 = vld [vmem:[%s12] sm:$0x1]
    %v244 = vld [vmem:[%s13] sm:$0x1]
    %v246 = vlaneseq
    %v247 = vshrl.u32 %v246, 7
    %v248 = vsub.s32 0, %v247
    %v249 = vrot.slane %v181, %v248
    %v250 = vlaneseq
    %v251 = vshrl.u32 %v250, 7
    %v252 = vsub.s32 1, %v251
    %v253 = vrot.slane %v181, %v252
    %vm256 = vcmask 523264
    %v258 = vsel %vm256, %v157, 0
    %v261 = vsel %vm256, %v162, 0
    %263 = vmatprep.subr.mxu0 %v166
    %264 = vmatpush1.msra.mxu0 %v165
    %265 = vmatprep.subr.mxu0 %v168
    %266 = vmatpush1.msra.mxu0 %v167
    %267 = vmatprep.subr.mxu0 %v170
    %268 = vmatpush1.msra.mxu0 %v169
    %269 = vmatprep.subr.mxu0 %v172
    %270 = vmatpush1.msra.mxu0 %v171
    %271 = vmatprep.subr.mxu0 %v174
    %272 = vmatpush1.msra.mxu0 %v173
    %273 = vmatprep.subr.mxu0 %v176
    %274 = vmatpush1.msra.mxu0 %v175
    %275 = vmatprep.subr.mxu0 %v178
    %276 = vmatpush1.msra.mxu0 %v177
    %277 = vmatprep.subr.mxu0 %v180
    %278 = vmatpush1.msra.mxu0 %v179
    %279 = vmatprep.subr.mxu0 0.0
    %280 = vmatpush1.msra.mxu0 0.0
    %281 = vmatprep.subr.mxu0 0.0
    %282 = vmatpush1.msra.mxu0 0.0
    %283 = vmatprep.subr.mxu0 0.0
    %284 = vmatpush1.msra.mxu0 0.0
    %285 = vmatprep.subr.mxu0 0.0
    %286 = vmatpush1.msra.mxu0 0.0
    %287 = vmatprep.subr.mxu0 0.0
    %288 = vmatpush1.msra.mxu0 0.0
    %289 = vmatprep.subr.mxu0 0.0
    %290 = vmatpush1.msra.mxu0 0.0
    %291 = vmatprep.subr.mxu0 0.0
    %292 = vmatpush1.msra.mxu0 0.0
    %293 = vmatprep.subr.mxu0 0.0
    %294 = vmatpush1.msra.mxu0 0.0
    %295 = vmatprep.subr.mxu0 0.0
    %296 = vmatpush1.msra.mxu0 0.0
    %297 = vmatprep.subr.mxu0 0.0
    %298 = vmatpush1.msra.mxu0 0.0
    %299 = vmatprep.subr.mxu0 0.0
    %300 = vmatpush1.msra.mxu0 0.0
    %301 = vmatprep.subr.mxu0 0.0
    %302 = vmatpush1.msra.mxu0 0.0
    %303 = vmatprep.subr.mxu0 0.0
    %304 = vmatpush1.msra.mxu0 0.0
    %305 = vmatprep.subr.mxu0 0.0
    %306 = vmatpush1.msra.mxu0 0.0
    %307 = vmatprep.subr.mxu0 0.0
    %308 = vmatpush1.msra.mxu0 0.0
    %309 = vmatprep.subr.mxu0 0.0
    %310 = vmatpush1.msra.mxu0 0.0
    %311 = vmatprep.subr.mxu0 0.0
    %312 = vmatpush1.msra.mxu0 0.0
    %313 = vmatprep.subr.mxu0 0.0
    %314 = vmatpush1.msra.mxu0 0.0
    %315 = vmatprep.subr.mxu0 0.0
    %316 = vmatpush1.msra.mxu0 0.0
    %317 = vmatprep.subr.mxu0 0.0
    %318 = vmatpush1.msra.mxu0 0.0
    %319 = vmatprep.subr.mxu0 0.0
    %320 = vmatpush1.msra.mxu0 0.0
    %321 = vmatprep.subr.mxu0 0.0
    %322 = vmatpush1.msra.mxu0 0.0
    %323 = vmatprep.subr.mxu0 0.0
    %324 = vmatpush1.msra.mxu0 0.0
    %325 = vmatprep.subr.mxu0 0.0
    %326 = vmatpush1.msra.mxu0 0.0
    %327 = vmatprep.mubr.f32.mxu0 0.0
    %328 = vmatmul.mubr.f32.gmra.mrb[0].mxu0 %v258
    %v329 = vpop.f32.mrb[0].mxu0
    %v330 = vadd.f32 %v249, %v329
    %v331 = vpop.f32.mrb[0].mxu0
    %v332 = vadd.f32 %v253, %v331
    %333 = vmatprep.mubr.f32.mxu0 0.0
    %334 = vmatmul.mubr.f32.gmra.mrb[0].mxu0 %v261
    %v335 = vpop.f32.mrb[0].mxu0
    %v336 = vadd.f32 %v249, %v335
    %v337 = vpop.f32.mrb[0].mxu0
    %v338 = vadd.f32 %v253, %v337
    %339 = vdwg.mxu0
    %v340 = vmul.f32 %v330, 0.25
    %v341 = vmul.f32 %v336, 0.25
    %343 = vrot.lane.b32.xlu0 %v330, 64
    %v344 = vpop.permute.xlu0 %343
    %vm345 = vcmask 130048
    %v347 = vsel %vm345, %v340, 0
    %v349 = vsel %vm345, %v344, 0
    %351 = vmatprep.subr.mxu0 0.0
    %352 = vmatpush1.xpose.msra.mxu0 %v349
    %353 = vmatprep.subr.mxu0 0.0
    %354 = vmatpush1.xpose.msra.mxu0 0.0
    %355 = vmatprep.subr.mxu0 0.0
    %356 = vmatpush1.xpose.msra.mxu0 0.0
    %357 = vmatprep.subr.mxu0 0.0
    %358 = vmatpush1.xpose.msra.mxu0 0.0
    %359 = vmatprep.subr.mxu0 0.0
    %360 = vmatpush1.xpose.msra.mxu0 0.0
    %361 = vmatprep.subr.mxu0 0.0
    %362 = vmatpush1.xpose.msra.mxu0 0.0
    %363 = vmatprep.subr.mxu0 0.0
    %364 = vmatpush1.xpose.msra.mxu0 0.0
    %365 = vmatprep.subr.mxu0 0.0
    %366 = vmatpush1.xpose.msra.mxu0 0.0
    %367 = vmatprep.subr.mxu0 0.0
    %368 = vmatpush1.xpose.msra.mxu0 0.0
    %369 = vmatprep.subr.mxu0 0.0
    %370 = vmatpush1.xpose.msra.mxu0 0.0
    %371 = vmatprep.subr.mxu0 0.0
    %372 = vmatpush1.xpose.msra.mxu0 0.0
    %373 = vmatprep.subr.mxu0 0.0
    %374 = vmatpush1.xpose.msra.mxu0 0.0
    %375 = vmatprep.subr.mxu0 0.0
    %376 = vmatpush1.xpose.msra.mxu0 0.0
    %377 = vmatprep.subr.mxu0 0.0
    %378 = vmatpush1.xpose.msra.mxu0 0.0
    %379 = vmatprep.subr.mxu0 0.0
    %380 = vmatpush1.xpose.msra.mxu0 0.0
    %381 = vmatprep.subr.mxu0 0.0
    %382 = vmatpush1.xpose.msra.mxu0 0.0
    %383 = vmatprep.subr.mxu0 0.0
    %384 = vmatpush1.xpose.msra.mxu0 0.0
    %385 = vmatprep.subr.mxu0 0.0
    %386 = vmatpush1.xpose.msra.mxu0 0.0
    %387 = vmatprep.subr.mxu0 0.0
    %388 = vmatpush1.xpose.msra.mxu0 0.0
    %389 = vmatprep.subr.mxu0 0.0
    %390 = vmatpush1.xpose.msra.mxu0 0.0
    %391 = vmatprep.subr.mxu0 0.0
    %392 = vmatpush1.xpose.msra.mxu0 0.0
    %393 = vmatprep.subr.mxu0 0.0
    %394 = vmatpush1.xpose.msra.mxu0 0.0
    %395 = vmatprep.subr.mxu0 0.0
    %396 = vmatpush1.xpose.msra.mxu0 0.0
    %397 = vmatprep.subr.mxu0 0.0
    %398 = vmatpush1.xpose.msra.mxu0 0.0
    %399 = vmatprep.subr.mxu0 0.0
    %400 = vmatpush1.xpose.msra.mxu0 0.0
    %401 = vmatprep.subr.mxu0 0.0
    %402 = vmatpush1.xpose.msra.mxu0 0.0
    %403 = vmatprep.subr.mxu0 0.0
    %404 = vmatpush1.xpose.msra.mxu0 0.0
    %405 = vmatprep.subr.mxu0 0.0
    %406 = vmatpush1.xpose.msra.mxu0 0.0
    %407 = vmatprep.subr.mxu0 0.0
    %408 = vmatpush1.xpose.msra.mxu0 0.0
    %409 = vmatprep.subr.mxu0 0.0
    %410 = vmatpush1.xpose.msra.mxu0 0.0
    %411 = vmatprep.subr.mxu0 0.0
    %412 = vmatpush1.xpose.msra.mxu0 0.0
    %413 = vmatprep.subr.mxu0 0.0
    %414 = vmatpush1.xpose.msra.mxu0 0.0
    %415 = vmatprep.mubr.f32.mxu0 0.0
    %416 = vmatmul.mubr.f32.gmra.mrb[0].mxu0 %v347
    %v417 = vpop.f32.mrb[0].mxu0
    %v418 = vadd.f32 0.0, %v417
    %v419 = vpop.f32.mrb[0].mxu0
    %420 = vdwg.mxu0
    %vm421 = vcmask 64512
    %v422 = vsel %vm421, %v418, -inf
    %423 = vmax.xlane.f32.xlu0 %v422
    %v424 = vpop.xlane.xlu0 %423
    %v425 = vsub.f32 %v418, %v424
    %v426 = vmul.f32 %v425, 1.442695
    %v427 = vpow.pop %v426
    %v428 = vsel %vm421, %v427, 0.0
    %429 = vadd.xlane.f32.xlu0 %v428
    %v430 = vpop.xlane.xlu0 %429
    %v431 = vrcp.pop %v430
    %v432 = vmul.f32 %v427, %v431
    %v434 = vsel %vm421, %v432, 0
    %436 = vmatprep.subr.mxu0 0.0
    %437 = vmatpush1.msra.mxu0 %v332
    %438 = vmatprep.subr.mxu0 0.0
    %439 = vmatpush1.msra.mxu0 0.0
    %440 = vmatprep.subr.mxu0 0.0
    %441 = vmatpush1.msra.mxu0 0.0
    %442 = vmatprep.subr.mxu0 0.0
    %443 = vmatpush1.msra.mxu0 0.0
    %444 = vmatprep.subr.mxu0 0.0
    %445 = vmatpush1.msra.mxu0 0.0
    %446 = vmatprep.subr.mxu0 0.0
    %447 = vmatpush1.msra.mxu0 0.0
    %448 = vmatprep.subr.mxu0 0.0
    %449 = vmatpush1.msra.mxu0 0.0
    %450 = vmatprep.subr.mxu0 0.0
    %451 = vmatpush1.msra.mxu0 0.0
    %452 = vmatprep.subr.mxu0 0.0
    %453 = vmatpush1.msra.mxu0 0.0
    %454 = vmatprep.subr.mxu0 0.0
    %455 = vmatpush1.msra.mxu0 0.0
    %456 = vmatprep.subr.mxu0 0.0
    %457 = vmatpush1.msra.mxu0 0.0
    %458 = vmatprep.subr.mxu0 0.0
    %459 = vmatpush1.msra.mxu0 0.0
    %460 = vmatprep.subr.mxu0 0.0
    %461 = vmatpush1.msra.mxu0 0.0
    %462 = vmatprep.subr.mxu0 0.0
    %463 = vmatpush1.msra.mxu0 0.0
    %464 = vmatprep.subr.mxu0 0.0
    %465 = vmatpush1.msra.mxu0 0.0
    %466 = vmatprep.subr.mxu0 0.0
    %467 = vmatpush1.msra.mxu0 0.0
    %468 = vmatprep.subr.mxu0 0.0
    %469 = vmatpush1.msra.mxu0 0.0
    %470 = vmatprep.subr.mxu0 0.0
    %471 = vmatpush1.msra.mxu0 0.0
    %472 = vmatprep.subr.mxu0 0.0
    %473 = vmatpush1.msra.mxu0 0.0
    %474 = vmatprep.subr.mxu0 0.0
    %475 = vmatpush1.msra.mxu0 0.0
    %476 = vmatprep.subr.mxu0 0.0
    %477 = vmatpush1.msra.mxu0 0.0
    %478 = vmatprep.subr.mxu0 0.0
    %479 = vmatpush1.msra.mxu0 0.0
    %480 = vmatprep.subr.mxu0 0.0
    %481 = vmatpush1.msra.mxu0 0.0
    %482 = vmatprep.subr.mxu0 0.0
    %483 = vmatpush1.msra.mxu0 0.0
    %484 = vmatprep.subr.mxu0 0.0
    %485 = vmatpush1.msra.mxu0 0.0
    %486 = vmatprep.subr.mxu0 0.0
    %487 = vmatpush1.msra.mxu0 0.0
    %488 = vmatprep.subr.mxu0 0.0
    %489 = vmatpush1.msra.mxu0 0.0
    %490 = vmatprep.subr.mxu0 0.0
    %491 = vmatpush1.msra.mxu0 0.0
    %492 = vmatprep.subr.mxu0 0.0
    %493 = vmatpush1.msra.mxu0 0.0
    %494 = vmatprep.subr.mxu0 0.0
    %495 = vmatpush1.msra.mxu0 0.0
    %496 = vmatprep.subr.mxu0 0.0
    %497 = vmatpush1.msra.mxu0 0.0
    %498 = vmatprep.subr.mxu0 0.0
    %499 = vmatpush1.msra.mxu0 0.0
    %500 = vmatprep.mubr.f32.mxu0 0.0
    %501 = vmatmul.mubr.f32.gmra.mrb[0].mxu0 %v434
    %v502 = vpop.f32.mrb[0].mxu0
    %v503 = vadd.f32 0.0, %v502
    %v504 = vpop.f32.mrb[0].mxu0
    %505 = vdwg.mxu0
    %506 = vrot.lane.b32.xlu0 %v340, 112
    %v507 = vpop.permute.xlu0 %506
    %508 = vrot.lane.b32.xlu0 %v330, 48
    %v509 = vpop.permute.xlu0 %508
    %v510 = vsel %vm345, %v507, 0
    %v512 = vsel %vm345, %v509, 0
    %514 = vmatprep.subr.mxu0 0.0
    %515 = vmatpush1.xpose.msra.mxu0 %v512
    %516 = vmatprep.subr.mxu0 0.0
    %517 = vmatpush1.xpose.msra.mxu0 0.0
    %518 = vmatprep.subr.mxu0 0.0
    %519 = vmatpush1.xpose.msra.mxu0 0.0
    %520 = vmatprep.subr.mxu0 0.0
    %521 = vmatpush1.xpose.msra.mxu0 0.0
    %522 = vmatprep.subr.mxu0 0.0
    %523 = vmatpush1.xpose.msra.mxu0 0.0
    %524 = vmatprep.subr.mxu0 0.0
    %525 = vmatpush1.xpose.msra.mxu0 0.0
    %526 = vmatprep.subr.mxu0 0.0
    %527 = vmatpush1.xpose.msra.mxu0 0.0
    %528 = vmatprep.subr.mxu0 0.0
    %529 = vmatpush1.xpose.msra.mxu0 0.0
    %530 = vmatprep.subr.mxu0 0.0
    %531 = vmatpush1.xpose.msra.mxu0 0.0
    %532 = vmatprep.subr.mxu0 0.0
    %533 = vmatpush1.xpose.msra.mxu0 0.0
    %534 = vmatprep.subr.mxu0 0.0
    %535 = vmatpush1.xpose.msra.mxu0 0.0
    %536 = vmatprep.subr.mxu0 0.0
    %537 = vmatpush1.xpose.msra.mxu0 0.0
    %538 = vmatprep.subr.mxu0 0.0
    %539 = vmatpush1.xpose.msra.mxu0 0.0
    %540 = vmatprep.subr.mxu0 0.0
    %541 = vmatpush1.xpose.msra.mxu0 0.0
    %542 = vmatprep.subr.mxu0 0.0
    %543 = vmatpush1.xpose.msra.mxu0 0.0
    %544 = vmatprep.subr.mxu0 0.0
    %545 = vmatpush1.xpose.msra.mxu0 0.0
    %546 = vmatprep.subr.mxu0 0.0
    %547 = vmatpush1.xpose.msra.mxu0 0.0
    %548 = vmatprep.subr.mxu0 0.0
    %549 = vmatpush1.xpose.msra.mxu0 0.0
    %550 = vmatprep.subr.mxu0 0.0
    %551 = vmatpush1.xpose.msra.mxu0 0.0
    %552 = vmatprep.subr.mxu0 0.0
    %553 = vmatpush1.xpose.msra.mxu0 0.0
    %554 = vmatprep.subr.mxu0 0.0
    %555 = vmatpush1.xpose.msra.mxu0 0.0
    %556 = vmatprep.subr.mxu0 0.0
    %557 = vmatpush1.xpose.msra.mxu0 0.0
    %558 = vmatprep.subr.mxu0 0.0
    %559 = vmatpush1.xpose.msra.mxu0 0.0
    %560 = vmatprep.subr.mxu0 0.0
    %561 = vmatpush1.xpose.msra.mxu0 0.0
    %562 = vmatprep.subr.mxu0 0.0
    %563 = vmatpush1.xpose.msra.mxu0 0.0
    %564 = vmatprep.subr.mxu0 0.0
    %565 = vmatpush1.xpose.msra.mxu0 0.0
    %566 = vmatprep.subr.mxu0 0.0
    %567 = vmatpush1.xpose.msra.mxu0 0.0
    %568 = vmatprep.subr.mxu0 0.0
    %569 = vmatpush1.xpose.msra.mxu0 0.0
    %570 = vmatprep.subr.mxu0 0.0
    %571 = vmatpush1.xpose.msra.mxu0 0.0
    %572 = vmatprep.subr.mxu0 0.0
    %573 = vmatpush1.xpose.msra.mxu0 0.0
    %574 = vmatprep.subr.mxu0 0.0
    %575 = vmatpush1.xpose.msra.mxu0 0.0
    %576 = vmatprep.subr.mxu0 0.0
    %577 = vmatpush1.xpose.msra.mxu0 0.0
    %578 = vmatprep.mubr.f32.mxu0 0.0
    %579 = vmatmul.mubr.f32.gmra.mrb[0].mxu0 %v510
    %v580 = vpop.f32.mrb[0].mxu0
    %v581 = vadd.f32 0.0, %v580
    %v582 = vpop.f32.mrb[0].mxu0
    %583 = vdwg.mxu0
    %v584 = vsel %vm421, %v581, -inf
    %585 = vmax.xlane.f32.xlu0 %v584
    %v586 = vpop.xlane.xlu0 %585
    %v587 = vsub.f32 %v581, %v586
    %v588 = vmul.f32 %v587, 1.442695
    %v589 = vpow.pop %v588
    %v590 = vsel %vm421, %v589, 0.0
    %591 = vadd.xlane.f32.xlu0 %v590
    %v592 = vpop.xlane.xlu0 %591
    %v593 = vrcp.pop %v592
    %v594 = vmul.f32 %v589, %v593
    %596 = vrot.lane.b32.xlu0 %v332, 112
    %v597 = vpop.permute.xlu0 %596
    %v600 = vsel %vm421, %v594, 0
    %602 = vmatprep.subr.mxu0 0.0
    %603 = vmatpush1.msra.mxu0 %v597
    %604 = vmatprep.subr.mxu0 0.0
    %605 = vmatpush1.msra.mxu0 0.0
    %606 = vmatprep.subr.mxu0 0.0
    %607 = vmatpush1.msra.mxu0 0.0
    %608 = vmatprep.subr.mxu0 0.0
    %609 = vmatpush1.msra.mxu0 0.0
    %610 = vmatprep.subr.mxu0 0.0
    %611 = vmatpush1.msra.mxu0 0.0
    %612 = vmatprep.subr.mxu0 0.0
    %613 = vmatpush1.msra.mxu0 0.0
    %614 = vmatprep.subr.mxu0 0.0
    %615 = vmatpush1.msra.mxu0 0.0
    %616 = vmatprep.subr.mxu0 0.0
    %617 = vmatpush1.msra.mxu0 0.0
    %618 = vmatprep.subr.mxu0 0.0
    %619 = vmatpush1.msra.mxu0 0.0
    %620 = vmatprep.subr.mxu0 0.0
    %621 = vmatpush1.msra.mxu0 0.0
    %622 = vmatprep.subr.mxu0 0.0
    %623 = vmatpush1.msra.mxu0 0.0
    %624 = vmatprep.subr.mxu0 0.0
    %625 = vmatpush1.msra.mxu0 0.0
    %626 = vmatprep.subr.mxu0 0.0
    %627 = vmatpush1.msra.mxu0 0.0
    %628 = vmatprep.subr.mxu0 0.0
    %629 = vmatpush1.msra.mxu0 0.0
    %630 = vmatprep.subr.mxu0 0.0
    %631 = vmatpush1.msra.mxu0 0.0
    %632 = vmatprep.subr.mxu0 0.0
    %633 = vmatpush1.msra.mxu0 0.0
    %634 = vmatprep.subr.mxu0 0.0
    %635 = vmatpush1.msra.mxu0 0.0
    %636 = vmatprep.subr.mxu0 0.0
    %637 = vmatpush1.msra.mxu0 0.0
    %638 = vmatprep.subr.mxu0 0.0
    %639 = vmatpush1.msra.mxu0 0.0
    %640 = vmatprep.subr.mxu0 0.0
    %641 = vmatpush1.msra.mxu0 0.0
    %642 = vmatprep.subr.mxu0 0.0
    %643 = vmatpush1.msra.mxu0 0.0
    %644 = vmatprep.subr.mxu0 0.0
    %645 = vmatpush1.msra.mxu0 0.0
    %646 = vmatprep.subr.mxu0 0.0
    %647 = vmatpush1.msra.mxu0 0.0
    %648 = vmatprep.subr.mxu0 0.0
    %649 = vmatpush1.msra.mxu0 0.0
    %650 = vmatprep.subr.mxu0 0.0
    %651 = vmatpush1.msra.mxu0 0.0
    %652 = vmatprep.subr.mxu0 0.0
    %653 = vmatpush1.msra.mxu0 0.0
    %654 = vmatprep.subr.mxu0 0.0
    %655 = vmatpush1.msra.mxu0 0.0
    %656 = vmatprep.subr.mxu0 0.0
    %657 = vmatpush1.msra.mxu0 0.0
    %658 = vmatprep.subr.mxu0 0.0
    %659 = vmatpush1.msra.mxu0 0.0
    %660 = vmatprep.subr.mxu0 0.0
    %661 = vmatpush1.msra.mxu0 0.0
    %662 = vmatprep.subr.mxu0 0.0
    %663 = vmatpush1.msra.mxu0 0.0
    %664 = vmatprep.subr.mxu0 0.0
    %665 = vmatpush1.msra.mxu0 0.0
    %666 = vmatprep.mubr.f32.mxu0 0.0
    %667 = vmatmul.mubr.f32.gmra.mrb[0].mxu0 %v600
    %v668 = vpop.f32.mrb[0].mxu0
    %v669 = vadd.f32 0.0, %v668
    %v670 = vpop.f32.mrb[0].mxu0
    %671 = vdwg.mxu0
    %672 = vrot.lane.b32.xlu0 %v340, 96
    %v673 = vpop.permute.xlu0 %672
    %674 = vrot.lane.b32.xlu0 %v330, 32
    %v675 = vpop.permute.xlu0 %674
    %v676 = vsel %vm345, %v673, 0
    %v678 = vsel %vm345, %v675, 0
    %680 = vmatprep.subr.mxu0 0.0
    %681 = vmatpush1.xpose.msra.mxu0 %v678
    %682 = vmatprep.subr.mxu0 0.0
    %683 = vmatpush1.xpose.msra.mxu0 0.0
    %684 = vmatprep.subr.mxu0 0.0
    %685 = vmatpush1.xpose.msra.mxu0 0.0
    %686 = vmatprep.subr.mxu0 0.0
    %687 = vmatpush1.xpose.msra.mxu0 0.0
    %688 = vmatprep.subr.mxu0 0.0
    %689 = vmatpush1.xpose.msra.mxu0 0.0
    %690 = vmatprep.subr.mxu0 0.0
    %691 = vmatpush1.xpose.msra.mxu0 0.0
    %692 = vmatprep.subr.mxu0 0.0
    %693 = vmatpush1.xpose.msra.mxu0 0.0
    %694 = vmatprep.subr.mxu0 0.0
    %695 = vmatpush1.xpose.msra.mxu0 0.0
    %696 = vmatprep.subr.mxu0 0.0
    %697 = vmatpush1.xpose.msra.mxu0 0.0
    %698 = vmatprep.subr.mxu0 0.0
    %699 = vmatpush1.xpose.msra.mxu0 0.0
    %700 = vmatprep.subr.mxu0 0.0
    %701 = vmatpush1.xpose.msra.mxu0 0.0
    %702 = vmatprep.subr.mxu0 0.0
    %703 = vmatpush1.xpose.msra.mxu0 0.0
    %704 = vmatprep.subr.mxu0 0.0
    %705 = vmatpush1.xpose.msra.mxu0 0.0
    %706 = vmatprep.subr.mxu0 0.0
    %707 = vmatpush1.xpose.msra.mxu0 0.0
    %708 = vmatprep.subr.mxu0 0.0
    %709 = vmatpush1.xpose.msra.mxu0 0.0
    %710 = vmatprep.subr.mxu0 0.0
    %711 = vmatpush1.xpose.msra.mxu0 0.0
    %712 = vmatprep.subr.mxu0 0.0
    %713 = vmatpush1.xpose.msra.mxu0 0.0
    %714 = vmatprep.subr.mxu0 0.0
    %715 = vmatpush1.xpose.msra.mxu0 0.0
    %716 = vmatprep.subr.mxu0 0.0
    %717 = vmatpush1.xpose.msra.mxu0 0.0
    %718 = vmatprep.subr.mxu0 0.0
    %719 = vmatpush1.xpose.msra.mxu0 0.0
    %720 = vmatprep.subr.mxu0 0.0
    %721 = vmatpush1.xpose.msra.mxu0 0.0
    %722 = vmatprep.subr.mxu0 0.0
    %723 = vmatpush1.xpose.msra.mxu0 0.0
    %724 = vmatprep.subr.mxu0 0.0
    %725 = vmatpush1.xpose.msra.mxu0 0.0
    %726 = vmatprep.subr.mxu0 0.0
    %727 = vmatpush1.xpose.msra.mxu0 0.0
    %728 = vmatprep.subr.mxu0 0.0
    %729 = vmatpush1.xpose.msra.mxu0 0.0
    %730 = vmatprep.subr.mxu0 0.0
    %731 = vmatpush1.xpose.msra.mxu0 0.0
    %732 = vmatprep.subr.mxu0 0.0
    %733 = vmatpush1.xpose.msra.mxu0 0.0
    %734 = vmatprep.subr.mxu0 0.0
    %735 = vmatpush1.xpose.msra.mxu0 0.0
    %736 = vmatprep.subr.mxu0 0.0
    %737 = vmatpush1.xpose.msra.mxu0 0.0
    %738 = vmatprep.subr.mxu0 0.0
    %739 = vmatpush1.xpose.msra.mxu0 0.0
    %740 = vmatprep.subr.mxu0 0.0
    %741 = vmatpush1.xpose.msra.mxu0 0.0
    %742 = vmatprep.subr.mxu0 0.0
    %743 = vmatpush1.xpose.msra.mxu0 0.0
    %744 = vmatprep.mubr.f32.mxu0 0.0
    %745 = vmatmul.mubr.f32.gmra.mrb[0].mxu0 %v676
    %v746 = vpop.f32.mrb[0].mxu0
    %v747 = vadd.f32 0.0, %v746
    %v748 = vpop.f32.mrb[0].mxu0
    %749 = vdwg.mxu0
    %v750 = vsel %vm421, %v747, -inf
    %751 = vmax.xlane.f32.xlu0 %v750
    %v752 = vpop.xlane.xlu0 %751
    %v753 = vsub.f32 %v747, %v752
    %v754 = vmul.f32 %v753, 1.442695
    %v755 = vpow.pop %v754
    %v756 = vsel %vm421, %v755, 0.0
    %757 = vadd.xlane.f32.xlu0 %v756
    %v758 = vpop.xlane.xlu0 %757
    %v759 = vrcp.pop %v758
    %v760 = vmul.f32 %v755, %v759
    %761 = vrot.lane.b32.xlu0 %v332, 96
    %v762 = vpop.permute.xlu0 %761
    %v765 = vsel %vm421, %v760, 0
    %767 = vmatprep.subr.mxu0 0.0
    %768 = vmatpush1.msra.mxu0 %v762
    %769 = vmatprep.subr.mxu0 0.0
    %770 = vmatpush1.msra.mxu0 0.0
    %771 = vmatprep.subr.mxu0 0.0
    %772 = vmatpush1.msra.mxu0 0.0
    %773 = vmatprep.subr.mxu0 0.0
    %774 = vmatpush1.msra.mxu0 0.0
    %775 = vmatprep.subr.mxu0 0.0
    %776 = vmatpush1.msra.mxu0 0.0
    %777 = vmatprep.subr.mxu0 0.0
    %778 = vmatpush1.msra.mxu0 0.0
    %779 = vmatprep.subr.mxu0 0.0
    %780 = vmatpush1.msra.mxu0 0.0
    %781 = vmatprep.subr.mxu0 0.0
    %782 = vmatpush1.msra.mxu0 0.0
    %783 = vmatprep.subr.mxu0 0.0
    %784 = vmatpush1.msra.mxu0 0.0
    %785 = vmatprep.subr.mxu0 0.0
    %786 = vmatpush1.msra.mxu0 0.0
    %787 = vmatprep.subr.mxu0 0.0
    %788 = vmatpush1.msra.mxu0 0.0
    %789 = vmatprep.subr.mxu0 0.0
    %790 = vmatpush1.msra.mxu0 0.0
    %791 = vmatprep.subr.mxu0 0.0
    %792 = vmatpush1.msra.mxu0 0.0
    %793 = vmatprep.subr.mxu0 0.0
    %794 = vmatpush1.msra.mxu0 0.0
    %795 = vmatprep.subr.mxu0 0.0
    %796 = vmatpush1.msra.mxu0 0.0
    %797 = vmatprep.subr.mxu0 0.0
    %798 = vmatpush1.msra.mxu0 0.0
    %799 = vmatprep.subr.mxu0 0.0
    %800 = vmatpush1.msra.mxu0 0.0
    %801 = vmatprep.subr.mxu0 0.0
    %802 = vmatpush1.msra.mxu0 0.0
    %803 = vmatprep.subr.mxu0 0.0
    %804 = vmatpush1.msra.mxu0 0.0
    %805 = vmatprep.subr.mxu0 0.0
    %806 = vmatpush1.msra.mxu0 0.0
    %807 = vmatprep.subr.mxu0 0.0
    %808 = vmatpush1.msra.mxu0 0.0
    %809 = vmatprep.subr.mxu0 0.0
    %810 = vmatpush1.msra.mxu0 0.0
    %811 = vmatprep.subr.mxu0 0.0
    %812 = vmatpush1.msra.mxu0 0.0
    %813 = vmatprep.subr.mxu0 0.0
    %814 = vmatpush1.msra.mxu0 0.0
    %815 = vmatprep.subr.mxu0 0.0
    %816 = vmatpush1.msra.mxu0 0.0
    %817 = vmatprep.subr.mxu0 0.0
    %818 = vmatpush1.msra.mxu0 0.0
    %819 = vmatprep.subr.mxu0 0.0
    %820 = vmatpush1.msra.mxu0 0.0
    %821 = vmatprep.subr.mxu0 0.0
    %822 = vmatpush1.msra.mxu0 0.0
    %823 = vmatprep.subr.mxu0 0.0
    %824 = vmatpush1.msra.mxu0 0.0
    %825 = vmatprep.subr.mxu0 0.0
    %826 = vmatpush1.msra.mxu0 0.0
    %827 = vmatprep.subr.mxu0 0.0
    %828 = vmatpush1.msra.mxu0 0.0
    %829 = vmatprep.subr.mxu0 0.0
    %830 = vmatpush1.msra.mxu0 0.0
    %831 = vmatprep.mubr.f32.mxu0 0.0
    %832 = vmatmul.mubr.f32.gmra.mrb[0].mxu0 %v765
    %v833 = vpop.f32.mrb[0].mxu0
    %v834 = vadd.f32 0.0, %v833
    %v835 = vpop.f32.mrb[0].mxu0
    %836 = vdwg.mxu0
    %837 = vrot.lane.b32.xlu0 %v340, 80
    %v838 = vpop.permute.xlu0 %837
    %839 = vrot.lane.b32.xlu0 %v330, 16
    %v840 = vpop.permute.xlu0 %839
    %v841 = vsel %vm345, %v838, 0
    %v843 = vsel %vm345, %v840, 0
    %845 = vmatprep.subr.mxu0 0.0
    %846 = vmatpush1.xpose.msra.mxu0 %v843
    %847 = vmatprep.subr.mxu0 0.0
    %848 = vmatpush1.xpose.msra.mxu0 0.0
    %849 = vmatprep.subr.mxu0 0.0
    %850 = vmatpush1.xpose.msra.mxu0 0.0
    %851 = vmatprep.subr.mxu0 0.0
    %852 = vmatpush1.xpose.msra.mxu0 0.0
    %853 = vmatprep.subr.mxu0 0.0
    %854 = vmatpush1.xpose.msra.mxu0 0.0
    %855 = vmatprep.subr.mxu0 0.0
    %856 = vmatpush1.xpose.msra.mxu0 0.0
    %857 = vmatprep.subr.mxu0 0.0
    %858 = vmatpush1.xpose.msra.mxu0 0.0
    %859 = vmatprep.subr.mxu0 0.0
    %860 = vmatpush1.xpose.msra.mxu0 0.0
    %861 = vmatprep.subr.mxu0 0.0
    %862 = vmatpush1.xpose.msra.mxu0 0.0
    %863 = vmatprep.subr.mxu0 0.0
    %864 = vmatpush1.xpose.msra.mxu0 0.0
    %865 = vmatprep.subr.mxu0 0.0
    %866 = vmatpush1.xpose.msra.mxu0 0.0
    %867 = vmatprep.subr.mxu0 0.0
    %868 = vmatpush1.xpose.msra.mxu0 0.0
    %869 = vmatprep.subr.mxu0 0.0
    %870 = vmatpush1.xpose.msra.mxu0 0.0
    %871 = vmatprep.subr.mxu0 0.0
    %872 = vmatpush1.xpose.msra.mxu0 0.0
    %873 = vmatprep.subr.mxu0 0.0
    %874 = vmatpush1.xpose.msra.mxu0 0.0
    %875 = vmatprep.subr.mxu0 0.0
    %876 = vmatpush1.xpose.msra.mxu0 0.0
    %877 = vmatprep.subr.mxu0 0.0
    %878 = vmatpush1.xpose.msra.mxu0 0.0
    %879 = vmatprep.subr.mxu0 0.0
    %880 = vmatpush1.xpose.msra.mxu0 0.0
    %881 = vmatprep.subr.mxu0 0.0
    %882 = vmatpush1.xpose.msra.mxu0 0.0
    %883 = vmatprep.subr.mxu0 0.0
    %884 = vmatpush1.xpose.msra.mxu0 0.0
    %885 = vmatprep.subr.mxu0 0.0
    %886 = vmatpush1.xpose.msra.mxu0 0.0
    %887 = vmatprep.subr.mxu0 0.0
    %888 = vmatpush1.xpose.msra.mxu0 0.0
    %889 = vmatprep.subr.mxu0 0.0
    %890 = vmatpush1.xpose.msra.mxu0 0.0
    %891 = vmatprep.subr.mxu0 0.0
    %892 = vmatpush1.xpose.msra.mxu0 0.0
    %893 = vmatprep.subr.mxu0 0.0
    %894 = vmatpush1.xpose.msra.mxu0 0.0
    %895 = vmatprep.subr.mxu0 0.0
    %896 = vmatpush1.xpose.msra.mxu0 0.0
    %897 = vmatprep.subr.mxu0 0.0
    %898 = vmatpush1.xpose.msra.mxu0 0.0
    %899 = vmatprep.subr.mxu0 0.0
    %900 = vmatpush1.xpose.msra.mxu0 0.0
    %901 = vmatprep.subr.mxu0 0.0
    %902 = vmatpush1.xpose.msra.mxu0 0.0
    %903 = vmatprep.subr.mxu0 0.0
    %904 = vmatpush1.xpose.msra.mxu0 0.0
    %905 = vmatprep.subr.mxu0 0.0
    %906 = vmatpush1.xpose.msra.mxu0 0.0
    %907 = vmatprep.subr.mxu0 0.0
    %908 = vmatpush1.xpose.msra.mxu0 0.0
    %909 = vmatprep.mubr.f32.mxu0 0.0
    %910 = vmatmul.mubr.f32.gmra.mrb[0].mxu0 %v841
    %v911 = vpop.f32.mrb[0].mxu0
    %v912 = vadd.f32 0.0, %v911
    %v913 = vpop.f32.mrb[0].mxu0
    %914 = vdwg.mxu0
    %v915 = vsel %vm421, %v912, -inf
    %916 = vmax.xlane.f32.xlu0 %v915
    %v917 = vpop.xlane.xlu0 %916
    %v918 = vsub.f32 %v912, %v917
    %v919 = vmul.f32 %v918, 1.442695
    %v920 = vpow.pop %v919
    %v921 = vsel %vm421, %v920, 0.0
    %922 = vadd.xlane.f32.xlu0 %v921
    %v923 = vpop.xlane.xlu0 %922
    %v924 = vrcp.pop %v923
    %v925 = vmul.f32 %v920, %v924
    %926 = vrot.lane.b32.xlu0 %v332, 80
    %v927 = vpop.permute.xlu0 %926
    %v930 = vsel %vm421, %v925, 0
    %932 = vmatprep.subr.mxu0 0.0
    %933 = vmatpush1.msra.mxu0 %v927
    %934 = vmatprep.subr.mxu0 0.0
    %935 = vmatpush1.msra.mxu0 0.0
    %936 = vmatprep.subr.mxu0 0.0
    %937 = vmatpush1.msra.mxu0 0.0
    %938 = vmatprep.subr.mxu0 0.0
    %939 = vmatpush1.msra.mxu0 0.0
    %940 = vmatprep.subr.mxu0 0.0
    %941 = vmatpush1.msra.mxu0 0.0
    %942 = vmatprep.subr.mxu0 0.0
    %943 = vmatpush1.msra.mxu0 0.0
    %944 = vmatprep.subr.mxu0 0.0
    %945 = vmatpush1.msra.mxu0 0.0
    %946 = vmatprep.subr.mxu0 0.0
    %947 = vmatpush1.msra.mxu0 0.0
    %948 = vmatprep.subr.mxu0 0.0
    %949 = vmatpush1.msra.mxu0 0.0
    %950 = vmatprep.subr.mxu0 0.0
    %951 = vmatpush1.msra.mxu0 0.0
    %952 = vmatprep.subr.mxu0 0.0
    %953 = vmatpush1.msra.mxu0 0.0
    %954 = vmatprep.subr.mxu0 0.0
    %955 = vmatpush1.msra.mxu0 0.0
    %956 = vmatprep.subr.mxu0 0.0
    %957 = vmatpush1.msra.mxu0 0.0
    %958 = vmatprep.subr.mxu0 0.0
    %959 = vmatpush1.msra.mxu0 0.0
    %960 = vmatprep.subr.mxu0 0.0
    %961 = vmatpush1.msra.mxu0 0.0
    %962 = vmatprep.subr.mxu0 0.0
    %963 = vmatpush1.msra.mxu0 0.0
    %964 = vmatprep.subr.mxu0 0.0
    %965 = vmatpush1.msra.mxu0 0.0
    %966 = vmatprep.subr.mxu0 0.0
    %967 = vmatpush1.msra.mxu0 0.0
    %968 = vmatprep.subr.mxu0 0.0
    %969 = vmatpush1.msra.mxu0 0.0
    %970 = vmatprep.subr.mxu0 0.0
    %971 = vmatpush1.msra.mxu0 0.0
    %972 = vmatprep.subr.mxu0 0.0
    %973 = vmatpush1.msra.mxu0 0.0
    %974 = vmatprep.subr.mxu0 0.0
    %975 = vmatpush1.msra.mxu0 0.0
    %976 = vmatprep.subr.mxu0 0.0
    %977 = vmatpush1.msra.mxu0 0.0
    %978 = vmatprep.subr.mxu0 0.0
    %979 = vmatpush1.msra.mxu0 0.0
    %980 = vmatprep.subr.mxu0 0.0
    %981 = vmatpush1.msra.mxu0 0.0
    %982 = vmatprep.subr.mxu0 0.0
    %983 = vmatpush1.msra.mxu0 0.0
    %984 = vmatprep.subr.mxu0 0.0
    %985 = vmatpush1.msra.mxu0 0.0
    %986 = vmatprep.subr.mxu0 0.0
    %987 = vmatpush1.msra.mxu0 0.0
    %988 = vmatprep.subr.mxu0 0.0
    %989 = vmatpush1.msra.mxu0 0.0
    %990 = vmatprep.subr.mxu0 0.0
    %991 = vmatpush1.msra.mxu0 0.0
    %992 = vmatprep.subr.mxu0 0.0
    %993 = vmatpush1.msra.mxu0 0.0
    %994 = vmatprep.subr.mxu0 0.0
    %995 = vmatpush1.msra.mxu0 0.0
    %996 = vmatprep.mubr.f32.mxu0 0.0
    %997 = vmatmul.mubr.f32.gmra.mrb[0].mxu0 %v930
    %v998 = vpop.f32.mrb[0].mxu0
    %v999 = vadd.f32 0.0, %v998
    %v1000 = vpop.f32.mrb[0].mxu0
    %1001 = vdwg.mxu0
    %1003 = vrot.lane.b32.xlu0 %v669, 16
    %v1004 = vpop.permute.xlu0 %1003
    %1007 = vrot.lane.b32.xlu0 %v834, 32
    %v1008 = vpop.permute.xlu0 %1007
    %1011 = vrot.lane.b32.xlu0 %v999, 48
    %v1012 = vpop.permute.xlu0 %1011
    %v1014 = vsel %vm345, %v503, %v1004
    %vm1015 = vcmask 261120
    %v1016 = vsel %vm1015, %v1014, %v1008
    %vm1017 = vcmask 392192
    %v1018 = vsel %vm1017, %v1016, %v1012
    %1020 = vrot.lane.b32.xlu0 %v336, 64
    %v1021 = vpop.permute.xlu0 %1020
    %v1023 = vsel %vm345, %v341, 0
    %v1025 = vsel %vm345, %v1021, 0
    %1027 = vmatprep.subr.mxu0 0.0
    %1028 = vmatpush1.xpose.msra.mxu0 %v1025
    %1029 = vmatprep.subr.mxu0 0.0
    %1030 = vmatpush1.xpose.msra.mxu0 0.0
    %1031 = vmatprep.subr.mxu0 0.0
    %1032 = vmatpush1.xpose.msra.mxu0 0.0
    %1033 = vmatprep.subr.mxu0 0.0
    %1034 = vmatpush1.xpose.msra.mxu0 0.0
    %1035 = vmatprep.subr.mxu0 0.0
    %1036 = vmatpush1.xpose.msra.mxu0 0.0
    %1037 = vmatprep.subr.mxu0 0.0
    %1038 = vmatpush1.xpose.msra.mxu0 0.0
    %1039 = vmatprep.subr.mxu0 0.0
    %1040 = vmatpush1.xpose.msra.mxu0 0.0
    %1041 = vmatprep.subr.mxu0 0.0
    %1042 = vmatpush1.xpose.msra.mxu0 0.0
    %1043 = vmatprep.subr.mxu0 0.0
    %1044 = vmatpush1.xpose.msra.mxu0 0.0
    %1045 = vmatprep.subr.mxu0 0.0
    %1046 = vmatpush1.xpose.msra.mxu0 0.0
    %1047 = vmatprep.subr.mxu0 0.0
    %1048 = vmatpush1.xpose.msra.mxu0 0.0
    %1049 = vmatprep.subr.mxu0 0.0
    %1050 = vmatpush1.xpose.msra.mxu0 0.0
    %1051 = vmatprep.subr.mxu0 0.0
    %1052 = vmatpush1.xpose.msra.mxu0 0.0
    %1053 = vmatprep.subr.mxu0 0.0
    %1054 = vmatpush1.xpose.msra.mxu0 0.0
    %1055 = vmatprep.subr.mxu0 0.0
    %1056 = vmatpush1.xpose.msra.mxu0 0.0
    %1057 = vmatprep.subr.mxu0 0.0
    %1058 = vmatpush1.xpose.msra.mxu0 0.0
    %1059 = vmatprep.subr.mxu0 0.0
    %1060 = vmatpush1.xpose.msra.mxu0 0.0
    %1061 = vmatprep.subr.mxu0 0.0
    %1062 = vmatpush1.xpose.msra.mxu0 0.0
    %1063 = vmatprep.subr.mxu0 0.0
    %1064 = vmatpush1.xpose.msra.mxu0 0.0
    %1065 = vmatprep.subr.mxu0 0.0
    %1066 = vmatpush1.xpose.msra.mxu0 0.0
    %1067 = vmatprep.subr.mxu0 0.0
    %1068 = vmatpush1.xpose.msra.mxu0 0.0
    %1069 = vmatprep.subr.mxu0 0.0
    %1070 = vmatpush1.xpose.msra.mxu0 0.0
    %1071 = vmatprep.subr.mxu0 0.0
    %1072 = vmatpush1.xpose.msra.mxu0 0.0
    %1073 = vmatprep.subr.mxu0 0.0
    %1074 = vmatpush1.xpose.msra.mxu0 0.0
    %1075 = vmatprep.subr.mxu0 0.0
    %1076 = vmatpush1.xpose.msra.mxu0 0.0
    %1077 = vmatprep.subr.mxu0 0.0
    %1078 = vmatpush1.xpose.msra.mxu0 0.0
    %1079 = vmatprep.subr.mxu0 0.0
    %1080 = vmatpush1.xpose.msra.mxu0 0.0
    %1081 = vmatprep.subr.mxu0 0.0
    %1082 = vmatpush1.xpose.msra.mxu0 0.0
    %1083 = vmatprep.subr.mxu0 0.0
    %1084 = vmatpush1.xpose.msra.mxu0 0.0
    %1085 = vmatprep.subr.mxu0 0.0
    %1086 = vmatpush1.xpose.msra.mxu0 0.0
    %1087 = vmatprep.subr.mxu0 0.0
    %1088 = vmatpush1.xpose.msra.mxu0 0.0
    %1089 = vmatprep.subr.mxu0 0.0
    %1090 = vmatpush1.xpose.msra.mxu0 0.0
    %1091 = vmatprep.mubr.f32.mxu0 0.0
    %1092 = vmatmul.mubr.f32.gmra.mrb[0].mxu0 %v1023
    %v1093 = vpop.f32.mrb[0].mxu0
    %v1094 = vadd.f32 0.0, %v1093
    %v1095 = vpop.f32.mrb[0].mxu0
    %1096 = vdwg.mxu0
    %v1097 = vsel %vm421, %v1094, -inf
    %1098 = vmax.xlane.f32.xlu0 %v1097
    %v1099 = vpop.xlane.xlu0 %1098
    %v1100 = vsub.f32 %v1094, %v1099
    %v1101 = vmul.f32 %v1100, 1.442695
    %v1102 = vpow.pop %v1101
    %v1103 = vsel %vm421, %v1102, 0.0
    %1104 = vadd.xlane.f32.xlu0 %v1103
    %v1105 = vpop.xlane.xlu0 %1104
    %v1106 = vrcp.pop %v1105
    %v1107 = vmul.f32 %v1102, %v1106
    %v1109 = vsel %vm421, %v1107, 0
    %1111 = vmatprep.subr.mxu0 0.0
    %1112 = vmatpush1.msra.mxu0 %v338
    %1113 = vmatprep.subr.mxu0 0.0
    %1114 = vmatpush1.msra.mxu0 0.0
    %1115 = vmatprep.subr.mxu0 0.0
    %1116 = vmatpush1.msra.mxu0 0.0
    %1117 = vmatprep.subr.mxu0 0.0
    %1118 = vmatpush1.msra.mxu0 0.0
    %1119 = vmatprep.subr.mxu0 0.0
    %1120 = vmatpush1.msra.mxu0 0.0
    %1121 = vmatprep.subr.mxu0 0.0
    %1122 = vmatpush1.msra.mxu0 0.0
    %1123 = vmatprep.subr.mxu0 0.0
    %1124 = vmatpush1.msra.mxu0 0.0
    %1125 = vmatprep.subr.mxu0 0.0
    %1126 = vmatpush1.msra.mxu0 0.0
    %1127 = vmatprep.subr.mxu0 0.0
    %1128 = vmatpush1.msra.mxu0 0.0
    %1129 = vmatprep.subr.mxu0 0.0
    %1130 = vmatpush1.msra.mxu0 0.0
    %1131 = vmatprep.subr.mxu0 0.0
    %1132 = vmatpush1.msra.mxu0 0.0
    %1133 = vmatprep.subr.mxu0 0.0
    %1134 = vmatpush1.msra.mxu0 0.0
    %1135 = vmatprep.subr.mxu0 0.0
    %1136 = vmatpush1.msra.mxu0 0.0
    %1137 = vmatprep.subr.mxu0 0.0
    %1138 = vmatpush1.msra.mxu0 0.0
    %1139 = vmatprep.subr.mxu0 0.0
    %1140 = vmatpush1.msra.mxu0 0.0
    %1141 = vmatprep.subr.mxu0 0.0
    %1142 = vmatpush1.msra.mxu0 0.0
    %1143 = vmatprep.subr.mxu0 0.0
    %1144 = vmatpush1.msra.mxu0 0.0
    %1145 = vmatprep.subr.mxu0 0.0
    %1146 = vmatpush1.msra.mxu0 0.0
    %1147 = vmatprep.subr.mxu0 0.0
    %1148 = vmatpush1.msra.mxu0 0.0
    %1149 = vmatprep.subr.mxu0 0.0
    %1150 = vmatpush1.msra.mxu0 0.0
    %1151 = vmatprep.subr.mxu0 0.0
    %1152 = vmatpush1.msra.mxu0 0.0
    %1153 = vmatprep.subr.mxu0 0.0
    %1154 = vmatpush1.msra.mxu0 0.0
    %1155 = vmatprep.subr.mxu0 0.0
    %1156 = vmatpush1.msra.mxu0 0.0
    %1157 = vmatprep.subr.mxu0 0.0
    %1158 = vmatpush1.msra.mxu0 0.0
    %1159 = vmatprep.subr.mxu0 0.0
    %1160 = vmatpush1.msra.mxu0 0.0
    %1161 = vmatprep.subr.mxu0 0.0
    %1162 = vmatpush1.msra.mxu0 0.0
    %1163 = vmatprep.subr.mxu0 0.0
    %1164 = vmatpush1.msra.mxu0 0.0
    %1165 = vmatprep.subr.mxu0 0.0
    %1166 = vmatpush1.msra.mxu0 0.0
    %1167 = vmatprep.subr.mxu0 0.0
    %1168 = vmatpush1.msra.mxu0 0.0
    %1169 = vmatprep.subr.mxu0 0.0
    %1170 = vmatpush1.msra.mxu0 0.0
    %1171 = vmatprep.subr.mxu0 0.0
    %1172 = vmatpush1.msra.mxu0 0.0
    %1173 = vmatprep.subr.mxu0 0.0
    %1174 = vmatpush1.msra.mxu0 0.0
    %1175 = vmatprep.mubr.f32.mxu0 0.0
    %1176 = vmatmul.mubr.f32.gmra.mrb[0].mxu0 %v1109
    %v1177 = vpop.f32.mrb[0].mxu0
    %v1178 = vadd.f32 0.0, %v1177
    %v1179 = vpop.f32.mrb[0].mxu0
    %1180 = vdwg.mxu0
    %1181 = vrot.lane.b32.xlu0 %v341, 112
    %v1182 = vpop.permute.xlu0 %1181
    %1183 = vrot.lane.b32.xlu0 %v336, 48
    %v1184 = vpop.permute.xlu0 %1183
    %v1185 = vsel %vm345, %v1182, 0
    %v1187 = vsel %vm345, %v1184, 0
    %1189 = vmatprep.subr.mxu0 0.0
    %1190 = vmatpush1.xpose.msra.mxu0 %v1187
    %1191 = vmatprep.subr.mxu0 0.0
    %1192 = vmatpush1.xpose.msra.mxu0 0.0
    %1193 = vmatprep.subr.mxu0 0.0
    %1194 = vmatpush1.xpose.msra.mxu0 0.0
    %1195 = vmatprep.subr.mxu0 0.0
    %1196 = vmatpush1.xpose.msra.mxu0 0.0
    %1197 = vmatprep.subr.mxu0 0.0
    %1198 = vmatpush1.xpose.msra.mxu0 0.0
    %1199 = vmatprep.subr.mxu0 0.0
    %1200 = vmatpush1.xpose.msra.mxu0 0.0
    %1201 = vmatprep.subr.mxu0 0.0
    %1202 = vmatpush1.xpose.msra.mxu0 0.0
    %1203 = vmatprep.subr.mxu0 0.0
    %1204 = vmatpush1.xpose.msra.mxu0 0.0
    %1205 = vmatprep.subr.mxu0 0.0
    %1206 = vmatpush1.xpose.msra.mxu0 0.0
    %1207 = vmatprep.subr.mxu0 0.0
    %1208 = vmatpush1.xpose.msra.mxu0 0.0
    %1209 = vmatprep.subr.mxu0 0.0
    %1210 = vmatpush1.xpose.msra.mxu0 0.0
    %1211 = vmatprep.subr.mxu0 0.0
    %1212 = vmatpush1.xpose.msra.mxu0 0.0
    %1213 = vmatprep.subr.mxu0 0.0
    %1214 = vmatpush1.xpose.msra.mxu0 0.0
    %1215 = vmatprep.subr.mxu0 0.0
    %1216 = vmatpush1.xpose.msra.mxu0 0.0
    %1217 = vmatprep.subr.mxu0 0.0
    %1218 = vmatpush1.xpose.msra.mxu0 0.0
    %1219 = vmatprep.subr.mxu0 0.0
    %1220 = vmatpush1.xpose.msra.mxu0 0.0
    %1221 = vmatprep.subr.mxu0 0.0
    %1222 = vmatpush1.xpose.msra.mxu0 0.0
    %1223 = vmatprep.subr.mxu0 0.0
    %1224 = vmatpush1.xpose.msra.mxu0 0.0
    %1225 = vmatprep.subr.mxu0 0.0
    %1226 = vmatpush1.xpose.msra.mxu0 0.0
    %1227 = vmatprep.subr.mxu0 0.0
    %1228 = vmatpush1.xpose.msra.mxu0 0.0
    %1229 = vmatprep.subr.mxu0 0.0
    %1230 = vmatpush1.xpose.msra.mxu0 0.0
    %1231 = vmatprep.subr.mxu0 0.0
    %1232 = vmatpush1.xpose.msra.mxu0 0.0
    %1233 = vmatprep.subr.mxu0 0.0
    %1234 = vmatpush1.xpose.msra.mxu0 0.0
    %1235 = vmatprep.subr.mxu0 0.0
    %1236 = vmatpush1.xpose.msra.mxu0 0.0
    %1237 = vmatprep.subr.mxu0 0.0
    %1238 = vmatpush1.xpose.msra.mxu0 0.0
    %1239 = vmatprep.subr.mxu0 0.0
    %1240 = vmatpush1.xpose.msra.mxu0 0.0
    %1241 = vmatprep.subr.mxu0 0.0
    %1242 = vmatpush1.xpose.msra.mxu0 0.0
    %1243 = vmatprep.subr.mxu0 0.0
    %1244 = vmatpush1.xpose.msra.mxu0 0.0
    %1245 = vmatprep.subr.mxu0 0.0
    %1246 = vmatpush1.xpose.msra.mxu0 0.0
    %1247 = vmatprep.subr.mxu0 0.0
    %1248 = vmatpush1.xpose.msra.mxu0 0.0
    %1249 = vmatprep.subr.mxu0 0.0
    %1250 = vmatpush1.xpose.msra.mxu0 0.0
    %1251 = vmatprep.subr.mxu0 0.0
    %1252 = vmatpush1.xpose.msra.mxu0 0.0
    %1253 = vmatprep.mubr.f32.mxu0 0.0
    %1254 = vmatmul.mubr.f32.gmra.mrb[0].mxu0 %v1185
    %v1255 = vpop.f32.mrb[0].mxu0
    %v1256 = vadd.f32 0.0, %v1255
    %v1257 = vpop.f32.mrb[0].mxu0
    %1258 = vdwg.mxu0
    %v1259 = vsel %vm421, %v1256, -inf
    %1260 = vmax.xlane.f32.xlu0 %v1259
    %v1261 = vpop.xlane.xlu0 %1260
    %v1262 = vsub.f32 %v1256, %v1261
    %v1263 = vmul.f32 %v1262, 1.442695
    %v1264 = vpow.pop %v1263
    %v1265 = vsel %vm421, %v1264, 0.0
    %1266 = vadd.xlane.f32.xlu0 %v1265
    %v1267 = vpop.xlane.xlu0 %1266
    %v1268 = vrcp.pop %v1267
    %v1269 = vmul.f32 %v1264, %v1268
    %1271 = vrot.lane.b32.xlu0 %v338, 112
    %v1272 = vpop.permute.xlu0 %1271
    %v1275 = vsel %vm421, %v1269, 0
    %1277 = vmatprep.subr.mxu0 0.0
    %1278 = vmatpush1.msra.mxu0 %v1272
    %1279 = vmatprep.subr.mxu0 0.0
    %1280 = vmatpush1.msra.mxu0 0.0
    %1281 = vmatprep.subr.mxu0 0.0
    %1282 = vmatpush1.msra.mxu0 0.0
    %1283 = vmatprep.subr.mxu0 0.0
    %1284 = vmatpush1.msra.mxu0 0.0
    %1285 = vmatprep.subr.mxu0 0.0
    %1286 = vmatpush1.msra.mxu0 0.0
    %1287 = vmatprep.subr.mxu0 0.0
    %1288 = vmatpush1.msra.mxu0 0.0
    %1289 = vmatprep.subr.mxu0 0.0
    %1290 = vmatpush1.msra.mxu0 0.0
    %1291 = vmatprep.subr.mxu0 0.0
    %1292 = vmatpush1.msra.mxu0 0.0
    %1293 = vmatprep.subr.mxu0 0.0
    %1294 = vmatpush1.msra.mxu0 0.0
    %1295 = vmatprep.subr.mxu0 0.0
    %1296 = vmatpush1.msra.mxu0 0.0
    %1297 = vmatprep.subr.mxu0 0.0
    %1298 = vmatpush1.msra.mxu0 0.0
    %1299 = vmatprep.subr.mxu0 0.0
    %1300 = vmatpush1.msra.mxu0 0.0
    %1301 = vmatprep.subr.mxu0 0.0
    %1302 = vmatpush1.msra.mxu0 0.0
    %1303 = vmatprep.subr.mxu0 0.0
    %1304 = vmatpush1.msra.mxu0 0.0
    %1305 = vmatprep.subr.mxu0 0.0
    %1306 = vmatpush1.msra.mxu0 0.0
    %1307 = vmatprep.subr.mxu0 0.0
    %1308 = vmatpush1.msra.mxu0 0.0
    %1309 = vmatprep.subr.mxu0 0.0
    %1310 = vmatpush1.msra.mxu0 0.0
    %1311 = vmatprep.subr.mxu0 0.0
    %1312 = vmatpush1.msra.mxu0 0.0
    %1313 = vmatprep.subr.mxu0 0.0
    %1314 = vmatpush1.msra.mxu0 0.0
    %1315 = vmatprep.subr.mxu0 0.0
    %1316 = vmatpush1.msra.mxu0 0.0
    %1317 = vmatprep.subr.mxu0 0.0
    %1318 = vmatpush1.msra.mxu0 0.0
    %1319 = vmatprep.subr.mxu0 0.0
    %1320 = vmatpush1.msra.mxu0 0.0
    %1321 = vmatprep.subr.mxu0 0.0
    %1322 = vmatpush1.msra.mxu0 0.0
    %1323 = vmatprep.subr.mxu0 0.0
    %1324 = vmatpush1.msra.mxu0 0.0
    %1325 = vmatprep.subr.mxu0 0.0
    %1326 = vmatpush1.msra.mxu0 0.0
    %1327 = vmatprep.subr.mxu0 0.0
    %1328 = vmatpush1.msra.mxu0 0.0
    %1329 = vmatprep.subr.mxu0 0.0
    %1330 = vmatpush1.msra.mxu0 0.0
    %1331 = vmatprep.subr.mxu0 0.0
    %1332 = vmatpush1.msra.mxu0 0.0
    %1333 = vmatprep.subr.mxu0 0.0
    %1334 = vmatpush1.msra.mxu0 0.0
    %1335 = vmatprep.subr.mxu0 0.0
    %1336 = vmatpush1.msra.mxu0 0.0
    %1337 = vmatprep.subr.mxu0 0.0
    %1338 = vmatpush1.msra.mxu0 0.0
    %1339 = vmatprep.subr.mxu0 0.0
    %1340 = vmatpush1.msra.mxu0 0.0
    %1341 = vmatprep.mubr.f32.mxu0 0.0
    %1342 = vmatmul.mubr.f32.gmra.mrb[0].mxu0 %v1275
    %v1343 = vpop.f32.mrb[0].mxu0
    %v1344 = vadd.f32 0.0, %v1343
    %v1345 = vpop.f32.mrb[0].mxu0
    %1346 = vdwg.mxu0
    %1347 = vrot.lane.b32.xlu0 %v341, 96
    %v1348 = vpop.permute.xlu0 %1347
    %1349 = vrot.lane.b32.xlu0 %v336, 32
    %v1350 = vpop.permute.xlu0 %1349
    %v1351 = vsel %vm345, %v1348, 0
    %v1353 = vsel %vm345, %v1350, 0
    %1355 = vmatprep.subr.mxu0 0.0
    %1356 = vmatpush1.xpose.msra.mxu0 %v1353
    %1357 = vmatprep.subr.mxu0 0.0
    %1358 = vmatpush1.xpose.msra.mxu0 0.0
    %1359 = vmatprep.subr.mxu0 0.0
    %1360 = vmatpush1.xpose.msra.mxu0 0.0
    %1361 = vmatprep.subr.mxu0 0.0
    %1362 = vmatpush1.xpose.msra.mxu0 0.0
    %1363 = vmatprep.subr.mxu0 0.0
    %1364 = vmatpush1.xpose.msra.mxu0 0.0
    %1365 = vmatprep.subr.mxu0 0.0
    %1366 = vmatpush1.xpose.msra.mxu0 0.0
    %1367 = vmatprep.subr.mxu0 0.0
    %1368 = vmatpush1.xpose.msra.mxu0 0.0
    %1369 = vmatprep.subr.mxu0 0.0
    %1370 = vmatpush1.xpose.msra.mxu0 0.0
    %1371 = vmatprep.subr.mxu0 0.0
    %1372 = vmatpush1.xpose.msra.mxu0 0.0
    %1373 = vmatprep.subr.mxu0 0.0
    %1374 = vmatpush1.xpose.msra.mxu0 0.0
    %1375 = vmatprep.subr.mxu0 0.0
    %1376 = vmatpush1.xpose.msra.mxu0 0.0
    %1377 = vmatprep.subr.mxu0 0.0
    %1378 = vmatpush1.xpose.msra.mxu0 0.0
    %1379 = vmatprep.subr.mxu0 0.0
    %1380 = vmatpush1.xpose.msra.mxu0 0.0
    %1381 = vmatprep.subr.mxu0 0.0
    %1382 = vmatpush1.xpose.msra.mxu0 0.0
    %1383 = vmatprep.subr.mxu0 0.0
    %1384 = vmatpush1.xpose.msra.mxu0 0.0
    %1385 = vmatprep.subr.mxu0 0.0
    %1386 = vmatpush1.xpose.msra.mxu0 0.0
    %1387 = vmatprep.subr.mxu0 0.0
    %1388 = vmatpush1.xpose.msra.mxu0 0.0
    %1389 = vmatprep.subr.mxu0 0.0
    %1390 = vmatpush1.xpose.msra.mxu0 0.0
    %1391 = vmatprep.subr.mxu0 0.0
    %1392 = vmatpush1.xpose.msra.mxu0 0.0
    %1393 = vmatprep.subr.mxu0 0.0
    %1394 = vmatpush1.xpose.msra.mxu0 0.0
    %1395 = vmatprep.subr.mxu0 0.0
    %1396 = vmatpush1.xpose.msra.mxu0 0.0
    %1397 = vmatprep.subr.mxu0 0.0
    %1398 = vmatpush1.xpose.msra.mxu0 0.0
    %1399 = vmatprep.subr.mxu0 0.0
    %1400 = vmatpush1.xpose.msra.mxu0 0.0
    %1401 = vmatprep.subr.mxu0 0.0
    %1402 = vmatpush1.xpose.msra.mxu0 0.0
    %1403 = vmatprep.subr.mxu0 0.0
    %1404 = vmatpush1.xpose.msra.mxu0 0.0
    %1405 = vmatprep.subr.mxu0 0.0
    %1406 = vmatpush1.xpose.msra.mxu0 0.0
    %1407 = vmatprep.subr.mxu0 0.0
    %1408 = vmatpush1.xpose.msra.mxu0 0.0
    %1409 = vmatprep.subr.mxu0 0.0
    %1410 = vmatpush1.xpose.msra.mxu0 0.0
    %1411 = vmatprep.subr.mxu0 0.0
    %1412 = vmatpush1.xpose.msra.mxu0 0.0
    %1413 = vmatprep.subr.mxu0 0.0
    %1414 = vmatpush1.xpose.msra.mxu0 0.0
    %1415 = vmatprep.subr.mxu0 0.0
    %1416 = vmatpush1.xpose.msra.mxu0 0.0
    %1417 = vmatprep.subr.mxu0 0.0
    %1418 = vmatpush1.xpose.msra.mxu0 0.0
    %1419 = vmatprep.mubr.f32.mxu0 0.0
    %1420 = vmatmul.mubr.f32.gmra.mrb[0].mxu0 %v1351
    %v1421 = vpop.f32.mrb[0].mxu0
    %v1422 = vadd.f32 0.0, %v1421
    %v1423 = vpop.f32.mrb[0].mxu0
    %1424 = vdwg.mxu0
    %v1425 = vsel %vm421, %v1422, -inf
    %1426 = vmax.xlane.f32.xlu0 %v1425
    %v1427 = vpop.xlane.xlu0 %1426
    %v1428 = vsub.f32 %v1422, %v1427
    %v1429 = vmul.f32 %v1428, 1.442695
    %v1430 = vpow.pop %v1429
    %v1431 = vsel %vm421, %v1430, 0.0
    %1432 = vadd.xlane.f32.xlu0 %v1431
    %v1433 = vpop.xlane.xlu0 %1432
    %v1434 = vrcp.pop %v1433
    %v1435 = vmul.f32 %v1430, %v1434
    %1436 = vrot.lane.b32.xlu0 %v338, 96
    %v1437 = vpop.permute.xlu0 %1436
    %v1440 = vsel %vm421, %v1435, 0
    %1442 = vmatprep.subr.mxu0 0.0
    %1443 = vmatpush1.msra.mxu0 %v1437
    %1444 = vmatprep.subr.mxu0 0.0
    %1445 = vmatpush1.msra.mxu0 0.0
    %1446 = vmatprep.subr.mxu0 0.0
    %1447 = vmatpush1.msra.mxu0 0.0
    %1448 = vmatprep.subr.mxu0 0.0
    %1449 = vmatpush1.msra.mxu0 0.0
    %1450 = vmatprep.subr.mxu0 0.0
    %1451 = vmatpush1.msra.mxu0 0.0
    %1452 = vmatprep.subr.mxu0 0.0
    %1453 = vmatpush1.msra.mxu0 0.0
    %1454 = vmatprep.subr.mxu0 0.0
    %1455 = vmatpush1.msra.mxu0 0.0
    %1456 = vmatprep.subr.mxu0 0.0
    %1457 = vmatpush1.msra.mxu0 0.0
    %1458 = vmatprep.subr.mxu0 0.0
    %1459 = vmatpush1.msra.mxu0 0.0
    %1460 = vmatprep.subr.mxu0 0.0
    %1461 = vmatpush1.msra.mxu0 0.0
    %1462 = vmatprep.subr.mxu0 0.0
    %1463 = vmatpush1.msra.mxu0 0.0
    %1464 = vmatprep.subr.mxu0 0.0
    %1465 = vmatpush1.msra.mxu0 0.0
    %1466 = vmatprep.subr.mxu0 0.0
    %1467 = vmatpush1.msra.mxu0 0.0
    %1468 = vmatprep.subr.mxu0 0.0
    %1469 = vmatpush1.msra.mxu0 0.0
    %1470 = vmatprep.subr.mxu0 0.0
    %1471 = vmatpush1.msra.mxu0 0.0
    %1472 = vmatprep.subr.mxu0 0.0
    %1473 = vmatpush1.msra.mxu0 0.0
    %1474 = vmatprep.subr.mxu0 0.0
    %1475 = vmatpush1.msra.mxu0 0.0
    %1476 = vmatprep.subr.mxu0 0.0
    %1477 = vmatpush1.msra.mxu0 0.0
    %1478 = vmatprep.subr.mxu0 0.0
    %1479 = vmatpush1.msra.mxu0 0.0
    %1480 = vmatprep.subr.mxu0 0.0
    %1481 = vmatpush1.msra.mxu0 0.0
    %1482 = vmatprep.subr.mxu0 0.0
    %1483 = vmatpush1.msra.mxu0 0.0
    %1484 = vmatprep.subr.mxu0 0.0
    %1485 = vmatpush1.msra.mxu0 0.0
    %1486 = vmatprep.subr.mxu0 0.0
    %1487 = vmatpush1.msra.mxu0 0.0
    %1488 = vmatprep.subr.mxu0 0.0
    %1489 = vmatpush1.msra.mxu0 0.0
    %1490 = vmatprep.subr.mxu0 0.0
    %1491 = vmatpush1.msra.mxu0 0.0
    %1492 = vmatprep.subr.mxu0 0.0
    %1493 = vmatpush1.msra.mxu0 0.0
    %1494 = vmatprep.subr.mxu0 0.0
    %1495 = vmatpush1.msra.mxu0 0.0
    %1496 = vmatprep.subr.mxu0 0.0
    %1497 = vmatpush1.msra.mxu0 0.0
    %1498 = vmatprep.subr.mxu0 0.0
    %1499 = vmatpush1.msra.mxu0 0.0
    %1500 = vmatprep.subr.mxu0 0.0
    %1501 = vmatpush1.msra.mxu0 0.0
    %1502 = vmatprep.subr.mxu0 0.0
    %1503 = vmatpush1.msra.mxu0 0.0
    %1504 = vmatprep.subr.mxu0 0.0
    %1505 = vmatpush1.msra.mxu0 0.0
    %1506 = vmatprep.mubr.f32.mxu0 0.0
    %1507 = vmatmul.mubr.f32.gmra.mrb[0].mxu0 %v1440
    %v1508 = vpop.f32.mrb[0].mxu0
    %v1509 = vadd.f32 0.0, %v1508
    %v1510 = vpop.f32.mrb[0].mxu0
    %1511 = vdwg.mxu0
    %1512 = vrot.lane.b32.xlu0 %v341, 80
    %v1513 = vpop.permute.xlu0 %1512
    %1514 = vrot.lane.b32.xlu0 %v336, 16
    %v1515 = vpop.permute.xlu0 %1514
    %v1516 = vsel %vm345, %v1513, 0
    %v1518 = vsel %vm345, %v1515, 0
    %1520 = vmatprep.subr.mxu0 0.0
    %1521 = vmatpush1.xpose.msra.mxu0 %v1518
    %1522 = vmatprep.subr.mxu0 0.0
    %1523 = vmatpush1.xpose.msra.mxu0 0.0
    %1524 = vmatprep.subr.mxu0 0.0
    %1525 = vmatpush1.xpose.msra.mxu0 0.0
    %1526 = vmatprep.subr.mxu0 0.0
    %1527 = vmatpush1.xpose.msra.mxu0 0.0
    %1528 = vmatprep.subr.mxu0 0.0
    %1529 = vmatpush1.xpose.msra.mxu0 0.0
    %1530 = vmatprep.subr.mxu0 0.0
    %1531 = vmatpush1.xpose.msra.mxu0 0.0
    %1532 = vmatprep.subr.mxu0 0.0
    %1533 = vmatpush1.xpose.msra.mxu0 0.0
    %1534 = vmatprep.subr.mxu0 0.0
    %1535 = vmatpush1.xpose.msra.mxu0 0.0
    %1536 = vmatprep.subr.mxu0 0.0
    %1537 = vmatpush1.xpose.msra.mxu0 0.0
    %1538 = vmatprep.subr.mxu0 0.0
    %1539 = vmatpush1.xpose.msra.mxu0 0.0
    %1540 = vmatprep.subr.mxu0 0.0
    %1541 = vmatpush1.xpose.msra.mxu0 0.0
    %1542 = vmatprep.subr.mxu0 0.0
    %1543 = vmatpush1.xpose.msra.mxu0 0.0
    %1544 = vmatprep.subr.mxu0 0.0
    %1545 = vmatpush1.xpose.msra.mxu0 0.0
    %1546 = vmatprep.subr.mxu0 0.0
    %1547 = vmatpush1.xpose.msra.mxu0 0.0
    %1548 = vmatprep.subr.mxu0 0.0
    %1549 = vmatpush1.xpose.msra.mxu0 0.0
    %1550 = vmatprep.subr.mxu0 0.0
    %1551 = vmatpush1.xpose.msra.mxu0 0.0
    %1552 = vmatprep.subr.mxu0 0.0
    %1553 = vmatpush1.xpose.msra.mxu0 0.0
    %1554 = vmatprep.subr.mxu0 0.0
    %1555 = vmatpush1.xpose.msra.mxu0 0.0
    %1556 = vmatprep.subr.mxu0 0.0
    %1557 = vmatpush1.xpose.msra.mxu0 0.0
    %1558 = vmatprep.subr.mxu0 0.0
    %1559 = vmatpush1.xpose.msra.mxu0 0.0
    %1560 = vmatprep.subr.mxu0 0.0
    %1561 = vmatpush1.xpose.msra.mxu0 0.0
    %1562 = vmatprep.subr.mxu0 0.0
    %1563 = vmatpush1.xpose.msra.mxu0 0.0
    %1564 = vmatprep.subr.mxu0 0.0
    %1565 = vmatpush1.xpose.msra.mxu0 0.0
    %1566 = vmatprep.subr.mxu0 0.0
    %1567 = vmatpush1.xpose.msra.mxu0 0.0
    %1568 = vmatprep.subr.mxu0 0.0
    %1569 = vmatpush1.xpose.msra.mxu0 0.0
    %1570 = vmatprep.subr.mxu0 0.0
    %1571 = vmatpush1.xpose.msra.mxu0 0.0
    %1572 = vmatprep.subr.mxu0 0.0
    %1573 = vmatpush1.xpose.msra.mxu0 0.0
    %1574 = vmatprep.subr.mxu0 0.0
    %1575 = vmatpush1.xpose.msra.mxu0 0.0
    %1576 = vmatprep.subr.mxu0 0.0
    %1577 = vmatpush1.xpose.msra.mxu0 0.0
    %1578 = vmatprep.subr.mxu0 0.0
    %1579 = vmatpush1.xpose.msra.mxu0 0.0
    %1580 = vmatprep.subr.mxu0 0.0
    %1581 = vmatpush1.xpose.msra.mxu0 0.0
    %1582 = vmatprep.subr.mxu0 0.0
    %1583 = vmatpush1.xpose.msra.mxu0 0.0
    %1584 = vmatprep.mubr.f32.mxu0 0.0
    %1585 = vmatmul.mubr.f32.gmra.mrb[0].mxu0 %v1516
    %v1586 = vpop.f32.mrb[0].mxu0
    %v1587 = vadd.f32 0.0, %v1586
    %v1588 = vpop.f32.mrb[0].mxu0
    %1589 = vdwg.mxu0
    %v1590 = vsel %vm421, %v1587, -inf
    %1591 = vmax.xlane.f32.xlu0 %v1590
    %v1592 = vpop.xlane.xlu0 %1591
    %v1593 = vsub.f32 %v1587, %v1592
    %v1594 = vmul.f32 %v1593, 1.442695
    %v1595 = vpow.pop %v1594
    %v1596 = vsel %vm421, %v1595, 0.0
    %1597 = vadd.xlane.f32.xlu0 %v1596
    %v1598 = vpop.xlane.xlu0 %1597
    %v1599 = vrcp.pop %v1598
    %v1600 = vmul.f32 %v1595, %v1599
    %1601 = vrot.lane.b32.xlu0 %v338, 80
    %v1602 = vpop.permute.xlu0 %1601
    %v1605 = vsel %vm421, %v1600, 0
    %1607 = vmatprep.subr.mxu0 0.0
    %1608 = vmatpush1.msra.mxu0 %v1602
    %1609 = vmatprep.subr.mxu0 0.0
    %1610 = vmatpush1.msra.mxu0 0.0
    %1611 = vmatprep.subr.mxu0 0.0
    %1612 = vmatpush1.msra.mxu0 0.0
    %1613 = vmatprep.subr.mxu0 0.0
    %1614 = vmatpush1.msra.mxu0 0.0
    %1615 = vmatprep.subr.mxu0 0.0
    %1616 = vmatpush1.msra.mxu0 0.0
    %1617 = vmatprep.subr.mxu0 0.0
    %1618 = vmatpush1.msra.mxu0 0.0
    %1619 = vmatprep.subr.mxu0 0.0
    %1620 = vmatpush1.msra.mxu0 0.0
    %1621 = vmatprep.subr.mxu0 0.0
    %1622 = vmatpush1.msra.mxu0 0.0
    %1623 = vmatprep.subr.mxu0 0.0
    %1624 = vmatpush1.msra.mxu0 0.0
    %1625 = vmatprep.subr.mxu0 0.0
    %1626 = vmatpush1.msra.mxu0 0.0
    %1627 = vmatprep.subr.mxu0 0.0
    %1628 = vmatpush1.msra.mxu0 0.0
    %1629 = vmatprep.subr.mxu0 0.0
    %1630 = vmatpush1.msra.mxu0 0.0
    %1631 = vmatprep.subr.mxu0 0.0
    %1632 = vmatpush1.msra.mxu0 0.0
    %1633 = vmatprep.subr.mxu0 0.0
    %1634 = vmatpush1.msra.mxu0 0.0
    %1635 = vmatprep.subr.mxu0 0.0
    %1636 = vmatpush1.msra.mxu0 0.0
    %1637 = vmatprep.subr.mxu0 0.0
    %1638 = vmatpush1.msra.mxu0 0.0
    %1639 = vmatprep.subr.mxu0 0.0
    %1640 = vmatpush1.msra.mxu0 0.0
    %1641 = vmatprep.subr.mxu0 0.0
    %1642 = vmatpush1.msra.mxu0 0.0
    %1643 = vmatprep.subr.mxu0 0.0
    %1644 = vmatpush1.msra.mxu0 0.0
    %1645 = vmatprep.subr.mxu0 0.0
    %1646 = vmatpush1.msra.mxu0 0.0
    %1647 = vmatprep.subr.mxu0 0.0
    %1648 = vmatpush1.msra.mxu0 0.0
    %1649 = vmatprep.subr.mxu0 0.0
    %1650 = vmatpush1.msra.mxu0 0.0
    %1651 = vmatprep.subr.mxu0 0.0
    %1652 = vmatpush1.msra.mxu0 0.0
    %1653 = vmatprep.subr.mxu0 0.0
    %1654 = vmatpush1.msra.mxu0 0.0
    %1655 = vmatprep.subr.mxu0 0.0
    %1656 = vmatpush1.msra.mxu0 0.0
    %1657 = vmatprep.subr.mxu0 0.0
    %1658 = vmatpush1.msra.mxu0 0.0
    %1659 = vmatprep.subr.mxu0 0.0
    %1660 = vmatpush1.msra.mxu0 0.0
    %1661 = vmatprep.subr.mxu0 0.0
    %1662 = vmatpush1.msra.mxu0 0.0
    %1663 = vmatprep.subr.mxu0 0.0
    %1664 = vmatpush1.msra.mxu0 0.0
    %1665 = vmatprep.subr.mxu0 0.0
    %1666 = vmatpush1.msra.mxu0 0.0
    %1667 = vmatprep.subr.mxu0 0.0
    %1668 = vmatpush1.msra.mxu0 0.0
    %1669 = vmatprep.subr.mxu0 0.0
    %1670 = vmatpush1.msra.mxu0 0.0
    %1671 = vmatprep.mubr.f32.mxu0 0.0
    %1672 = vmatmul.mubr.f32.gmra.mrb[0].mxu0 %v1605
    %v1673 = vpop.f32.mrb[0].mxu0
    %v1674 = vadd.f32 0.0, %v1673
    %v1675 = vpop.f32.mrb[0].mxu0
    %1676 = vdwg.mxu0
    %1678 = vrot.lane.b32.xlu0 %v1344, 16
    %v1679 = vpop.permute.xlu0 %1678
    %1682 = vrot.lane.b32.xlu0 %v1509, 32
    %v1683 = vpop.permute.xlu0 %1682
    %1686 = vrot.lane.b32.xlu0 %v1674, 48
    %v1687 = vpop.permute.xlu0 %1686
    %v1689 = vsel %vm345, %v1178, %v1679
    %v1690 = vsel %vm1015, %v1689, %v1683
    %v1691 = vsel %vm1017, %v1690, %v1687
    %v1693 = vlaneseq
    %v1694 = vshrl.u32 %v1693, 7
    %v1695 = vsub.s32 0, %v1694
    %v1696 = vrot.slane %v190, %v1695
    %v1699 = vsel %vm256, %v1018, 0
    %v1702 = vsel %vm256, %v1691, 0
    %1704 = vmatprep.subr.mxu0 0.0
    %1705 = vmatpush1.msra.mxu0 %v182
    %1706 = vmatprep.subr.mxu0 0.0
    %1707 = vmatpush1.msra.mxu0 %v183
    %1708 = vmatprep.subr.mxu0 0.0
    %1709 = vmatpush1.msra.mxu0 %v184
    %1710 = vmatprep.subr.mxu0 0.0
    %1711 = vmatpush1.msra.mxu0 %v185
    %1712 = vmatprep.subr.mxu0 0.0
    %1713 = vmatpush1.msra.mxu0 %v186
    %1714 = vmatprep.subr.mxu0 0.0
    %1715 = vmatpush1.msra.mxu0 %v187
    %1716 = vmatprep.subr.mxu0 0.0
    %1717 = vmatpush1.msra.mxu0 %v188
    %1718 = vmatprep.subr.mxu0 0.0
    %1719 = vmatpush1.msra.mxu0 %v189
    %1720 = vmatprep.subr.mxu0 0.0
    %1721 = vmatpush1.msra.mxu0 0.0
    %1722 = vmatprep.subr.mxu0 0.0
    %1723 = vmatpush1.msra.mxu0 0.0
    %1724 = vmatprep.subr.mxu0 0.0
    %1725 = vmatpush1.msra.mxu0 0.0
    %1726 = vmatprep.subr.mxu0 0.0
    %1727 = vmatpush1.msra.mxu0 0.0
    %1728 = vmatprep.subr.mxu0 0.0
    %1729 = vmatpush1.msra.mxu0 0.0
    %1730 = vmatprep.subr.mxu0 0.0
    %1731 = vmatpush1.msra.mxu0 0.0
    %1732 = vmatprep.subr.mxu0 0.0
    %1733 = vmatpush1.msra.mxu0 0.0
    %1734 = vmatprep.subr.mxu0 0.0
    %1735 = vmatpush1.msra.mxu0 0.0
    %1736 = vmatprep.subr.mxu0 0.0
    %1737 = vmatpush1.msra.mxu0 0.0
    %1738 = vmatprep.subr.mxu0 0.0
    %1739 = vmatpush1.msra.mxu0 0.0
    %1740 = vmatprep.subr.mxu0 0.0
    %1741 = vmatpush1.msra.mxu0 0.0
    %1742 = vmatprep.subr.mxu0 0.0
    %1743 = vmatpush1.msra.mxu0 0.0
    %1744 = vmatprep.subr.mxu0 0.0
    %1745 = vmatpush1.msra.mxu0 0.0
    %1746 = vmatprep.subr.mxu0 0.0
    %1747 = vmatpush1.msra.mxu0 0.0
    %1748 = vmatprep.subr.mxu0 0.0
    %1749 = vmatpush1.msra.mxu0 0.0
    %1750 = vmatprep.subr.mxu0 0.0
    %1751 = vmatpush1.msra.mxu0 0.0
    %1752 = vmatprep.subr.mxu0 0.0
    %1753 = vmatpush1.msra.mxu0 0.0
    %1754 = vmatprep.subr.mxu0 0.0
    %1755 = vmatpush1.msra.mxu0 0.0
    %1756 = vmatprep.subr.mxu0 0.0
    %1757 = vmatpush1.msra.mxu0 0.0
    %1758 = vmatprep.subr.mxu0 0.0
    %1759 = vmatpush1.msra.mxu0 0.0
    %1760 = vmatprep.subr.mxu0 0.0
    %1761 = vmatpush1.msra.mxu0 0.0
    %1762 = vmatprep.subr.mxu0 0.0
    %1763 = vmatpush1.msra.mxu0 0.0
    %1764 = vmatprep.subr.mxu0 0.0
    %1765 = vmatpush1.msra.mxu0 0.0
    %1766 = vmatprep.subr.mxu0 0.0
    %1767 = vmatpush1.msra.mxu0 0.0
    %1768 = vmatprep.mubr.f32.mxu0 0.0
    %1769 = vmatmul.mubr.f32.gmra.mrb[0].mxu0 %v1699
    %v1770 = vpop.f32.mrb[0].mxu0
    %v1771 = vadd.f32 %v1696, %v1770
    %v1772 = vpop.f32.mrb[0].mxu0
    %1773 = vmatprep.mubr.f32.mxu0 0.0
    %1774 = vmatmul.mubr.f32.gmra.mrb[0].mxu0 %v1702
    %v1775 = vpop.f32.mrb[0].mxu0
    %v1776 = vadd.f32 %v1696, %v1775
    %v1777 = vpop.f32.mrb[0].mxu0
    %1778 = vdwg.mxu0
    %v1779 = vadd.f32 %v157, %v1771
    %v1780 = vadd.f32 %v162, %v1776
    %v1781 = vsel %vm256, %v1779, 0.0
    %1782 = vadd.xlane.f32.xlu0 %v1781
    %v1783 = vpop.xlane.xlu0 %1782
    %v1784 = vsel %vm256, %v1780, 0.0
    %1785 = vadd.xlane.f32.xlu0 %v1784
    %v1786 = vpop.xlane.xlu0 %1785
    %v1787 = vrcp.pop 64.0
    %v1788 = vmul.f32 %v1783, %v1787
    %v1789 = vmul.f32 %v1786, %v1787
    %v1790 = vsub.f32 %v1779, %v1788
    %v1791 = vsub.f32 %v1780, %v1789
    %v1792 = vmul.f32 %v1790, %v1790
    %v1793 = vmul.f32 %v1791, %v1791
    %v1794 = vsel %vm256, %v1792, 0.0
    %1795 = vadd.xlane.f32.xlu0 %v1794
    %v1796 = vpop.xlane.xlu0 %1795
    %v1797 = vsel %vm256, %v1793, 0.0
    %1798 = vadd.xlane.f32.xlu0 %v1797
    %v1799 = vpop.xlane.xlu0 %1798
    %v1800 = vmul.f32 %v1796, %v1787
    %v1801 = vmul.f32 %v1799, %v1787
    %v1802 = vadd.f32 %v1800, 1e-05
    %v1803 = vadd.f32 %v1801, 1e-05
    %v1804 = vrsqrt.pop %v1802
    %v1805 = vrsqrt.pop %v1803
    %v1806 = vmul.f32 %v1790, %v1804
    %v1807 = vmul.f32 %v1791, %v1805
    %v1809 = vlaneseq
    %v1810 = vshrl.u32 %v1809, 7
    %v1811 = vsub.s32 0, %v1810
    %v1812 = vrot.slane %v191, %v1811
    %v1814 = vmul.f32 %v1806, %v1812
    %v1815 = vmul.f32 %v1807, %v1812
    %v1817 = vlaneseq
    %v1818 = vshrl.u32 %v1817, 7
    %v1819 = vsub.s32 0, %v1818
    %v1820 = vrot.slane %v192, %v1819
    %v1822 = vadd.f32 %v1814, %v1820
    %v1823 = vadd.f32 %v1815, %v1820
    %v1825 = vlaneseq
    %v1826 = vshrl.u32 %v1825, 7
    %v1827 = vsub.s32 0, %v1826
    %v1828 = vrot.slane %v209, %v1827
    %v1829 = vlaneseq
    %v1830 = vshrl.u32 %v1829, 7
    %v1831 = vsub.s32 1, %v1830
    %v1832 = vrot.slane %v209, %v1831
    %v1836 = vsel %vm256, %v1822, 0
    %v1839 = vsel %vm256, %v1823, 0
    %1841 = vmatprep.subr.mxu0 %v194
    %1842 = vmatpush1.msra.mxu0 %v193
    %1843 = vmatprep.subr.mxu0 %v196
    %1844 = vmatpush1.msra.mxu0 %v195
    %1845 = vmatprep.subr.mxu0 %v198
    %1846 = vmatpush1.msra.mxu0 %v197
    %1847 = vmatprep.subr.mxu0 %v200
    %1848 = vmatpush1.msra.mxu0 %v199
    %1849 = vmatprep.subr.mxu0 %v202
    %1850 = vmatpush1.msra.mxu0 %v201
    %1851 = vmatprep.subr.mxu0 %v204
    %1852 = vmatpush1.msra.mxu0 %v203
    %1853 = vmatprep.subr.mxu0 %v206
    %1854 = vmatpush1.msra.mxu0 %v205
    %1855 = vmatprep.subr.mxu0 %v208
    %1856 = vmatpush1.msra.mxu0 %v207
    %1857 = vmatprep.subr.mxu0 0.0
    %1858 = vmatpush1.msra.mxu0 0.0
    %1859 = vmatprep.subr.mxu0 0.0
    %1860 = vmatpush1.msra.mxu0 0.0
    %1861 = vmatprep.subr.mxu0 0.0
    %1862 = vmatpush1.msra.mxu0 0.0
    %1863 = vmatprep.subr.mxu0 0.0
    %1864 = vmatpush1.msra.mxu0 0.0
    %1865 = vmatprep.subr.mxu0 0.0
    %1866 = vmatpush1.msra.mxu0 0.0
    %1867 = vmatprep.subr.mxu0 0.0
    %1868 = vmatpush1.msra.mxu0 0.0
    %1869 = vmatprep.subr.mxu0 0.0
    %1870 = vmatpush1.msra.mxu0 0.0
    %1871 = vmatprep.subr.mxu0 0.0
    %1872 = vmatpush1.msra.mxu0 0.0
    %1873 = vmatprep.subr.mxu0 0.0
    %1874 = vmatpush1.msra.mxu0 0.0
    %1875 = vmatprep.subr.mxu0 0.0
    %1876 = vmatpush1.msra.mxu0 0.0
    %1877 = vmatprep.subr.mxu0 0.0
    %1878 = vmatpush1.msra.mxu0 0.0
    %1879 = vmatprep.subr.mxu0 0.0
    %1880 = vmatpush1.msra.mxu0 0.0
    %1881 = vmatprep.subr.mxu0 0.0
    %1882 = vmatpush1.msra.mxu0 0.0
    %1883 = vmatprep.subr.mxu0 0.0
    %1884 = vmatpush1.msra.mxu0 0.0
    %1885 = vmatprep.subr.mxu0 0.0
    %1886 = vmatpush1.msra.mxu0 0.0
    %1887 = vmatprep.subr.mxu0 0.0
    %1888 = vmatpush1.msra.mxu0 0.0
    %1889 = vmatprep.subr.mxu0 0.0
    %1890 = vmatpush1.msra.mxu0 0.0
    %1891 = vmatprep.subr.mxu0 0.0
    %1892 = vmatpush1.msra.mxu0 0.0
    %1893 = vmatprep.subr.mxu0 0.0
    %1894 = vmatpush1.msra.mxu0 0.0
    %1895 = vmatprep.subr.mxu0 0.0
    %1896 = vmatpush1.msra.mxu0 0.0
    %1897 = vmatprep.subr.mxu0 0.0
    %1898 = vmatpush1.msra.mxu0 0.0
    %1899 = vmatprep.subr.mxu0 0.0
    %1900 = vmatpush1.msra.mxu0 0.0
    %1901 = vmatprep.subr.mxu0 0.0
    %1902 = vmatpush1.msra.mxu0 0.0
    %1903 = vmatprep.subr.mxu0 0.0
    %1904 = vmatpush1.msra.mxu0 0.0
    %1905 = vmatprep.mubr.f32.mxu0 0.0
    %1906 = vmatmul.mubr.f32.gmra.mrb[0].mxu0 %v1836
    %v1907 = vpop.f32.mrb[0].mxu0
    %v1908 = vadd.f32 %v1828, %v1907
    %v1909 = vpop.f32.mrb[0].mxu0
    %v1910 = vadd.f32 %v1832, %v1909
    %1911 = vmatprep.mubr.f32.mxu0 0.0
    %1912 = vmatmul.mubr.f32.gmra.mrb[0].mxu0 %v1839
    %v1913 = vpop.f32.mrb[0].mxu0
    %v1914 = vadd.f32 %v1828, %v1913
    %v1915 = vpop.f32.mrb[0].mxu0
    %v1916 = vadd.f32 %v1832, %v1915
    %1917 = vdwg.mxu0
    %v1918 = vmul.f32 %v1908, 0.5
    %v1919 = vmul.f32 %v1910, 0.5
    %v1920 = vmul.f32 %v1914, 0.5
    %v1921 = vmul.f32 %v1916, 0.5
    %v1922 = vmul.f32 %v1908, 0.70710677
    %v1923 = vmul.f32 %v1910, 0.70710677
    %v1924 = vmul.f32 %v1914, 0.70710677
    %v1925 = vmul.f32 %v1916, 0.70710677
    %v1926 = vand.u32 2147483647, %v1922
    %v1927 = vand.u32 2147483647, %v1923
    %v1928 = vand.u32 2147483647, %v1924
    %v1929 = vand.u32 2147483647, %v1925
    %v1930 = vmul.f32 %v1926, 0.3275911
    %v1931 = vmul.f32 %v1927, 0.3275911
    %v1932 = vmul.f32 %v1928, 0.3275911
    %v1933 = vmul.f32 %v1929, 0.3275911
    %v1934 = vadd.f32 %v1930, 1.0
    %v1935 = vadd.f32 %v1931, 1.0
    %v1936 = vadd.f32 %v1932, 1.0
    %v1937 = vadd.f32 %v1933, 1.0
    %v1938 = vrcp.pop %v1934
    %v1939 = vmul.f32 1.0, %v1938
    %v1940 = vrcp.pop %v1935
    %v1941 = vmul.f32 1.0, %v1940
    %v1942 = vrcp.pop %v1936
    %v1943 = vmul.f32 1.0, %v1942
    %v1944 = vrcp.pop %v1937
    %v1945 = vmul.f32 1.0, %v1944
    %v1946 = vmul.f32 %v1939, 1.0614054
    %v1947 = vmul.f32 %v1941, 1.0614054
    %v1948 = vmul.f32 %v1943, 1.0614054
    %v1949 = vmul.f32 %v1945, 1.0614054
    %v1950 = vadd.f32 %v1946, -1.4531521
    %v1951 = vadd.f32 %v1947, -1.4531521
    %v1952 = vadd.f32 %v1948, -1.4531521
    %v1953 = vadd.f32 %v1949, -1.4531521
    %v1954 = vmul.f32 %v1950, %v1939
    %v1955 = vmul.f32 %v1951, %v1941
    %v1956 = vmul.f32 %v1952, %v1943
    %v1957 = vmul.f32 %v1953, %v1945
    %v1958 = vadd.f32 %v1954, 1.4214138
    %v1959 = vadd.f32 %v1955, 1.4214138
    %v1960 = vadd.f32 %v1956, 1.4214138
    %v1961 = vadd.f32 %v1957, 1.4214138
    %v1962 = vmul.f32 %v1958, %v1939
    %v1963 = vmul.f32 %v1959, %v1941
    %v1964 = vmul.f32 %v1960, %v1943
    %v1965 = vmul.f32 %v1961, %v1945
    %v1966 = vadd.f32 %v1962, -0.28449672
    %v1967 = vadd.f32 %v1963, -0.28449672
    %v1968 = vadd.f32 %v1964, -0.28449672
    %v1969 = vadd.f32 %v1965, -0.28449672
    %v1970 = vmul.f32 %v1966, %v1939
    %v1971 = vmul.f32 %v1967, %v1941
    %v1972 = vmul.f32 %v1968, %v1943
    %v1973 = vmul.f32 %v1969, %v1945
    %v1974 = vadd.f32 %v1970, 0.2548296
    %v1975 = vadd.f32 %v1971, 0.2548296
    %v1976 = vadd.f32 %v1972, 0.2548296
    %v1977 = vadd.f32 %v1973, 0.2548296
    %v1978 = vmul.f32 %v1974, %v1939
    %v1979 = vmul.f32 %v1975, %v1941
    %v1980 = vmul.f32 %v1976, %v1943
    %v1981 = vmul.f32 %v1977, %v1945
    %v1982 = vsub.f32 0.0, %v1926
    %v1983 = vsub.f32 0.0, %v1927
    %v1984 = vsub.f32 0.0, %v1928
    %v1985 = vsub.f32 0.0, %v1929
    %v1986 = vmul.f32 %v1982, %v1926
    %v1987 = vmul.f32 %v1983, %v1927
    %v1988 = vmul.f32 %v1984, %v1928
    %v1989 = vmul.f32 %v1985, %v1929
    %v1990 = vmul.f32 %v1986, 1.442695
    %v1991 = vpow.pop %v1990
    %v1992 = vmul.f32 %v1987, 1.442695
    %v1993 = vpow.pop %v1992
    %v1994 = vmul.f32 %v1988, 1.442695
    %v1995 = vpow.pop %v1994
    %v1996 = vmul.f32 %v1989, 1.442695
    %v1997 = vpow.pop %v1996
    %v1998 = vmul.f32 %v1978, %v1991
    %v1999 = vmul.f32 %v1979, %v1993
    %v2000 = vmul.f32 %v1980, %v1995
    %v2001 = vmul.f32 %v1981, %v1997
    %v2002 = vsub.f32 1.0, %v1998
    %v2003 = vsub.f32 1.0, %v1999
    %v2004 = vsub.f32 1.0, %v2000
    %v2005 = vsub.f32 1.0, %v2001
    %vm2006 = vcmp.lt.f32.partialorder %v1922, 0.0
    %vm2007 = vcmp.lt.f32.partialorder %v1923, 0.0
    %vm2008 = vcmp.lt.f32.partialorder %v1924, 0.0
    %vm2009 = vcmp.lt.f32.partialorder %v1925, 0.0
    %v2010 = vsub.f32 0.0, %v2002
    %v2011 = vsub.f32 0.0, %v2003
    %v2012 = vsub.f32 0.0, %v2004
    %v2013 = vsub.f32 0.0, %v2005
    %v2014 = vsel %vm2006, %v2010, %v2002
    %v2015 = vsel %vm2007, %v2011, %v2003
    %v2016 = vsel %vm2008, %v2012, %v2004
    %v2017 = vsel %vm2009, %v2013, %v2005
    %v2018 = vadd.f32 %v2014, 1.0
    %v2019 = vadd.f32 %v2015, 1.0
    %v2020 = vadd.f32 %v2016, 1.0
    %v2021 = vadd.f32 %v2017, 1.0
    %v2022 = vmul.f32 %v1918, %v2018
    %v2023 = vmul.f32 %v1919, %v2019
    %v2024 = vmul.f32 %v1920, %v2020
    %v2025 = vmul.f32 %v1921, %v2021
    %v2027 = vlaneseq
    %v2028 = vshrl.u32 %v2027, 7
    %v2029 = vsub.s32 0, %v2028
    %v2030 = vrot.slane %v242, %v2029
    %2032 = vmatprep.subr.mxu0 0.0
    %2033 = vmatpush1.msra.mxu0 %v210
    %2034 = vmatprep.subr.mxu0 0.0
    %2035 = vmatpush1.msra.mxu0 %v211
    %2036 = vmatprep.subr.mxu0 0.0
    %2037 = vmatpush1.msra.mxu0 %v212
    %2038 = vmatprep.subr.mxu0 0.0
    %2039 = vmatpush1.msra.mxu0 %v213
    %2040 = vmatprep.subr.mxu0 0.0
    %2041 = vmatpush1.msra.mxu0 %v214
    %2042 = vmatprep.subr.mxu0 0.0
    %2043 = vmatpush1.msra.mxu0 %v215
    %2044 = vmatprep.subr.mxu0 0.0
    %2045 = vmatpush1.msra.mxu0 %v216
    %2046 = vmatprep.subr.mxu0 0.0
    %2047 = vmatpush1.msra.mxu0 %v217
    %2048 = vmatprep.subr.mxu0 0.0
    %2049 = vmatpush1.msra.mxu0 %v218
    %2050 = vmatprep.subr.mxu0 0.0
    %2051 = vmatpush1.msra.mxu0 %v219
    %2052 = vmatprep.subr.mxu0 0.0
    %2053 = vmatpush1.msra.mxu0 %v220
    %2054 = vmatprep.subr.mxu0 0.0
    %2055 = vmatpush1.msra.mxu0 %v221
    %2056 = vmatprep.subr.mxu0 0.0
    %2057 = vmatpush1.msra.mxu0 %v222
    %2058 = vmatprep.subr.mxu0 0.0
    %2059 = vmatpush1.msra.mxu0 %v223
    %2060 = vmatprep.subr.mxu0 0.0
    %2061 = vmatpush1.msra.mxu0 %v224
    %2062 = vmatprep.subr.mxu0 0.0
    %2063 = vmatpush1.msra.mxu0 %v225
    %2064 = vmatprep.subr.mxu0 0.0
    %2065 = vmatpush1.msra.mxu0 %v226
    %2066 = vmatprep.subr.mxu0 0.0
    %2067 = vmatpush1.msra.mxu0 %v227
    %2068 = vmatprep.subr.mxu0 0.0
    %2069 = vmatpush1.msra.mxu0 %v228
    %2070 = vmatprep.subr.mxu0 0.0
    %2071 = vmatpush1.msra.mxu0 %v229
    %2072 = vmatprep.subr.mxu0 0.0
    %2073 = vmatpush1.msra.mxu0 %v230
    %2074 = vmatprep.subr.mxu0 0.0
    %2075 = vmatpush1.msra.mxu0 %v231
    %2076 = vmatprep.subr.mxu0 0.0
    %2077 = vmatpush1.msra.mxu0 %v232
    %2078 = vmatprep.subr.mxu0 0.0
    %2079 = vmatpush1.msra.mxu0 %v233
    %2080 = vmatprep.subr.mxu0 0.0
    %2081 = vmatpush1.msra.mxu0 %v234
    %2082 = vmatprep.subr.mxu0 0.0
    %2083 = vmatpush1.msra.mxu0 %v235
    %2084 = vmatprep.subr.mxu0 0.0
    %2085 = vmatpush1.msra.mxu0 %v236
    %2086 = vmatprep.subr.mxu0 0.0
    %2087 = vmatpush1.msra.mxu0 %v237
    %2088 = vmatprep.subr.mxu0 0.0
    %2089 = vmatpush1.msra.mxu0 %v238
    %2090 = vmatprep.subr.mxu0 0.0
    %2091 = vmatpush1.msra.mxu0 %v239
    %2092 = vmatprep.subr.mxu0 0.0
    %2093 = vmatpush1.msra.mxu0 %v240
    %2094 = vmatprep.subr.mxu0 0.0
    %2095 = vmatpush1.msra.mxu0 %v241
    %2096 = vmatprep.mubr.f32.mxu0 %v2023
    %2097 = vmatmul.mubr.f32.gmra.mrb[0].mxu0 %v2022
    %v2098 = vpop.f32.mrb[0].mxu0
    %v2099 = vadd.f32 %v2030, %v2098
    %v2100 = vpop.f32.mrb[0].mxu0
    %2101 = vmatprep.mubr.f32.mxu0 %v2025
    %2102 = vmatmul.mubr.f32.gmra.mrb[0].mxu0 %v2024
    %v2103 = vpop.f32.mrb[0].mxu0
    %v2104 = vadd.f32 %v2030, %v2103
    %v2105 = vpop.f32.mrb[0].mxu0
    %2106 = vdwg.mxu0
    %v2107 = vadd.f32 %v1822, %v2099
    %v2108 = vadd.f32 %v1823, %v2104
    %v2109 = vsel %vm256, %v2107, 0.0
    %2110 = vadd.xlane.f32.xlu0 %v2109
    %v2111 = vpop.xlane.xlu0 %2110
    %v2112 = vsel %vm256, %v2108, 0.0
    %2113 = vadd.xlane.f32.xlu0 %v2112
    %v2114 = vpop.xlane.xlu0 %2113
    %v2115 = vmul.f32 %v2111, %v1787
    %v2116 = vmul.f32 %v2114, %v1787
    %v2117 = vsub.f32 %v2107, %v2115
    %v2118 = vsub.f32 %v2108, %v2116
    %v2119 = vmul.f32 %v2117, %v2117
    %v2120 = vmul.f32 %v2118, %v2118
    %v2121 = vsel %vm256, %v2119, 0.0
    %2122 = vadd.xlane.f32.xlu0 %v2121
    %v2123 = vpop.xlane.xlu0 %2122
    %v2124 = vsel %vm256, %v2120, 0.0
    %2125 = vadd.xlane.f32.xlu0 %v2124
    %v2126 = vpop.xlane.xlu0 %2125
    %v2127 = vmul.f32 %v2123, %v1787
    %v2128 = vmul.f32 %v2126, %v1787
    %v2129 = vadd.f32 %v2127, 1e-05
    %v2130 = vadd.f32 %v2128, 1e-05
    %v2131 = vrsqrt.pop %v2129
    %v2132 = vrsqrt.pop %v2130
    %v2133 = vmul.f32 %v2117, %v2131
    %v2134 = vmul.f32 %v2118, %v2132
    %v2136 = vlaneseq
    %v2137 = vshrl.u32 %v2136, 7
    %v2138 = vsub.s32 0, %v2137
    %v2139 = vrot.slane %v243, %v2138
    %v2141 = vmul.f32 %v2133, %v2139
    %v2142 = vmul.f32 %v2134, %v2139
    %v2144 = vlaneseq
    %v2145 = vshrl.u32 %v2144, 7
    %v2146 = vsub.s32 0, %v2145
    %v2147 = vrot.slane %v244, %v2146
    %v2149 = vadd.f32 %v2141, %v2147
    %v2150 = vadd.f32 %v2142, %v2147
    %s2151 = scalar_lea.vmem %s2, 128
    %v2152 = vld [vmem:[%s2151] sm:$0xff]
    %v2153 = vld [vmem:[%s2151 + $0x8] sm:$0xff]
    %v2154 = vld [vmem:[%s2151 + $0x10] sm:$0xff]
    %v2155 = vld [vmem:[%s2151 + $0x18] sm:$0xff]
    %v2156 = vld [vmem:[%s2151 + $0x20] sm:$0xff]
    %v2157 = vld [vmem:[%s2151 + $0x28] sm:$0xff]
    %v2158 = vld [vmem:[%s2151 + $0x30] sm:$0xff]
    %v2159 = vld [vmem:[%s2151 + $0x38] sm:$0xff]
    %v2160 = vld [vmem:[%s2151 + $0x40] sm:$0xff]
    %v2161 = vld [vmem:[%s2151 + $0x48] sm:$0xff]
    %v2162 = vld [vmem:[%s2151 + $0x50] sm:$0xff]
    %v2163 = vld [vmem:[%s2151 + $0x58] sm:$0xff]
    %v2164 = vld [vmem:[%s2151 + $0x60] sm:$0xff]
    %v2165 = vld [vmem:[%s2151 + $0x68] sm:$0xff]
    %v2166 = vld [vmem:[%s2151 + $0x70] sm:$0xff]
    %v2167 = vld [vmem:[%s2151 + $0x78] sm:$0xff]
    %s2168 = scalar_lea.vmem %s3, 2
    %v2169 = vld [vmem:[%s2168] sm:$0x3]
    %s2170 = scalar_lea.vmem %s4, 64
    %v2171 = vld [vmem:[%s2170] sm:$0xff]
    %v2172 = vld [vmem:[%s2170 + $0x8] sm:$0xff]
    %v2173 = vld [vmem:[%s2170 + $0x10] sm:$0xff]
    %v2174 = vld [vmem:[%s2170 + $0x18] sm:$0xff]
    %v2175 = vld [vmem:[%s2170 + $0x20] sm:$0xff]
    %v2176 = vld [vmem:[%s2170 + $0x28] sm:$0xff]
    %v2177 = vld [vmem:[%s2170 + $0x30] sm:$0xff]
    %v2178 = vld [vmem:[%s2170 + $0x38] sm:$0xff]
    %s2179 = scalar_lea.vmem %s5, 1
    %v2180 = vld [vmem:[%s2179] sm:$0x1]
    %s2181 = scalar_lea.vmem %s6, 1
    %v2182 = vld [vmem:[%s2181] sm:$0x1]
    %s2183 = scalar_lea.vmem %s7, 1
    %v2184 = vld [vmem:[%s2183] sm:$0x1]
    %s2185 = scalar_lea.vmem %s8, 128
    %v2186 = vld [vmem:[%s2185] sm:$0xff]
    %v2187 = vld [vmem:[%s2185 + $0x8] sm:$0xff]
    %v2188 = vld [vmem:[%s2185 + $0x10] sm:$0xff]
    %v2189 = vld [vmem:[%s2185 + $0x18] sm:$0xff]
    %v2190 = vld [vmem:[%s2185 + $0x20] sm:$0xff]
    %v2191 = vld [vmem:[%s2185 + $0x28] sm:$0xff]
    %v2192 = vld [vmem:[%s2185 + $0x30] sm:$0xff]
    %v2193 = vld [vmem:[%s2185 + $0x38] sm:$0xff]
    %v2194 = vld [vmem:[%s2185 + $0x40] sm:$0xff]
    %v2195 = vld [vmem:[%s2185 + $0x48] sm:$0xff]
    %v2196 = vld [vmem:[%s2185 + $0x50] sm:$0xff]
    %v2197 = vld [vmem:[%s2185 + $0x58] sm:$0xff]
    %v2198 = vld [vmem:[%s2185 + $0x60] sm:$0xff]
    %v2199 = vld [vmem:[%s2185 + $0x68] sm:$0xff]
    %v2200 = vld [vmem:[%s2185 + $0x70] sm:$0xff]
    %v2201 = vld [vmem:[%s2185 + $0x78] sm:$0xff]
    %s2202 = scalar_lea.vmem %s9, 2
    %v2203 = vld [vmem:[%s2202] sm:$0x3]
    %s2204 = scalar_lea.vmem %s10, 256
    %v2205 = vld [vmem:[%s2204] sm:$0xff]
    %v2206 = vld [vmem:[%s2204 + $0x8] sm:$0xff]
    %v2207 = vld [vmem:[%s2204 + $0x10] sm:$0xff]
    %v2208 = vld [vmem:[%s2204 + $0x18] sm:$0xff]
    %v2209 = vld [vmem:[%s2204 + $0x20] sm:$0xff]
    %v2210 = vld [vmem:[%s2204 + $0x28] sm:$0xff]
    %v2211 = vld [vmem:[%s2204 + $0x30] sm:$0xff]
    %v2212 = vld [vmem:[%s2204 + $0x38] sm:$0xff]
    %v2213 = vld [vmem:[%s2204 + $0x40] sm:$0xff]
    %v2214 = vld [vmem:[%s2204 + $0x48] sm:$0xff]
    %v2215 = vld [vmem:[%s2204 + $0x50] sm:$0xff]
    %v2216 = vld [vmem:[%s2204 + $0x58] sm:$0xff]
    %v2217 = vld [vmem:[%s2204 + $0x60] sm:$0xff]
    %v2218 = vld [vmem:[%s2204 + $0x68] sm:$0xff]
    %v2219 = vld [vmem:[%s2204 + $0x70] sm:$0xff]
    %v2220 = vld [vmem:[%s2204 + $0x78] sm:$0xff]
    %v2221 = vld [vmem:[%s2204 + $0x80] sm:$0xff]
    %v2222 = vld [vmem:[%s2204 + $0x88] sm:$0xff]
    %v2223 = vld [vmem:[%s2204 + $0x90] sm:$0xff]
    %v2224 = vld [vmem:[%s2204 + $0x98] sm:$0xff]
    %v2225 = vld [vmem:[%s2204 + $0xa0] sm:$0xff]
    %v2226 = vld [vmem:[%s2204 + $0xa8] sm:$0xff]
    %v2227 = vld [vmem:[%s2204 + $0xb0] sm:$0xff]
    %v2228 = vld [vmem:[%s2204 + $0xb8] sm:$0xff]
    %v2229 = vld [vmem:[%s2204 + $0xc0] sm:$0xff]
    %v2230 = vld [vmem:[%s2204 + $0xc8] sm:$0xff]
    %v2231 = vld [vmem:[%s2204 + $0xd0] sm:$0xff]
    %v2232 = vld [vmem:[%s2204 + $0xd8] sm:$0xff]
    %v2233 = vld [vmem:[%s2204 + $0xe0] sm:$0xff]
    %v2234 = vld [vmem:[%s2204 + $0xe8] sm:$0xff]
    %v2235 = vld [vmem:[%s2204 + $0xf0] sm:$0xff]
    %v2236 = vld [vmem:[%s2204 + $0xf8] sm:$0xff]
    %s2237 = scalar_lea.vmem %s11, 1
    %v2238 = vld [vmem:[%s2237] sm:$0x1]
    %s2239 = scalar_lea.vmem %s12, 1
    %v2240 = vld [vmem:[%s2239] sm:$0x1]
    %s2241 = scalar_lea.vmem %s13, 1
    %v2242 = vld [vmem:[%s2241] sm:$0x1]
    %v2244 = vlaneseq
    %v2245 = vshrl.u32 %v2244, 7
    %v2246 = vsub.s32 0, %v2245
    %v2247 = vrot.slane %v2169, %v2246
    %v2248 = vlaneseq
    %v2249 = vshrl.u32 %v2248, 7
    %v2250 = vsub.s32 1, %v2249
    %v2251 = vrot.slane %v2169, %v2250
    %v2255 = vsel %vm256, %v2149, 0
    %v2258 = vsel %vm256, %v2150, 0
    %2260 = vmatprep.subr.mxu0 %v2153
    %2261 = vmatpush1.msra.mxu0 %v2152
    %2262 = vmatprep.subr.mxu0 %v2155
    %2263 = vmatpush1.msra.mxu0 %v2154
    %2264 = vmatprep.subr.mxu0 %v2157
    %2265 = vmatpush1.msra.mxu0 %v2156
    %2266 = vmatprep.subr.mxu0 %v2159
    %2267 = vmatpush1.msra.mxu0 %v2158
    %2268 = vmatprep.subr.mxu0 %v2161
    %2269 = vmatpush1.msra.mxu0 %v2160
    %2270 = vmatprep.subr.mxu0 %v2163
    %2271 = vmatpush1.msra.mxu0 %v2162
    %2272 = vmatprep.subr.mxu0 %v2165
    %2273 = vmatpush1.msra.mxu0 %v2164
    %2274 = vmatprep.subr.mxu0 %v2167
    %2275 = vmatpush1.msra.mxu0 %v2166
    %2276 = vmatprep.subr.mxu0 0.0
    %2277 = vmatpush1.msra.mxu0 0.0
    %2278 = vmatprep.subr.mxu0 0.0
    %2279 = vmatpush1.msra.mxu0 0.0
    %2280 = vmatprep.subr.mxu0 0.0
    %2281 = vmatpush1.msra.mxu0 0.0
    %2282 = vmatprep.subr.mxu0 0.0
    %2283 = vmatpush1.msra.mxu0 0.0
    %2284 = vmatprep.subr.mxu0 0.0
    %2285 = vmatpush1.msra.mxu0 0.0
    %2286 = vmatprep.subr.mxu0 0.0
    %2287 = vmatpush1.msra.mxu0 0.0
    %2288 = vmatprep.subr.mxu0 0.0
    %2289 = vmatpush1.msra.mxu0 0.0
    %2290 = vmatprep.subr.mxu0 0.0
    %2291 = vmatpush1.msra.mxu0 0.0
    %2292 = vmatprep.subr.mxu0 0.0
    %2293 = vmatpush1.msra.mxu0 0.0
    %2294 = vmatprep.subr.mxu0 0.0
    %2295 = vmatpush1.msra.mxu0 0.0
    %2296 = vmatprep.subr.mxu0 0.0
    %2297 = vmatpush1.msra.mxu0 0.0
    %2298 = vmatprep.subr.mxu0 0.0
    %2299 = vmatpush1.msra.mxu0 0.0
    %2300 = vmatprep.subr.mxu0 0.0
    %2301 = vmatpush1.msra.mxu0 0.0
    %2302 = vmatprep.subr.mxu0 0.0
    %2303 = vmatpush1.msra.mxu0 0.0
    %2304 = vmatprep.subr.mxu0 0.0
    %2305 = vmatpush1.msra.mxu0 0.0
    %2306 = vmatprep.subr.mxu0 0.0
    %2307 = vmatpush1.msra.mxu0 0.0
    %2308 = vmatprep.subr.mxu0 0.0
    %2309 = vmatpush1.msra.mxu0 0.0
    %2310 = vmatprep.subr.mxu0 0.0
    %2311 = vmatpush1.msra.mxu0 0.0
    %2312 = vmatprep.subr.mxu0 0.0
    %2313 = vmatpush1.msra.mxu0 0.0
    %2314 = vmatprep.subr.mxu0 0.0
    %2315 = vmatpush1.msra.mxu0 0.0
    %2316 = vmatprep.subr.mxu0 0.0
    %2317 = vmatpush1.msra.mxu0 0.0
    %2318 = vmatprep.subr.mxu0 0.0
    %2319 = vmatpush1.msra.mxu0 0.0
    %2320 = vmatprep.subr.mxu0 0.0
    %2321 = vmatpush1.msra.mxu0 0.0
    %2322 = vmatprep.subr.mxu0 0.0
    %2323 = vmatpush1.msra.mxu0 0.0
    %2324 = vmatprep.mubr.f32.mxu0 0.0
    %2325 = vmatmul.mubr.f32.gmra.mrb[0].mxu0 %v2255
    %v2326 = vpop.f32.mrb[0].mxu0
    %v2327 = vadd.f32 %v2247, %v2326
    %v2328 = vpop.f32.mrb[0].mxu0
    %v2329 = vadd.f32 %v2251, %v2328
    %2330 = vmatprep.mubr.f32.mxu0 0.0
    %2331 = vmatmul.mubr.f32.gmra.mrb[0].mxu0 %v2258
    %v2332 = vpop.f32.mrb[0].mxu0
    %v2333 = vadd.f32 %v2247, %v2332
    %v2334 = vpop.f32.mrb[0].mxu0
    %v2335 = vadd.f32 %v2251, %v2334
    %2336 = vdwg.mxu0
    %v2337 = vmul.f32 %v2327, 0.25
    %v2338 = vmul.f32 %v2333, 0.25
    %2340 = vrot.lane.b32.xlu0 %v2327, 64
    %v2341 = vpop.permute.xlu0 %2340
    %v2343 = vsel %vm345, %v2337, 0
    %v2345 = vsel %vm345, %v2341, 0
    %2347 = vmatprep.subr.mxu0 0.0
    %2348 = vmatpush1.xpose.msra.mxu0 %v2345
    %2349 = vmatprep.subr.mxu0 0.0
    %2350 = vmatpush1.xpose.msra.mxu0 0.0
    %2351 = vmatprep.subr.mxu0 0.0
    %2352 = vmatpush1.xpose.msra.mxu0 0.0
    %2353 = vmatprep.subr.mxu0 0.0
    %2354 = vmatpush1.xpose.msra.mxu0 0.0
    %2355 = vmatprep.subr.mxu0 0.0
    %2356 = vmatpush1.xpose.msra.mxu0 0.0
    %2357 = vmatprep.subr.mxu0 0.0
    %2358 = vmatpush1.xpose.msra.mxu0 0.0
    %2359 = vmatprep.subr.mxu0 0.0
    %2360 = vmatpush1.xpose.msra.mxu0 0.0
    %2361 = vmatprep.subr.mxu0 0.0
    %2362 = vmatpush1.xpose.msra.mxu0 0.0
    %2363 = vmatprep.subr.mxu0 0.0
    %2364 = vmatpush1.xpose.msra.mxu0 0.0
    %2365 = vmatprep.subr.mxu0 0.0
    %2366 = vmatpush1.xpose.msra.mxu0 0.0
    %2367 = vmatprep.subr.mxu0 0.0
    %2368 = vmatpush1.xpose.msra.mxu0 0.0
    %2369 = vmatprep.subr.mxu0 0.0
    %2370 = vmatpush1.xpose.msra.mxu0 0.0
    %2371 = vmatprep.subr.mxu0 0.0
    %2372 = vmatpush1.xpose.msra.mxu0 0.0
    %2373 = vmatprep.subr.mxu0 0.0
    %2374 = vmatpush1.xpose.msra.mxu0 0.0
    %2375 = vmatprep.subr.mxu0 0.0
    %2376 = vmatpush1.xpose.msra.mxu0 0.0
    %2377 = vmatprep.subr.mxu0 0.0
    %2378 = vmatpush1.xpose.msra.mxu0 0.0
    %2379 = vmatprep.subr.mxu0 0.0
    %2380 = vmatpush1.xpose.msra.mxu0 0.0
    %2381 = vmatprep.subr.mxu0 0.0
    %2382 = vmatpush1.xpose.msra.mxu0 0.0
    %2383 = vmatprep.subr.mxu0 0.0
    %2384 = vmatpush1.xpose.msra.mxu0 0.0
    %2385 = vmatprep.subr.mxu0 0.0
    %2386 = vmatpush1.xpose.msra.mxu0 0.0
    %2387 = vmatprep.subr.mxu0 0.0
    %2388 = vmatpush1.xpose.msra.mxu0 0.0
    %2389 = vmatprep.subr.mxu0 0.0
    %2390 = vmatpush1.xpose.msra.mxu0 0.0
    %2391 = vmatprep.subr.mxu0 0.0
    %2392 = vmatpush1.xpose.msra.mxu0 0.0
    %2393 = vmatprep.subr.mxu0 0.0
    %2394 = vmatpush1.xpose.msra.mxu0 0.0
    %2395 = vmatprep.subr.mxu0 0.0
    %2396 = vmatpush1.xpose.msra.mxu0 0.0
    %2397 = vmatprep.subr.mxu0 0.0
    %2398 = vmatpush1.xpose.msra.mxu0 0.0
    %2399 = vmatprep.subr.mxu0 0.0
    %2400 = vmatpush1.xpose.msra.mxu0 0.0
    %2401 = vmatprep.subr.mxu0 0.0
    %2402 = vmatpush1.xpose.msra.mxu0 0.0
    %2403 = vmatprep.subr.mxu0 0.0
    %2404 = vmatpush1.xpose.msra.mxu0 0.0
    %2405 = vmatprep.subr.mxu0 0.0
    %2406 = vmatpush1.xpose.msra.mxu0 0.0
    %2407 = vmatprep.subr.mxu0 0.0
    %2408 = vmatpush1.xpose.msra.mxu0 0.0
    %2409 = vmatprep.subr.mxu0 0.0
    %2410 = vmatpush1.xpose.msra.mxu0 0.0
    %2411 = vmatprep.mubr.f32.mxu0 0.0
    %2412 = vmatmul.mubr.f32.gmra.mrb[0].mxu0 %v2343
    %v2413 = vpop.f32.mrb[0].mxu0
    %v2414 = vadd.f32 0.0, %v2413
    %v2415 = vpop.f32.mrb[0].mxu0
    %2416 = vdwg.mxu0
    %v2417 = vsel %vm421, %v2414, -inf
    %2418 = vmax.xlane.f32.xlu0 %v2417
    %v2419 = vpop.xlane.xlu0 %2418
    %v2420 = vsub.f32 %v2414, %v2419
    %v2421 = vmul.f32 %v2420, 1.442695
    %v2422 = vpow.pop %v2421
    %v2423 = vsel %vm421, %v2422, 0.0
    %2424 = vadd.xlane.f32.xlu0 %v2423
    %v2425 = vpop.xlane.xlu0 %2424
    %v2426 = vrcp.pop %v2425
    %v2427 = vmul.f32 %v2422, %v2426
    %v2429 = vsel %vm421, %v2427, 0
    %2431 = vmatprep.subr.mxu0 0.0
    %2432 = vmatpush1.msra.mxu0 %v2329
    %2433 = vmatprep.subr.mxu0 0.0
    %2434 = vmatpush1.msra.mxu0 0.0
    %2435 = vmatprep.subr.mxu0 0.0
    %2436 = vmatpush1.msra.mxu0 0.0
    %2437 = vmatprep.subr.mxu0 0.0
    %2438 = vmatpush1.msra.mxu0 0.0
    %2439 = vmatprep.subr.mxu0 0.0
    %2440 = vmatpush1.msra.mxu0 0.0
    %2441 = vmatprep.subr.mxu0 0.0
    %2442 = vmatpush1.msra.mxu0 0.0
    %2443 = vmatprep.subr.mxu0 0.0
    %2444 = vmatpush1.msra.mxu0 0.0
    %2445 = vmatprep.subr.mxu0 0.0
    %2446 = vmatpush1.msra.mxu0 0.0
    %2447 = vmatprep.subr.mxu0 0.0
    %2448 = vmatpush1.msra.mxu0 0.0
    %2449 = vmatprep.subr.mxu0 0.0
    %2450 = vmatpush1.msra.mxu0 0.0
    %2451 = vmatprep.subr.mxu0 0.0
    %2452 = vmatpush1.msra.mxu0 0.0
    %2453 = vmatprep.subr.mxu0 0.0
    %2454 = vmatpush1.msra.mxu0 0.0
    %2455 = vmatprep.subr.mxu0 0.0
    %2456 = vmatpush1.msra.mxu0 0.0
    %2457 = vmatprep.subr.mxu0 0.0
    %2458 = vmatpush1.msra.mxu0 0.0
    %2459 = vmatprep.subr.mxu0 0.0
    %2460 = vmatpush1.msra.mxu0 0.0
    %2461 = vmatprep.subr.mxu0 0.0
    %2462 = vmatpush1.msra.mxu0 0.0
    %2463 = vmatprep.subr.mxu0 0.0
    %2464 = vmatpush1.msra.mxu0 0.0
    %2465 = vmatprep.subr.mxu0 0.0
    %2466 = vmatpush1.msra.mxu0 0.0
    %2467 = vmatprep.subr.mxu0 0.0
    %2468 = vmatpush1.msra.mxu0 0.0
    %2469 = vmatprep.subr.mxu0 0.0
    %2470 = vmatpush1.msra.mxu0 0.0
    %2471 = vmatprep.subr.mxu0 0.0
    %2472 = vmatpush1.msra.mxu0 0.0
    %2473 = vmatprep.subr.mxu0 0.0
    %2474 = vmatpush1.msra.mxu0 0.0
    %2475 = vmatprep.subr.mxu0 0.0
    %2476 = vmatpush1.msra.mxu0 0.0
    %2477 = vmatprep.subr.mxu0 0.0
    %2478 = vmatpush1.msra.mxu0 0.0
    %2479 = vmatprep.subr.mxu0 0.0
    %2480 = vmatpush1.msra.mxu0 0.0
    %2481 = vmatprep.subr.mxu0 0.0
    %2482 = vmatpush1.msra.mxu0 0.0
    %2483 = vmatprep.subr.mxu0 0.0
    %2484 = vmatpush1.msra.mxu0 0.0
    %2485 = vmatprep.subr.mxu0 0.0
    %2486 = vmatpush1.msra.mxu0 0.0
    %2487 = vmatprep.subr.mxu0 0.0
    %2488 = vmatpush1.msra.mxu0 0.0
    %2489 = vmatprep.subr.mxu0 0.0
    %2490 = vmatpush1.msra.mxu0 0.0
    %2491 = vmatprep.subr.mxu0 0.0
    %2492 = vmatpush1.msra.mxu0 0.0
    %2493 = vmatprep.subr.mxu0 0.0
    %2494 = vmatpush1.msra.mxu0 0.0
    %2495 = vmatprep.mubr.f32.mxu0 0.0
    %2496 = vmatmul.mubr.f32.gmra.mrb[0].mxu0 %v2429
    %v2497 = vpop.f32.mrb[0].mxu0
    %v2498 = vadd.f32 0.0, %v2497
    %v2499 = vpop.f32.mrb[0].mxu0
    %2500 = vdwg.mxu0
    %2501 = vrot.lane.b32.xlu0 %v2337, 112
    %v2502 = vpop.permute.xlu0 %2501
    %2503 = vrot.lane.b32.xlu0 %v2327, 48
    %v2504 = vpop.permute.xlu0 %2503
    %v2505 = vsel %vm345, %v2502, 0
    %v2507 = vsel %vm345, %v2504, 0
    %2509 = vmatprep.subr.mxu0 0.0
    %2510 = vmatpush1.xpose.msra.mxu0 %v2507
    %2511 = vmatprep.subr.mxu0 0.0
    %2512 = vmatpush1.xpose.msra.mxu0 0.0
    %2513 = vmatprep.subr.mxu0 0.0
    %2514 = vmatpush1.xpose.msra.mxu0 0.0
    %2515 = vmatprep.subr.mxu0 0.0
    %2516 = vmatpush1.xpose.msra.mxu0 0.0
    %2517 = vmatprep.subr.mxu0 0.0
    %2518 = vmatpush1.xpose.msra.mxu0 0.0
    %2519 = vmatprep.subr.mxu0 0.0
    %2520 = vmatpush1.xpose.msra.mxu0 0.0
    %2521 = vmatprep.subr.mxu0 0.0
    %2522 = vmatpush1.xpose.msra.mxu0 0.0
    %2523 = vmatprep.subr.mxu0 0.0
    %2524 = vmatpush1.xpose.msra.mxu0 0.0
    %2525 = vmatprep.subr.mxu0 0.0
    %2526 = vmatpush1.xpose.msra.mxu0 0.0
    %2527 = vmatprep.subr.mxu0 0.0
    %2528 = vmatpush1.xpose.msra.mxu0 0.0
    %2529 = vmatprep.subr.mxu0 0.0
    %2530 = vmatpush1.xpose.msra.mxu0 0.0
    %2531 = vmatprep.subr.mxu0 0.0
    %2532 = vmatpush1.xpose.msra.mxu0 0.0
    %2533 = vmatprep.subr.mxu0 0.0
    %2534 = vmatpush1.xpose.msra.mxu0 0.0
    %2535 = vmatprep.subr.mxu0 0.0
    %2536 = vmatpush1.xpose.msra.mxu0 0.0
    %2537 = vmatprep.subr.mxu0 0.0
    %2538 = vmatpush1.xpose.msra.mxu0 0.0
    %2539 = vmatprep.subr.mxu0 0.0
    %2540 = vmatpush1.xpose.msra.mxu0 0.0
    %2541 = vmatprep.subr.mxu0 0.0
    %2542 = vmatpush1.xpose.msra.mxu0 0.0
    %2543 = vmatprep.subr.mxu0 0.0
    %2544 = vmatpush1.xpose.msra.mxu0 0.0
    %2545 = vmatprep.subr.mxu0 0.0
    %2546 = vmatpush1.xpose.msra.mxu0 0.0
    %2547 = vmatprep.subr.mxu0 0.0
    %2548 = vmatpush1.xpose.msra.mxu0 0.0
    %2549 = vmatprep.subr.mxu0 0.0
    %2550 = vmatpush1.xpose.msra.mxu0 0.0
    %2551 = vmatprep.subr.mxu0 0.0
    %2552 = vmatpush1.xpose.msra.mxu0 0.0
    %2553 = vmatprep.subr.mxu0 0.0
    %2554 = vmatpush1.xpose.msra.mxu0 0.0
    %2555 = vmatprep.subr.mxu0 0.0
    %2556 = vmatpush1.xpose.msra.mxu0 0.0
    %2557 = vmatprep.subr.mxu0 0.0
    %2558 = vmatpush1.xpose.msra.mxu0 0.0
    %2559 = vmatprep.subr.mxu0 0.0
    %2560 = vmatpush1.xpose.msra.mxu0 0.0
    %2561 = vmatprep.subr.mxu0 0.0
    %2562 = vmatpush1.xpose.msra.mxu0 0.0
    %2563 = vmatprep.subr.mxu0 0.0
    %2564 = vmatpush1.xpose.msra.mxu0 0.0
    %2565 = vmatprep.subr.mxu0 0.0
    %2566 = vmatpush1.xpose.msra.mxu0 0.0
    %2567 = vmatprep.subr.mxu0 0.0
    %2568 = vmatpush1.xpose.msra.mxu0 0.0
    %2569 = vmatprep.subr.mxu0 0.0
    %2570 = vmatpush1.xpose.msra.mxu0 0.0
    %2571 = vmatprep.subr.mxu0 0.0
    %2572 = vmatpush1.xpose.msra.mxu0 0.0
    %2573 = vmatprep.mubr.f32.mxu0 0.0
    %2574 = vmatmul.mubr.f32.gmra.mrb[0].mxu0 %v2505
    %v2575 = vpop.f32.mrb[0].mxu0
    %v2576 = vadd.f32 0.0, %v2575
    %v2577 = vpop.f32.mrb[0].mxu0
    %2578 = vdwg.mxu0
    %v2579 = vsel %vm421, %v2576, -inf
    %2580 = vmax.xlane.f32.xlu0 %v2579
    %v2581 = vpop.xlane.xlu0 %2580
    %v2582 = vsub.f32 %v2576, %v2581
    %v2583 = vmul.f32 %v2582, 1.442695
    %v2584 = vpow.pop %v2583
    %v2585 = vsel %vm421, %v2584, 0.0
    %2586 = vadd.xlane.f32.xlu0 %v2585
    %v2587 = vpop.xlane.xlu0 %2586
    %v2588 = vrcp.pop %v2587
    %v2589 = vmul.f32 %v2584, %v2588
    %2591 = vrot.lane.b32.xlu0 %v2329, 112
    %v2592 = vpop.permute.xlu0 %2591
    %v2595 = vsel %vm421, %v2589, 0
    %2597 = vmatprep.subr.mxu0 0.0
    %2598 = vmatpush1.msra.mxu0 %v2592
    %2599 = vmatprep.subr.mxu0 0.0
    %2600 = vmatpush1.msra.mxu0 0.0
    %2601 = vmatprep.subr.mxu0 0.0
    %2602 = vmatpush1.msra.mxu0 0.0
    %2603 = vmatprep.subr.mxu0 0.0
    %2604 = vmatpush1.msra.mxu0 0.0
    %2605 = vmatprep.subr.mxu0 0.0
    %2606 = vmatpush1.msra.mxu0 0.0
    %2607 = vmatprep.subr.mxu0 0.0
    %2608 = vmatpush1.msra.mxu0 0.0
    %2609 = vmatprep.subr.mxu0 0.0
    %2610 = vmatpush1.msra.mxu0 0.0
    %2611 = vmatprep.subr.mxu0 0.0
    %2612 = vmatpush1.msra.mxu0 0.0
    %2613 = vmatprep.subr.mxu0 0.0
    %2614 = vmatpush1.msra.mxu0 0.0
    %2615 = vmatprep.subr.mxu0 0.0
    %2616 = vmatpush1.msra.mxu0 0.0
    %2617 = vmatprep.subr.mxu0 0.0
    %2618 = vmatpush1.msra.mxu0 0.0
    %2619 = vmatprep.subr.mxu0 0.0
    %2620 = vmatpush1.msra.mxu0 0.0
    %2621 = vmatprep.subr.mxu0 0.0
    %2622 = vmatpush1.msra.mxu0 0.0
    %2623 = vmatprep.subr.mxu0 0.0
    %2624 = vmatpush1.msra.mxu0 0.0
    %2625 = vmatprep.subr.mxu0 0.0
    %2626 = vmatpush1.msra.mxu0 0.0
    %2627 = vmatprep.subr.mxu0 0.0
    %2628 = vmatpush1.msra.mxu0 0.0
    %2629 = vmatprep.subr.mxu0 0.0
    %2630 = vmatpush1.msra.mxu0 0.0
    %2631 = vmatprep.subr.mxu0 0.0
    %2632 = vmatpush1.msra.mxu0 0.0
    %2633 = vmatprep.subr.mxu0 0.0
    %2634 = vmatpush1.msra.mxu0 0.0
    %2635 = vmatprep.subr.mxu0 0.0
    %2636 = vmatpush1.msra.mxu0 0.0
    %2637 = vmatprep.subr.mxu0 0.0
    %2638 = vmatpush1.msra.mxu0 0.0
    %2639 = vmatprep.subr.mxu0 0.0
    %2640 = vmatpush1.msra.mxu0 0.0
    %2641 = vmatprep.subr.mxu0 0.0
    %2642 = vmatpush1.msra.mxu0 0.0
    %2643 = vmatprep.subr.mxu0 0.0
    %2644 = vmatpush1.msra.mxu0 0.0
    %2645 = vmatprep.subr.mxu0 0.0
    %2646 = vmatpush1.msra.mxu0 0.0
    %2647 = vmatprep.subr.mxu0 0.0
    %2648 = vmatpush1.msra.mxu0 0.0
    %2649 = vmatprep.subr.mxu0 0.0
    %2650 = vmatpush1.msra.mxu0 0.0
    %2651 = vmatprep.subr.mxu0 0.0
    %2652 = vmatpush1.msra.mxu0 0.0
    %2653 = vmatprep.subr.mxu0 0.0
    %2654 = vmatpush1.msra.mxu0 0.0
    %2655 = vmatprep.subr.mxu0 0.0
    %2656 = vmatpush1.msra.mxu0 0.0
    %2657 = vmatprep.subr.mxu0 0.0
    %2658 = vmatpush1.msra.mxu0 0.0
    %2659 = vmatprep.subr.mxu0 0.0
    %2660 = vmatpush1.msra.mxu0 0.0
    %2661 = vmatprep.mubr.f32.mxu0 0.0
    %2662 = vmatmul.mubr.f32.gmra.mrb[0].mxu0 %v2595
    %v2663 = vpop.f32.mrb[0].mxu0
    %v2664 = vadd.f32 0.0, %v2663
    %v2665 = vpop.f32.mrb[0].mxu0
    %2666 = vdwg.mxu0
    %2667 = vrot.lane.b32.xlu0 %v2337, 96
    %v2668 = vpop.permute.xlu0 %2667
    %2669 = vrot.lane.b32.xlu0 %v2327, 32
    %v2670 = vpop.permute.xlu0 %2669
    %v2671 = vsel %vm345, %v2668, 0
    %v2673 = vsel %vm345, %v2670, 0
    %2675 = vmatprep.subr.mxu0 0.0
    %2676 = vmatpush1.xpose.msra.mxu0 %v2673
    %2677 = vmatprep.subr.mxu0 0.0
    %2678 = vmatpush1.xpose.msra.mxu0 0.0
    %2679 = vmatprep.subr.mxu0 0.0
    %2680 = vmatpush1.xpose.msra.mxu0 0.0
    %2681 = vmatprep.subr.mxu0 0.0
    %2682 = vmatpush1.xpose.msra.mxu0 0.0
    %2683 = vmatprep.subr.mxu0 0.0
    %2684 = vmatpush1.xpose.msra.mxu0 0.0
    %2685 = vmatprep.subr.mxu0 0.0
    %2686 = vmatpush1.xpose.msra.mxu0 0.0
    %2687 = vmatprep.subr.mxu0 0.0
    %2688 = vmatpush1.xpose.msra.mxu0 0.0
    %2689 = vmatprep.subr.mxu0 0.0
    %2690 = vmatpush1.xpose.msra.mxu0 0.0
    %2691 = vmatprep.subr.mxu0 0.0
    %2692 = vmatpush1.xpose.msra.mxu0 0.0
    %2693 = vmatprep.subr.mxu0 0.0
    %2694 = vmatpush1.xpose.msra.mxu0 0.0
    %2695 = vmatprep.subr.mxu0 0.0
    %2696 = vmatpush1.xpose.msra.mxu0 0.0
    %2697 = vmatprep.subr.mxu0 0.0
    %2698 = vmatpush1.xpose.msra.mxu0 0.0
    %2699 = vmatprep.subr.mxu0 0.0
    %2700 = vmatpush1.xpose.msra.mxu0 0.0
    %2701 = vmatprep.subr.mxu0 0.0
    %2702 = vmatpush1.xpose.msra.mxu0 0.0
    %2703 = vmatprep.subr.mxu0 0.0
    %2704 = vmatpush1.xpose.msra.mxu0 0.0
    %2705 = vmatprep.subr.mxu0 0.0
    %2706 = vmatpush1.xpose.msra.mxu0 0.0
    %2707 = vmatprep.subr.mxu0 0.0
    %2708 = vmatpush1.xpose.msra.mxu0 0.0
    %2709 = vmatprep.subr.mxu0 0.0
    %2710 = vmatpush1.xpose.msra.mxu0 0.0
    %2711 = vmatprep.subr.mxu0 0.0
    %2712 = vmatpush1.xpose.msra.mxu0 0.0
    %2713 = vmatprep.subr.mxu0 0.0
    %2714 = vmatpush1.xpose.msra.mxu0 0.0
    %2715 = vmatprep.subr.mxu0 0.0
    %2716 = vmatpush1.xpose.msra.mxu0 0.0
    %2717 = vmatprep.subr.mxu0 0.0
    %2718 = vmatpush1.xpose.msra.mxu0 0.0
    %2719 = vmatprep.subr.mxu0 0.0
    %2720 = vmatpush1.xpose.msra.mxu0 0.0
    %2721 = vmatprep.subr.mxu0 0.0
    %2722 = vmatpush1.xpose.msra.mxu0 0.0
    %2723 = vmatprep.subr.mxu0 0.0
    %2724 = vmatpush1.xpose.msra.mxu0 0.0
    %2725 = vmatprep.subr.mxu0 0.0
    %2726 = vmatpush1.xpose.msra.mxu0 0.0
    %2727 = vmatprep.subr.mxu0 0.0
    %2728 = vmatpush1.xpose.msra.mxu0 0.0
    %2729 = vmatprep.subr.mxu0 0.0
    %2730 = vmatpush1.xpose.msra.mxu0 0.0
    %2731 = vmatprep.subr.mxu0 0.0
    %2732 = vmatpush1.xpose.msra.mxu0 0.0
    %2733 = vmatprep.subr.mxu0 0.0
    %2734 = vmatpush1.xpose.msra.mxu0 0.0
    %2735 = vmatprep.subr.mxu0 0.0
    %2736 = vmatpush1.xpose.msra.mxu0 0.0
    %2737 = vmatprep.subr.mxu0 0.0
    %2738 = vmatpush1.xpose.msra.mxu0 0.0
    %2739 = vmatprep.mubr.f32.mxu0 0.0
    %2740 = vmatmul.mubr.f32.gmra.mrb[0].mxu0 %v2671
    %v2741 = vpop.f32.mrb[0].mxu0
    %v2742 = vadd.f32 0.0, %v2741
    %v2743 = vpop.f32.mrb[0].mxu0
    %2744 = vdwg.mxu0
    %v2745 = vsel %vm421, %v2742, -inf
    %2746 = vmax.xlane.f32.xlu0 %v2745
    %v2747 = vpop.xlane.xlu0 %2746
    %v2748 = vsub.f32 %v2742, %v2747
    %v2749 = vmul.f32 %v2748, 1.442695
    %v2750 = vpow.pop %v2749
    %v2751 = vsel %vm421, %v2750, 0.0
    %2752 = vadd.xlane.f32.xlu0 %v2751
    %v2753 = vpop.xlane.xlu0 %2752
    %v2754 = vrcp.pop %v2753
    %v2755 = vmul.f32 %v2750, %v2754
    %2756 = vrot.lane.b32.xlu0 %v2329, 96
    %v2757 = vpop.permute.xlu0 %2756
    %v2760 = vsel %vm421, %v2755, 0
    %2762 = vmatprep.subr.mxu0 0.0
    %2763 = vmatpush1.msra.mxu0 %v2757
    %2764 = vmatprep.subr.mxu0 0.0
    %2765 = vmatpush1.msra.mxu0 0.0
    %2766 = vmatprep.subr.mxu0 0.0
    %2767 = vmatpush1.msra.mxu0 0.0
    %2768 = vmatprep.subr.mxu0 0.0
    %2769 = vmatpush1.msra.mxu0 0.0
    %2770 = vmatprep.subr.mxu0 0.0
    %2771 = vmatpush1.msra.mxu0 0.0
    %2772 = vmatprep.subr.mxu0 0.0
    %2773 = vmatpush1.msra.mxu0 0.0
    %2774 = vmatprep.subr.mxu0 0.0
    %2775 = vmatpush1.msra.mxu0 0.0
    %2776 = vmatprep.subr.mxu0 0.0
    %2777 = vmatpush1.msra.mxu0 0.0
    %2778 = vmatprep.subr.mxu0 0.0
    %2779 = vmatpush1.msra.mxu0 0.0
    %2780 = vmatprep.subr.mxu0 0.0
    %2781 = vmatpush1.msra.mxu0 0.0
    %2782 = vmatprep.subr.mxu0 0.0
    %2783 = vmatpush1.msra.mxu0 0.0
    %2784 = vmatprep.subr.mxu0 0.0
    %2785 = vmatpush1.msra.mxu0 0.0
    %2786 = vmatprep.subr.mxu0 0.0
    %2787 = vmatpush1.msra.mxu0 0.0
    %2788 = vmatprep.subr.mxu0 0.0
    %2789 = vmatpush1.msra.mxu0 0.0
    %2790 = vmatprep.subr.mxu0 0.0
    %2791 = vmatpush1.msra.mxu0 0.0
    %2792 = vmatprep.subr.mxu0 0.0
    %2793 = vmatpush1.msra.mxu0 0.0
    %2794 = vmatprep.subr.mxu0 0.0
    %2795 = vmatpush1.msra.mxu0 0.0
    %2796 = vmatprep.subr.mxu0 0.0
    %2797 = vmatpush1.msra.mxu0 0.0
    %2798 = vmatprep.subr.mxu0 0.0
    %2799 = vmatpush1.msra.mxu0 0.0
    %2800 = vmatprep.subr.mxu0 0.0
    %2801 = vmatpush1.msra.mxu0 0.0
    %2802 = vmatprep.subr.mxu0 0.0
    %2803 = vmatpush1.msra.mxu0 0.0
    %2804 = vmatprep.subr.mxu0 0.0
    %2805 = vmatpush1.msra.mxu0 0.0
    %2806 = vmatprep.subr.mxu0 0.0
    %2807 = vmatpush1.msra.mxu0 0.0
    %2808 = vmatprep.subr.mxu0 0.0
    %2809 = vmatpush1.msra.mxu0 0.0
    %2810 = vmatprep.subr.mxu0 0.0
    %2811 = vmatpush1.msra.mxu0 0.0
    %2812 = vmatprep.subr.mxu0 0.0
    %2813 = vmatpush1.msra.mxu0 0.0
    %2814 = vmatprep.subr.mxu0 0.0
    %2815 = vmatpush1.msra.mxu0 0.0
    %2816 = vmatprep.subr.mxu0 0.0
    %2817 = vmatpush1.msra.mxu0 0.0
    %2818 = vmatprep.subr.mxu0 0.0
    %2819 = vmatpush1.msra.mxu0 0.0
    %2820 = vmatprep.subr.mxu0 0.0
    %2821 = vmatpush1.msra.mxu0 0.0
    %2822 = vmatprep.subr.mxu0 0.0
    %2823 = vmatpush1.msra.mxu0 0.0
    %2824 = vmatprep.subr.mxu0 0.0
    %2825 = vmatpush1.msra.mxu0 0.0
    %2826 = vmatprep.mubr.f32.mxu0 0.0
    %2827 = vmatmul.mubr.f32.gmra.mrb[0].mxu0 %v2760
    %v2828 = vpop.f32.mrb[0].mxu0
    %v2829 = vadd.f32 0.0, %v2828
    %v2830 = vpop.f32.mrb[0].mxu0
    %2831 = vdwg.mxu0
    %2832 = vrot.lane.b32.xlu0 %v2337, 80
    %v2833 = vpop.permute.xlu0 %2832
    %2834 = vrot.lane.b32.xlu0 %v2327, 16
    %v2835 = vpop.permute.xlu0 %2834
    %v2836 = vsel %vm345, %v2833, 0
    %v2838 = vsel %vm345, %v2835, 0
    %2840 = vmatprep.subr.mxu0 0.0
    %2841 = vmatpush1.xpose.msra.mxu0 %v2838
    %2842 = vmatprep.subr.mxu0 0.0
    %2843 = vmatpush1.xpose.msra.mxu0 0.0
    %2844 = vmatprep.subr.mxu0 0.0
    %2845 = vmatpush1.xpose.msra.mxu0 0.0
    %2846 = vmatprep.subr.mxu0 0.0
    %2847 = vmatpush1.xpose.msra.mxu0 0.0
    %2848 = vmatprep.subr.mxu0 0.0
    %2849 = vmatpush1.xpose.msra.mxu0 0.0
    %2850 = vmatprep.subr.mxu0 0.0
    %2851 = vmatpush1.xpose.msra.mxu0 0.0
    %2852 = vmatprep.subr.mxu0 0.0
    %2853 = vmatpush1.xpose.msra.mxu0 0.0
    %2854 = vmatprep.subr.mxu0 0.0
    %2855 = vmatpush1.xpose.msra.mxu0 0.0
    %2856 = vmatprep.subr.mxu0 0.0
    %2857 = vmatpush1.xpose.msra.mxu0 0.0
    %2858 = vmatprep.subr.mxu0 0.0
    %2859 = vmatpush1.xpose.msra.mxu0 0.0
    %2860 = vmatprep.subr.mxu0 0.0
    %2861 = vmatpush1.xpose.msra.mxu0 0.0
    %2862 = vmatprep.subr.mxu0 0.0
    %2863 = vmatpush1.xpose.msra.mxu0 0.0
    %2864 = vmatprep.subr.mxu0 0.0
    %2865 = vmatpush1.xpose.msra.mxu0 0.0
    %2866 = vmatprep.subr.mxu0 0.0
    %2867 = vmatpush1.xpose.msra.mxu0 0.0
    %2868 = vmatprep.subr.mxu0 0.0
    %2869 = vmatpush1.xpose.msra.mxu0 0.0
    %2870 = vmatprep.subr.mxu0 0.0
    %2871 = vmatpush1.xpose.msra.mxu0 0.0
    %2872 = vmatprep.subr.mxu0 0.0
    %2873 = vmatpush1.xpose.msra.mxu0 0.0
    %2874 = vmatprep.subr.mxu0 0.0
    %2875 = vmatpush1.xpose.msra.mxu0 0.0
    %2876 = vmatprep.subr.mxu0 0.0
    %2877 = vmatpush1.xpose.msra.mxu0 0.0
    %2878 = vmatprep.subr.mxu0 0.0
    %2879 = vmatpush1.xpose.msra.mxu0 0.0
    %2880 = vmatprep.subr.mxu0 0.0
    %2881 = vmatpush1.xpose.msra.mxu0 0.0
    %2882 = vmatprep.subr.mxu0 0.0
    %2883 = vmatpush1.xpose.msra.mxu0 0.0
    %2884 = vmatprep.subr.mxu0 0.0
    %2885 = vmatpush1.xpose.msra.mxu0 0.0
    %2886 = vmatprep.subr.mxu0 0.0
    %2887 = vmatpush1.xpose.msra.mxu0 0.0
    %2888 = vmatprep.subr.mxu0 0.0
    %2889 = vmatpush1.xpose.msra.mxu0 0.0
    %2890 = vmatprep.subr.mxu0 0.0
    %2891 = vmatpush1.xpose.msra.mxu0 0.0
    %2892 = vmatprep.subr.mxu0 0.0
    %2893 = vmatpush1.xpose.msra.mxu0 0.0
    %2894 = vmatprep.subr.mxu0 0.0
    %2895 = vmatpush1.xpose.msra.mxu0 0.0
    %2896 = vmatprep.subr.mxu0 0.0
    %2897 = vmatpush1.xpose.msra.mxu0 0.0
    %2898 = vmatprep.subr.mxu0 0.0
    %2899 = vmatpush1.xpose.msra.mxu0 0.0
    %2900 = vmatprep.subr.mxu0 0.0
    %2901 = vmatpush1.xpose.msra.mxu0 0.0
    %2902 = vmatprep.subr.mxu0 0.0
    %2903 = vmatpush1.xpose.msra.mxu0 0.0
    %2904 = vmatprep.mubr.f32.mxu0 0.0
    %2905 = vmatmul.mubr.f32.gmra.mrb[0].mxu0 %v2836
    %v2906 = vpop.f32.mrb[0].mxu0
    %v2907 = vadd.f32 0.0, %v2906
    %v2908 = vpop.f32.mrb[0].mxu0
    %2909 = vdwg.mxu0
    %v2910 = vsel %vm421, %v2907, -inf
    %2911 = vmax.xlane.f32.xlu0 %v2910
    %v2912 = vpop.xlane.xlu0 %2911
    %v2913 = vsub.f32 %v2907, %v2912
    %v2914 = vmul.f32 %v2913, 1.442695
    %v2915 = vpow.pop %v2914
    %v2916 = vsel %vm421, %v2915, 0.0
    %2917 = vadd.xlane.f32.xlu0 %v2916
    %v2918 = vpop.xlane.xlu0 %2917
    %v2919 = vrcp.pop %v2918
    %v2920 = vmul.f32 %v2915, %v2919
    %2921 = vrot.lane.b32.xlu0 %v2329, 80
    %v2922 = vpop.permute.xlu0 %2921
    %v2925 = vsel %vm421, %v2920, 0
    %2927 = vmatprep.subr.mxu0 0.0
    %2928 = vmatpush1.msra.mxu0 %v2922
    %2929 = vmatprep.subr.mxu0 0.0
    %2930 = vmatpush1.msra.mxu0 0.0
    %2931 = vmatprep.subr.mxu0 0.0
    %2932 = vmatpush1.msra.mxu0 0.0
    %2933 = vmatprep.subr.mxu0 0.0
    %2934 = vmatpush1.msra.mxu0 0.0
    %2935 = vmatprep.subr.mxu0 0.0
    %2936 = vmatpush1.msra.mxu0 0.0
    %2937 = vmatprep.subr.mxu0 0.0
    %2938 = vmatpush1.msra.mxu0 0.0
    %2939 = vmatprep.subr.mxu0 0.0
    %2940 = vmatpush1.msra.mxu0 0.0
    %2941 = vmatprep.subr.mxu0 0.0
    %2942 = vmatpush1.msra.mxu0 0.0
    %2943 = vmatprep.subr.mxu0 0.0
    %2944 = vmatpush1.msra.mxu0 0.0
    %2945 = vmatprep.subr.mxu0 0.0
    %2946 = vmatpush1.msra.mxu0 0.0
    %2947 = vmatprep.subr.mxu0 0.0
    %2948 = vmatpush1.msra.mxu0 0.0
    %2949 = vmatprep.subr.mxu0 0.0
    %2950 = vmatpush1.msra.mxu0 0.0
    %2951 = vmatprep.subr.mxu0 0.0
    %2952 = vmatpush1.msra.mxu0 0.0
    %2953 = vmatprep.subr.mxu0 0.0
    %2954 = vmatpush1.msra.mxu0 0.0
    %2955 = vmatprep.subr.mxu0 0.0
    %2956 = vmatpush1.msra.mxu0 0.0
    %2957 = vmatprep.subr.mxu0 0.0
    %2958 = vmatpush1.msra.mxu0 0.0
    %2959 = vmatprep.subr.mxu0 0.0
    %2960 = vmatpush1.msra.mxu0 0.0
    %2961 = vmatprep.subr.mxu0 0.0
    %2962 = vmatpush1.msra.mxu0 0.0
    %2963 = vmatprep.subr.mxu0 0.0
    %2964 = vmatpush1.msra.mxu0 0.0
    %2965 = vmatprep.subr.mxu0 0.0
    %2966 = vmatpush1.msra.mxu0 0.0
    %2967 = vmatprep.subr.mxu0 0.0
    %2968 = vmatpush1.msra.mxu0 0.0
    %2969 = vmatprep.subr.mxu0 0.0
    %2970 = vmatpush1.msra.mxu0 0.0
    %2971 = vmatprep.subr.mxu0 0.0
    %2972 = vmatpush1.msra.mxu0 0.0
    %2973 = vmatprep.subr.mxu0 0.0
    %2974 = vmatpush1.msra.mxu0 0.0
    %2975 = vmatprep.subr.mxu0 0.0
    %2976 = vmatpush1.msra.mxu0 0.0
    %2977 = vmatprep.subr.mxu0 0.0
    %2978 = vmatpush1.msra.mxu0 0.0
    %2979 = vmatprep.subr.mxu0 0.0
    %2980 = vmatpush1.msra.mxu0 0.0
    %2981 = vmatprep.subr.mxu0 0.0
    %2982 = vmatpush1.msra.mxu0 0.0
    %2983 = vmatprep.subr.mxu0 0.0
    %2984 = vmatpush1.msra.mxu0 0.0
    %2985 = vmatprep.subr.mxu0 0.0
    %2986 = vmatpush1.msra.mxu0 0.0
    %2987 = vmatprep.subr.mxu0 0.0
    %2988 = vmatpush1.msra.mxu0 0.0
    %2989 = vmatprep.subr.mxu0 0.0
    %2990 = vmatpush1.msra.mxu0 0.0
    %2991 = vmatprep.mubr.f32.mxu0 0.0
    %2992 = vmatmul.mubr.f32.gmra.mrb[0].mxu0 %v2925
    %v2993 = vpop.f32.mrb[0].mxu0
    %v2994 = vadd.f32 0.0, %v2993
    %v2995 = vpop.f32.mrb[0].mxu0
    %2996 = vdwg.mxu0
    %2998 = vrot.lane.b32.xlu0 %v2664, 16
    %v2999 = vpop.permute.xlu0 %2998
    %3002 = vrot.lane.b32.xlu0 %v2829, 32
    %v3003 = vpop.permute.xlu0 %3002
    %3006 = vrot.lane.b32.xlu0 %v2994, 48
    %v3007 = vpop.permute.xlu0 %3006
    %v3009 = vsel %vm345, %v2498, %v2999
    %v3010 = vsel %vm1015, %v3009, %v3003
    %v3011 = vsel %vm1017, %v3010, %v3007
    %3013 = vrot.lane.b32.xlu0 %v2333, 64
    %v3014 = vpop.permute.xlu0 %3013
    %v3016 = vsel %vm345, %v2338, 0
    %v3018 = vsel %vm345, %v3014, 0
    %3020 = vmatprep.subr.mxu0 0.0
    %3021 = vmatpush1.xpose.msra.mxu0 %v3018
    %3022 = vmatprep.subr.mxu0 0.0
    %3023 = vmatpush1.xpose.msra.mxu0 0.0
    %3024 = vmatprep.subr.mxu0 0.0
    %3025 = vmatpush1.xpose.msra.mxu0 0.0
    %3026 = vmatprep.subr.mxu0 0.0
    %3027 = vmatpush1.xpose.msra.mxu0 0.0
    %3028 = vmatprep.subr.mxu0 0.0
    %3029 = vmatpush1.xpose.msra.mxu0 0.0
    %3030 = vmatprep.subr.mxu0 0.0
    %3031 = vmatpush1.xpose.msra.mxu0 0.0
    %3032 = vmatprep.subr.mxu0 0.0
    %3033 = vmatpush1.xpose.msra.mxu0 0.0
    %3034 = vmatprep.subr.mxu0 0.0
    %3035 = vmatpush1.xpose.msra.mxu0 0.0
    %3036 = vmatprep.subr.mxu0 0.0
    %3037 = vmatpush1.xpose.msra.mxu0 0.0
    %3038 = vmatprep.subr.mxu0 0.0
    %3039 = vmatpush1.xpose.msra.mxu0 0.0
    %3040 = vmatprep.subr.mxu0 0.0
    %3041 = vmatpush1.xpose.msra.mxu0 0.0
    %3042 = vmatprep.subr.mxu0 0.0
    %3043 = vmatpush1.xpose.msra.mxu0 0.0
    %3044 = vmatprep.subr.mxu0 0.0
    %3045 = vmatpush1.xpose.msra.mxu0 0.0
    %3046 = vmatprep.subr.mxu0 0.0
    %3047 = vmatpush1.xpose.msra.mxu0 0.0
    %3048 = vmatprep.subr.mxu0 0.0
    %3049 = vmatpush1.xpose.msra.mxu0 0.0
    %3050 = vmatprep.subr.mxu0 0.0
    %3051 = vmatpush1.xpose.msra.mxu0 0.0
    %3052 = vmatprep.subr.mxu0 0.0
    %3053 = vmatpush1.xpose.msra.mxu0 0.0
    %3054 = vmatprep.subr.mxu0 0.0
    %3055 = vmatpush1.xpose.msra.mxu0 0.0
    %3056 = vmatprep.subr.mxu0 0.0
    %3057 = vmatpush1.xpose.msra.mxu0 0.0
    %3058 = vmatprep.subr.mxu0 0.0
    %3059 = vmatpush1.xpose.msra.mxu0 0.0
    %3060 = vmatprep.subr.mxu0 0.0
    %3061 = vmatpush1.xpose.msra.mxu0 0.0
    %3062 = vmatprep.subr.mxu0 0.0
    %3063 = vmatpush1.xpose.msra.mxu0 0.0
    %3064 = vmatprep.subr.mxu0 0.0
    %3065 = vmatpush1.xpose.msra.mxu0 0.0
    %3066 = vmatprep.subr.mxu0 0.0
    %3067 = vmatpush1.xpose.msra.mxu0 0.0
    %3068 = vmatprep.subr.mxu0 0.0
    %3069 = vmatpush1.xpose.msra.mxu0 0.0
    %3070 = vmatprep.subr.mxu0 0.0
    %3071 = vmatpush1.xpose.msra.mxu0 0.0
    %3072 = vmatprep.subr.mxu0 0.0
    %3073 = vmatpush1.xpose.msra.mxu0 0.0
    %3074 = vmatprep.subr.mxu0 0.0
    %3075 = vmatpush1.xpose.msra.mxu0 0.0
    %3076 = vmatprep.subr.mxu0 0.0
    %3077 = vmatpush1.xpose.msra.mxu0 0.0
    %3078 = vmatprep.subr.mxu0 0.0
    %3079 = vmatpush1.xpose.msra.mxu0 0.0
    %3080 = vmatprep.subr.mxu0 0.0
    %3081 = vmatpush1.xpose.msra.mxu0 0.0
    %3082 = vmatprep.subr.mxu0 0.0
    %3083 = vmatpush1.xpose.msra.mxu0 0.0
    %3084 = vmatprep.mubr.f32.mxu0 0.0
    %3085 = vmatmul.mubr.f32.gmra.mrb[0].mxu0 %v3016
    %v3086 = vpop.f32.mrb[0].mxu0
    %v3087 = vadd.f32 0.0, %v3086
    %v3088 = vpop.f32.mrb[0].mxu0
    %3089 = vdwg.mxu0
    %v3090 = vsel %vm421, %v3087, -inf
    %3091 = vmax.xlane.f32.xlu0 %v3090
    %v3092 = vpop.xlane.xlu0 %3091
    %v3093 = vsub.f32 %v3087, %v3092
    %v3094 = vmul.f32 %v3093, 1.442695
    %v3095 = vpow.pop %v3094
    %v3096 = vsel %vm421, %v3095, 0.0
    %3097 = vadd.xlane.f32.xlu0 %v3096
    %v3098 = vpop.xlane.xlu0 %3097
    %v3099 = vrcp.pop %v3098
    %v3100 = vmul.f32 %v3095, %v3099
    %v3102 = vsel %vm421, %v3100, 0
    %3104 = vmatprep.subr.mxu0 0.0
    %3105 = vmatpush1.msra.mxu0 %v2335
    %3106 = vmatprep.subr.mxu0 0.0
    %3107 = vmatpush1.msra.mxu0 0.0
    %3108 = vmatprep.subr.mxu0 0.0
    %3109 = vmatpush1.msra.mxu0 0.0
    %3110 = vmatprep.subr.mxu0 0.0
    %3111 = vmatpush1.msra.mxu0 0.0
    %3112 = vmatprep.subr.mxu0 0.0
    %3113 = vmatpush1.msra.mxu0 0.0
    %3114 = vmatprep.subr.mxu0 0.0
    %3115 = vmatpush1.msra.mxu0 0.0
    %3116 = vmatprep.subr.mxu0 0.0
    %3117 = vmatpush1.msra.mxu0 0.0
    %3118 = vmatprep.subr.mxu0 0.0
    %3119 = vmatpush1.msra.mxu0 0.0
    %3120 = vmatprep.subr.mxu0 0.0
    %3121 = vmatpush1.msra.mxu0 0.0
    %3122 = vmatprep.subr.mxu0 0.0
    %3123 = vmatpush1.msra.mxu0 0.0
    %3124 = vmatprep.subr.mxu0 0.0
    %3125 = vmatpush1.msra.mxu0 0.0
    %3126 = vmatprep.subr.mxu0 0.0
    %3127 = vmatpush1.msra.mxu0 0.0
    %3128 = vmatprep.subr.mxu0 0.0
    %3129 = vmatpush1.msra.mxu0 0.0
    %3130 = vmatprep.subr.mxu0 0.0
    %3131 = vmatpush1.msra.mxu0 0.0
    %3132 = vmatprep.subr.mxu0 0.0
    %3133 = vmatpush1.msra.mxu0 0.0
    %3134 = vmatprep.subr.mxu0 0.0
    %3135 = vmatpush1.msra.mxu0 0.0
    %3136 = vmatprep.subr.mxu0 0.0
    %3137 = vmatpush1.msra.mxu0 0.0
    %3138 = vmatprep.subr.mxu0 0.0
    %3139 = vmatpush1.msra.mxu0 0.0
    %3140 = vmatprep.subr.mxu0 0.0
    %3141 = vmatpush1.msra.mxu0 0.0
    %3142 = vmatprep.subr.mxu0 0.0
    %3143 = vmatpush1.msra.mxu0 0.0
    %3144 = vmatprep.subr.mxu0 0.0
    %3145 = vmatpush1.msra.mxu0 0.0
    %3146 = vmatprep.subr.mxu0 0.0
    %3147 = vmatpush1.msra.mxu0 0.0
    %3148 = vmatprep.subr.mxu0 0.0
    %3149 = vmatpush1.msra.mxu0 0.0
    %3150 = vmatprep.subr.mxu0 0.0
    %3151 = vmatpush1.msra.mxu0 0.0
    %3152 = vmatprep.subr.mxu0 0.0
    %3153 = vmatpush1.msra.mxu0 0.0
    %3154 = vmatprep.subr.mxu0 0.0
    %3155 = vmatpush1.msra.mxu0 0.0
    %3156 = vmatprep.subr.mxu0 0.0
    %3157 = vmatpush1.msra.mxu0 0.0
    %3158 = vmatprep.subr.mxu0 0.0
    %3159 = vmatpush1.msra.mxu0 0.0
    %3160 = vmatprep.subr.mxu0 0.0
    %3161 = vmatpush1.msra.mxu0 0.0
    %3162 = vmatprep.subr.mxu0 0.0
    %3163 = vmatpush1.msra.mxu0 0.0
    %3164 = vmatprep.subr.mxu0 0.0
    %3165 = vmatpush1.msra.mxu0 0.0
    %3166 = vmatprep.subr.mxu0 0.0
    %3167 = vmatpush1.msra.mxu0 0.0
    %3168 = vmatprep.mubr.f32.mxu0 0.0
    %3169 = vmatmul.mubr.f32.gmra.mrb[0].mxu0 %v3102
    %v3170 = vpop.f32.mrb[0].mxu0
    %v3171 = vadd.f32 0.0, %v3170
    %v3172 = vpop.f32.mrb[0].mxu0
    %3173 = vdwg.mxu0
    %3174 = vrot.lane.b32.xlu0 %v2338, 112
    %v3175 = vpop.permute.xlu0 %3174
    %3176 = vrot.lane.b32.xlu0 %v2333, 48
    %v3177 = vpop.permute.xlu0 %3176
    %v3178 = vsel %vm345, %v3175, 0
    %v3180 = vsel %vm345, %v3177, 0
    %3182 = vmatprep.subr.mxu0 0.0
    %3183 = vmatpush1.xpose.msra.mxu0 %v3180
    %3184 = vmatprep.subr.mxu0 0.0
    %3185 = vmatpush1.xpose.msra.mxu0 0.0
    %3186 = vmatprep.subr.mxu0 0.0
    %3187 = vmatpush1.xpose.msra.mxu0 0.0
    %3188 = vmatprep.subr.mxu0 0.0
    %3189 = vmatpush1.xpose.msra.mxu0 0.0
    %3190 = vmatprep.subr.mxu0 0.0
    %3191 = vmatpush1.xpose.msra.mxu0 0.0
    %3192 = vmatprep.subr.mxu0 0.0
    %3193 = vmatpush1.xpose.msra.mxu0 0.0
    %3194 = vmatprep.subr.mxu0 0.0
    %3195 = vmatpush1.xpose.msra.mxu0 0.0
    %3196 = vmatprep.subr.mxu0 0.0
    %3197 = vmatpush1.xpose.msra.mxu0 0.0
    %3198 = vmatprep.subr.mxu0 0.0
    %3199 = vmatpush1.xpose.msra.mxu0 0.0
    %3200 = vmatprep.subr.mxu0 0.0
    %3201 = vmatpush1.xpose.msra.mxu0 0.0
    %3202 = vmatprep.subr.mxu0 0.0
    %3203 = vmatpush1.xpose.msra.mxu0 0.0
    %3204 = vmatprep.subr.mxu0 0.0
    %3205 = vmatpush1.xpose.msra.mxu0 0.0
    %3206 = vmatprep.subr.mxu0 0.0
    %3207 = vmatpush1.xpose.msra.mxu0 0.0
    %3208 = vmatprep.subr.mxu0 0.0
    %3209 = vmatpush1.xpose.msra.mxu0 0.0
    %3210 = vmatprep.subr.mxu0 0.0
    %3211 = vmatpush1.xpose.msra.mxu0 0.0
    %3212 = vmatprep.subr.mxu0 0.0
    %3213 = vmatpush1.xpose.msra.mxu0 0.0
    %3214 = vmatprep.subr.mxu0 0.0
    %3215 = vmatpush1.xpose.msra.mxu0 0.0
    %3216 = vmatprep.subr.mxu0 0.0
    %3217 = vmatpush1.xpose.msra.mxu0 0.0
    %3218 = vmatprep.subr.mxu0 0.0
    %3219 = vmatpush1.xpose.msra.mxu0 0.0
    %3220 = vmatprep.subr.mxu0 0.0
    %3221 = vmatpush1.xpose.msra.mxu0 0.0
    %3222 = vmatprep.subr.mxu0 0.0
    %3223 = vmatpush1.xpose.msra.mxu0 0.0
    %3224 = vmatprep.subr.mxu0 0.0
    %3225 = vmatpush1.xpose.msra.mxu0 0.0
    %3226 = vmatprep.subr.mxu0 0.0
    %3227 = vmatpush1.xpose.msra.mxu0 0.0
    %3228 = vmatprep.subr.mxu0 0.0
    %3229 = vmatpush1.xpose.msra.mxu0 0.0
    %3230 = vmatprep.subr.mxu0 0.0
    %3231 = vmatpush1.xpose.msra.mxu0 0.0
    %3232 = vmatprep.subr.mxu0 0.0
    %3233 = vmatpush1.xpose.msra.mxu0 0.0
    %3234 = vmatprep.subr.mxu0 0.0
    %3235 = vmatpush1.xpose.msra.mxu0 0.0
    %3236 = vmatprep.subr.mxu0 0.0
    %3237 = vmatpush1.xpose.msra.mxu0 0.0
    %3238 = vmatprep.subr.mxu0 0.0
    %3239 = vmatpush1.xpose.msra.mxu0 0.0
    %3240 = vmatprep.subr.mxu0 0.0
    %3241 = vmatpush1.xpose.msra.mxu0 0.0
    %3242 = vmatprep.subr.mxu0 0.0
    %3243 = vmatpush1.xpose.msra.mxu0 0.0
    %3244 = vmatprep.subr.mxu0 0.0
    %3245 = vmatpush1.xpose.msra.mxu0 0.0
    %3246 = vmatprep.mubr.f32.mxu0 0.0
    %3247 = vmatmul.mubr.f32.gmra.mrb[0].mxu0 %v3178
    %v3248 = vpop.f32.mrb[0].mxu0
    %v3249 = vadd.f32 0.0, %v3248
    %v3250 = vpop.f32.mrb[0].mxu0
    %3251 = vdwg.mxu0
    %v3252 = vsel %vm421, %v3249, -inf
    %3253 = vmax.xlane.f32.xlu0 %v3252
    %v3254 = vpop.xlane.xlu0 %3253
    %v3255 = vsub.f32 %v3249, %v3254
    %v3256 = vmul.f32 %v3255, 1.442695
    %v3257 = vpow.pop %v3256
    %v3258 = vsel %vm421, %v3257, 0.0
    %3259 = vadd.xlane.f32.xlu0 %v3258
    %v3260 = vpop.xlane.xlu0 %3259
    %v3261 = vrcp.pop %v3260
    %v3262 = vmul.f32 %v3257, %v3261
    %3264 = vrot.lane.b32.xlu0 %v2335, 112
    %v3265 = vpop.permute.xlu0 %3264
    %v3268 = vsel %vm421, %v3262, 0
    %3270 = vmatprep.subr.mxu0 0.0
    %3271 = vmatpush1.msra.mxu0 %v3265
    %3272 = vmatprep.subr.mxu0 0.0
    %3273 = vmatpush1.msra.mxu0 0.0
    %3274 = vmatprep.subr.mxu0 0.0
    %3275 = vmatpush1.msra.mxu0 0.0
    %3276 = vmatprep.subr.mxu0 0.0
    %3277 = vmatpush1.msra.mxu0 0.0
    %3278 = vmatprep.subr.mxu0 0.0
    %3279 = vmatpush1.msra.mxu0 0.0
    %3280 = vmatprep.subr.mxu0 0.0
    %3281 = vmatpush1.msra.mxu0 0.0
    %3282 = vmatprep.subr.mxu0 0.0
    %3283 = vmatpush1.msra.mxu0 0.0
    %3284 = vmatprep.subr.mxu0 0.0
    %3285 = vmatpush1.msra.mxu0 0.0
    %3286 = vmatprep.subr.mxu0 0.0
    %3287 = vmatpush1.msra.mxu0 0.0
    %3288 = vmatprep.subr.mxu0 0.0
    %3289 = vmatpush1.msra.mxu0 0.0
    %3290 = vmatprep.subr.mxu0 0.0
    %3291 = vmatpush1.msra.mxu0 0.0
    %3292 = vmatprep.subr.mxu0 0.0
    %3293 = vmatpush1.msra.mxu0 0.0
    %3294 = vmatprep.subr.mxu0 0.0
    %3295 = vmatpush1.msra.mxu0 0.0
    %3296 = vmatprep.subr.mxu0 0.0
    %3297 = vmatpush1.msra.mxu0 0.0
    %3298 = vmatprep.subr.mxu0 0.0
    %3299 = vmatpush1.msra.mxu0 0.0
    %3300 = vmatprep.subr.mxu0 0.0
    %3301 = vmatpush1.msra.mxu0 0.0
    %3302 = vmatprep.subr.mxu0 0.0
    %3303 = vmatpush1.msra.mxu0 0.0
    %3304 = vmatprep.subr.mxu0 0.0
    %3305 = vmatpush1.msra.mxu0 0.0
    %3306 = vmatprep.subr.mxu0 0.0
    %3307 = vmatpush1.msra.mxu0 0.0
    %3308 = vmatprep.subr.mxu0 0.0
    %3309 = vmatpush1.msra.mxu0 0.0
    %3310 = vmatprep.subr.mxu0 0.0
    %3311 = vmatpush1.msra.mxu0 0.0
    %3312 = vmatprep.subr.mxu0 0.0
    %3313 = vmatpush1.msra.mxu0 0.0
    %3314 = vmatprep.subr.mxu0 0.0
    %3315 = vmatpush1.msra.mxu0 0.0
    %3316 = vmatprep.subr.mxu0 0.0
    %3317 = vmatpush1.msra.mxu0 0.0
    %3318 = vmatprep.subr.mxu0 0.0
    %3319 = vmatpush1.msra.mxu0 0.0
    %3320 = vmatprep.subr.mxu0 0.0
    %3321 = vmatpush1.msra.mxu0 0.0
    %3322 = vmatprep.subr.mxu0 0.0
    %3323 = vmatpush1.msra.mxu0 0.0
    %3324 = vmatprep.subr.mxu0 0.0
    %3325 = vmatpush1.msra.mxu0 0.0
    %3326 = vmatprep.subr.mxu0 0.0
    %3327 = vmatpush1.msra.mxu0 0.0
    %3328 = vmatprep.subr.mxu0 0.0
    %3329 = vmatpush1.msra.mxu0 0.0
    %3330 = vmatprep.subr.mxu0 0.0
    %3331 = vmatpush1.msra.mxu0 0.0
    %3332 = vmatprep.subr.mxu0 0.0
    %3333 = vmatpush1.msra.mxu0 0.0
    %3334 = vmatprep.mubr.f32.mxu0 0.0
    %3335 = vmatmul.mubr.f32.gmra.mrb[0].mxu0 %v3268
    %v3336 = vpop.f32.mrb[0].mxu0
    %v3337 = vadd.f32 0.0, %v3336
    %v3338 = vpop.f32.mrb[0].mxu0
    %3339 = vdwg.mxu0
    %3340 = vrot.lane.b32.xlu0 %v2338, 96
    %v3341 = vpop.permute.xlu0 %3340
    %3342 = vrot.lane.b32.xlu0 %v2333, 32
    %v3343 = vpop.permute.xlu0 %3342
    %v3344 = vsel %vm345, %v3341, 0
    %v3346 = vsel %vm345, %v3343, 0
    %3348 = vmatprep.subr.mxu0 0.0
    %3349 = vmatpush1.xpose.msra.mxu0 %v3346
    %3350 = vmatprep.subr.mxu0 0.0
    %3351 = vmatpush1.xpose.msra.mxu0 0.0
    %3352 = vmatprep.subr.mxu0 0.0
    %3353 = vmatpush1.xpose.msra.mxu0 0.0
    %3354 = vmatprep.subr.mxu0 0.0
    %3355 = vmatpush1.xpose.msra.mxu0 0.0
    %3356 = vmatprep.subr.mxu0 0.0
    %3357 = vmatpush1.xpose.msra.mxu0 0.0
    %3358 = vmatprep.subr.mxu0 0.0
    %3359 = vmatpush1.xpose.msra.mxu0 0.0
    %3360 = vmatprep.subr.mxu0 0.0
    %3361 = vmatpush1.xpose.msra.mxu0 0.0
    %3362 = vmatprep.subr.mxu0 0.0
    %3363 = vmatpush1.xpose.msra.mxu0 0.0
    %3364 = vmatprep.subr.mxu0 0.0
    %3365 = vmatpush1.xpose.msra.mxu0 0.0
    %3366 = vmatprep.subr.mxu0 0.0
    %3367 = vmatpush1.xpose.msra.mxu0 0.0
    %3368 = vmatprep.subr.mxu0 0.0
    %3369 = vmatpush1.xpose.msra.mxu0 0.0
    %3370 = vmatprep.subr.mxu0 0.0
    %3371 = vmatpush1.xpose.msra.mxu0 0.0
    %3372 = vmatprep.subr.mxu0 0.0
    %3373 = vmatpush1.xpose.msra.mxu0 0.0
    %3374 = vmatprep.subr.mxu0 0.0
    %3375 = vmatpush1.xpose.msra.mxu0 0.0
    %3376 = vmatprep.subr.mxu0 0.0
    %3377 = vmatpush1.xpose.msra.mxu0 0.0
    %3378 = vmatprep.subr.mxu0 0.0
    %3379 = vmatpush1.xpose.msra.mxu0 0.0
    %3380 = vmatprep.subr.mxu0 0.0
    %3381 = vmatpush1.xpose.msra.mxu0 0.0
    %3382 = vmatprep.subr.mxu0 0.0
    %3383 = vmatpush1.xpose.msra.mxu0 0.0
    %3384 = vmatprep.subr.mxu0 0.0
    %3385 = vmatpush1.xpose.msra.mxu0 0.0
    %3386 = vmatprep.subr.mxu0 0.0
    %3387 = vmatpush1.xpose.msra.mxu0 0.0
    %3388 = vmatprep.subr.mxu0 0.0
    %3389 = vmatpush1.xpose.msra.mxu0 0.0
    %3390 = vmatprep.subr.mxu0 0.0
    %3391 = vmatpush1.xpose.msra.mxu0 0.0
    %3392 = vmatprep.subr.mxu0 0.0
    %3393 = vmatpush1.xpose.msra.mxu0 0.0
    %3394 = vmatprep.subr.mxu0 0.0
    %3395 = vmatpush1.xpose.msra.mxu0 0.0
    %3396 = vmatprep.subr.mxu0 0.0
    %3397 = vmatpush1.xpose.msra.mxu0 0.0
    %3398 = vmatprep.subr.mxu0 0.0
    %3399 = vmatpush1.xpose.msra.mxu0 0.0
    %3400 = vmatprep.subr.mxu0 0.0
    %3401 = vmatpush1.xpose.msra.mxu0 0.0
    %3402 = vmatprep.subr.mxu0 0.0
    %3403 = vmatpush1.xpose.msra.mxu0 0.0
    %3404 = vmatprep.subr.mxu0 0.0
    %3405 = vmatpush1.xpose.msra.mxu0 0.0
    %3406 = vmatprep.subr.mxu0 0.0
    %3407 = vmatpush1.xpose.msra.mxu0 0.0
    %3408 = vmatprep.subr.mxu0 0.0
    %3409 = vmatpush1.xpose.msra.mxu0 0.0
    %3410 = vmatprep.subr.mxu0 0.0
    %3411 = vmatpush1.xpose.msra.mxu0 0.0
    %3412 = vmatprep.mubr.f32.mxu0 0.0
    %3413 = vmatmul.mubr.f32.gmra.mrb[0].mxu0 %v3344
    %v3414 = vpop.f32.mrb[0].mxu0
    %v3415 = vadd.f32 0.0, %v3414
    %v3416 = vpop.f32.mrb[0].mxu0
    %3417 = vdwg.mxu0
    %v3418 = vsel %vm421, %v3415, -inf
    %3419 = vmax.xlane.f32.xlu0 %v3418
    %v3420 = vpop.xlane.xlu0 %3419
    %v3421 = vsub.f32 %v3415, %v3420
    %v3422 = vmul.f32 %v3421, 1.442695
    %v3423 = vpow.pop %v3422
    %v3424 = vsel %vm421, %v3423, 0.0
    %3425 = vadd.xlane.f32.xlu0 %v3424
    %v3426 = vpop.xlane.xlu0 %3425
    %v3427 = vrcp.pop %v3426
    %v3428 = vmul.f32 %v3423, %v3427
    %3429 = vrot.lane.b32.xlu0 %v2335, 96
    %v3430 = vpop.permute.xlu0 %3429
    %v3433 = vsel %vm421, %v3428, 0
    %3435 = vmatprep.subr.mxu0 0.0
    %3436 = vmatpush1.msra.mxu0 %v3430
    %3437 = vmatprep.subr.mxu0 0.0
    %3438 = vmatpush1.msra.mxu0 0.0
    %3439 = vmatprep.subr.mxu0 0.0
    %3440 = vmatpush1.msra.mxu0 0.0
    %3441 = vmatprep.subr.mxu0 0.0
    %3442 = vmatpush1.msra.mxu0 0.0
    %3443 = vmatprep.subr.mxu0 0.0
    %3444 = vmatpush1.msra.mxu0 0.0
    %3445 = vmatprep.subr.mxu0 0.0
    %3446 = vmatpush1.msra.mxu0 0.0
    %3447 = vmatprep.subr.mxu0 0.0
    %3448 = vmatpush1.msra.mxu0 0.0
    %3449 = vmatprep.subr.mxu0 0.0
    %3450 = vmatpush1.msra.mxu0 0.0
    %3451 = vmatprep.subr.mxu0 0.0
    %3452 = vmatpush1.msra.mxu0 0.0
    %3453 = vmatprep.subr.mxu0 0.0
    %3454 = vmatpush1.msra.mxu0 0.0
    %3455 = vmatprep.subr.mxu0 0.0
    %3456 = vmatpush1.msra.mxu0 0.0
    %3457 = vmatprep.subr.mxu0 0.0
    %3458 = vmatpush1.msra.mxu0 0.0
    %3459 = vmatprep.subr.mxu0 0.0
    %3460 = vmatpush1.msra.mxu0 0.0
    %3461 = vmatprep.subr.mxu0 0.0
    %3462 = vmatpush1.msra.mxu0 0.0
    %3463 = vmatprep.subr.mxu0 0.0
    %3464 = vmatpush1.msra.mxu0 0.0
    %3465 = vmatprep.subr.mxu0 0.0
    %3466 = vmatpush1.msra.mxu0 0.0
    %3467 = vmatprep.subr.mxu0 0.0
    %3468 = vmatpush1.msra.mxu0 0.0
    %3469 = vmatprep.subr.mxu0 0.0
    %3470 = vmatpush1.msra.mxu0 0.0
    %3471 = vmatprep.subr.mxu0 0.0
    %3472 = vmatpush1.msra.mxu0 0.0
    %3473 = vmatprep.subr.mxu0 0.0
    %3474 = vmatpush1.msra.mxu0 0.0
    %3475 = vmatprep.subr.mxu0 0.0
    %3476 = vmatpush1.msra.mxu0 0.0
    %3477 = vmatprep.subr.mxu0 0.0
    %3478 = vmatpush1.msra.mxu0 0.0
    %3479 = vmatprep.subr.mxu0 0.0
    %3480 = vmatpush1.msra.mxu0 0.0
    %3481 = vmatprep.subr.mxu0 0.0
    %3482 = vmatpush1.msra.mxu0 0.0
    %3483 = vmatprep.subr.mxu0 0.0
    %3484 = vmatpush1.msra.mxu0 0.0
    %3485 = vmatprep.subr.mxu0 0.0
    %3486 = vmatpush1.msra.mxu0 0.0
    %3487 = vmatprep.subr.mxu0 0.0
    %3488 = vmatpush1.msra.mxu0 0.0
    %3489 = vmatprep.subr.mxu0 0.0
    %3490 = vmatpush1.msra.mxu0 0.0
    %3491 = vmatprep.subr.mxu0 0.0
    %3492 = vmatpush1.msra.mxu0 0.0
    %3493 = vmatprep.subr.mxu0 0.0
    %3494 = vmatpush1.msra.mxu0 0.0
    %3495 = vmatprep.subr.mxu0 0.0
    %3496 = vmatpush1.msra.mxu0 0.0
    %3497 = vmatprep.subr.mxu0 0.0
    %3498 = vmatpush1.msra.mxu0 0.0
    %3499 = vmatprep.mubr.f32.mxu0 0.0
    %3500 = vmatmul.mubr.f32.gmra.mrb[0].mxu0 %v3433
    %v3501 = vpop.f32.mrb[0].mxu0
    %v3502 = vadd.f32 0.0, %v3501
    %v3503 = vpop.f32.mrb[0].mxu0
    %3504 = vdwg.mxu0
    %3505 = vrot.lane.b32.xlu0 %v2338, 80
    %v3506 = vpop.permute.xlu0 %3505
    %3507 = vrot.lane.b32.xlu0 %v2333, 16
    %v3508 = vpop.permute.xlu0 %3507
    %v3509 = vsel %vm345, %v3506, 0
    %v3511 = vsel %vm345, %v3508, 0
    %3513 = vmatprep.subr.mxu0 0.0
    %3514 = vmatpush1.xpose.msra.mxu0 %v3511
    %3515 = vmatprep.subr.mxu0 0.0
    %3516 = vmatpush1.xpose.msra.mxu0 0.0
    %3517 = vmatprep.subr.mxu0 0.0
    %3518 = vmatpush1.xpose.msra.mxu0 0.0
    %3519 = vmatprep.subr.mxu0 0.0
    %3520 = vmatpush1.xpose.msra.mxu0 0.0
    %3521 = vmatprep.subr.mxu0 0.0
    %3522 = vmatpush1.xpose.msra.mxu0 0.0
    %3523 = vmatprep.subr.mxu0 0.0
    %3524 = vmatpush1.xpose.msra.mxu0 0.0
    %3525 = vmatprep.subr.mxu0 0.0
    %3526 = vmatpush1.xpose.msra.mxu0 0.0
    %3527 = vmatprep.subr.mxu0 0.0
    %3528 = vmatpush1.xpose.msra.mxu0 0.0
    %3529 = vmatprep.subr.mxu0 0.0
    %3530 = vmatpush1.xpose.msra.mxu0 0.0
    %3531 = vmatprep.subr.mxu0 0.0
    %3532 = vmatpush1.xpose.msra.mxu0 0.0
    %3533 = vmatprep.subr.mxu0 0.0
    %3534 = vmatpush1.xpose.msra.mxu0 0.0
    %3535 = vmatprep.subr.mxu0 0.0
    %3536 = vmatpush1.xpose.msra.mxu0 0.0
    %3537 = vmatprep.subr.mxu0 0.0
    %3538 = vmatpush1.xpose.msra.mxu0 0.0
    %3539 = vmatprep.subr.mxu0 0.0
    %3540 = vmatpush1.xpose.msra.mxu0 0.0
    %3541 = vmatprep.subr.mxu0 0.0
    %3542 = vmatpush1.xpose.msra.mxu0 0.0
    %3543 = vmatprep.subr.mxu0 0.0
    %3544 = vmatpush1.xpose.msra.mxu0 0.0
    %3545 = vmatprep.subr.mxu0 0.0
    %3546 = vmatpush1.xpose.msra.mxu0 0.0
    %3547 = vmatprep.subr.mxu0 0.0
    %3548 = vmatpush1.xpose.msra.mxu0 0.0
    %3549 = vmatprep.subr.mxu0 0.0
    %3550 = vmatpush1.xpose.msra.mxu0 0.0
    %3551 = vmatprep.subr.mxu0 0.0
    %3552 = vmatpush1.xpose.msra.mxu0 0.0
    %3553 = vmatprep.subr.mxu0 0.0
    %3554 = vmatpush1.xpose.msra.mxu0 0.0
    %3555 = vmatprep.subr.mxu0 0.0
    %3556 = vmatpush1.xpose.msra.mxu0 0.0
    %3557 = vmatprep.subr.mxu0 0.0
    %3558 = vmatpush1.xpose.msra.mxu0 0.0
    %3559 = vmatprep.subr.mxu0 0.0
    %3560 = vmatpush1.xpose.msra.mxu0 0.0
    %3561 = vmatprep.subr.mxu0 0.0
    %3562 = vmatpush1.xpose.msra.mxu0 0.0
    %3563 = vmatprep.subr.mxu0 0.0
    %3564 = vmatpush1.xpose.msra.mxu0 0.0
    %3565 = vmatprep.subr.mxu0 0.0
    %3566 = vmatpush1.xpose.msra.mxu0 0.0
    %3567 = vmatprep.subr.mxu0 0.0
    %3568 = vmatpush1.xpose.msra.mxu0 0.0
    %3569 = vmatprep.subr.mxu0 0.0
    %3570 = vmatpush1.xpose.msra.mxu0 0.0
    %3571 = vmatprep.subr.mxu0 0.0
    %3572 = vmatpush1.xpose.msra.mxu0 0.0
    %3573 = vmatprep.subr.mxu0 0.0
    %3574 = vmatpush1.xpose.msra.mxu0 0.0
    %3575 = vmatprep.subr.mxu0 0.0
    %3576 = vmatpush1.xpose.msra.mxu0 0.0
    %3577 = vmatprep.mubr.f32.mxu0 0.0
    %3578 = vmatmul.mubr.f32.gmra.mrb[0].mxu0 %v3509
    %v3579 = vpop.f32.mrb[0].mxu0
    %v3580 = vadd.f32 0.0, %v3579
    %v3581 = vpop.f32.mrb[0].mxu0
    %3582 = vdwg.mxu0
    %v3583 = vsel %vm421, %v3580, -inf
    %3584 = vmax.xlane.f32.xlu0 %v3583
    %v3585 = vpop.xlane.xlu0 %3584
    %v3586 = vsub.f32 %v3580, %v3585
    %v3587 = vmul.f32 %v3586, 1.442695
    %v3588 = vpow.pop %v3587
    %v3589 = vsel %vm421, %v3588, 0.0
    %3590 = vadd.xlane.f32.xlu0 %v3589
    %v3591 = vpop.xlane.xlu0 %3590
    %v3592 = vrcp.pop %v3591
    %v3593 = vmul.f32 %v3588, %v3592
    %3594 = vrot.lane.b32.xlu0 %v2335, 80
    %v3595 = vpop.permute.xlu0 %3594
    %v3598 = vsel %vm421, %v3593, 0
    %3600 = vmatprep.subr.mxu0 0.0
    %3601 = vmatpush1.msra.mxu0 %v3595
    %3602 = vmatprep.subr.mxu0 0.0
    %3603 = vmatpush1.msra.mxu0 0.0
    %3604 = vmatprep.subr.mxu0 0.0
    %3605 = vmatpush1.msra.mxu0 0.0
    %3606 = vmatprep.subr.mxu0 0.0
    %3607 = vmatpush1.msra.mxu0 0.0
    %3608 = vmatprep.subr.mxu0 0.0
    %3609 = vmatpush1.msra.mxu0 0.0
    %3610 = vmatprep.subr.mxu0 0.0
    %3611 = vmatpush1.msra.mxu0 0.0
    %3612 = vmatprep.subr.mxu0 0.0
    %3613 = vmatpush1.msra.mxu0 0.0
    %3614 = vmatprep.subr.mxu0 0.0
    %3615 = vmatpush1.msra.mxu0 0.0
    %3616 = vmatprep.subr.mxu0 0.0
    %3617 = vmatpush1.msra.mxu0 0.0
    %3618 = vmatprep.subr.mxu0 0.0
    %3619 = vmatpush1.msra.mxu0 0.0
    %3620 = vmatprep.subr.mxu0 0.0
    %3621 = vmatpush1.msra.mxu0 0.0
    %3622 = vmatprep.subr.mxu0 0.0
    %3623 = vmatpush1.msra.mxu0 0.0
    %3624 = vmatprep.subr.mxu0 0.0
    %3625 = vmatpush1.msra.mxu0 0.0
    %3626 = vmatprep.subr.mxu0 0.0
    %3627 = vmatpush1.msra.mxu0 0.0
    %3628 = vmatprep.subr.mxu0 0.0
    %3629 = vmatpush1.msra.mxu0 0.0
    %3630 = vmatprep.subr.mxu0 0.0
    %3631 = vmatpush1.msra.mxu0 0.0
    %3632 = vmatprep.subr.mxu0 0.0
    %3633 = vmatpush1.msra.mxu0 0.0
    %3634 = vmatprep.subr.mxu0 0.0
    %3635 = vmatpush1.msra.mxu0 0.0
    %3636 = vmatprep.subr.mxu0 0.0
    %3637 = vmatpush1.msra.mxu0 0.0
    %3638 = vmatprep.subr.mxu0 0.0
    %3639 = vmatpush1.msra.mxu0 0.0
    %3640 = vmatprep.subr.mxu0 0.0
    %3641 = vmatpush1.msra.mxu0 0.0
    %3642 = vmatprep.subr.mxu0 0.0
    %3643 = vmatpush1.msra.mxu0 0.0
    %3644 = vmatprep.subr.mxu0 0.0
    %3645 = vmatpush1.msra.mxu0 0.0
    %3646 = vmatprep.subr.mxu0 0.0
    %3647 = vmatpush1.msra.mxu0 0.0
    %3648 = vmatprep.subr.mxu0 0.0
    %3649 = vmatpush1.msra.mxu0 0.0
    %3650 = vmatprep.subr.mxu0 0.0
    %3651 = vmatpush1.msra.mxu0 0.0
    %3652 = vmatprep.subr.mxu0 0.0
    %3653 = vmatpush1.msra.mxu0 0.0
    %3654 = vmatprep.subr.mxu0 0.0
    %3655 = vmatpush1.msra.mxu0 0.0
    %3656 = vmatprep.subr.mxu0 0.0
    %3657 = vmatpush1.msra.mxu0 0.0
    %3658 = vmatprep.subr.mxu0 0.0
    %3659 = vmatpush1.msra.mxu0 0.0
    %3660 = vmatprep.subr.mxu0 0.0
    %3661 = vmatpush1.msra.mxu0 0.0
    %3662 = vmatprep.subr.mxu0 0.0
    %3663 = vmatpush1.msra.mxu0 0.0
    %3664 = vmatprep.mubr.f32.mxu0 0.0
    %3665 = vmatmul.mubr.f32.gmra.mrb[0].mxu0 %v3598
    %v3666 = vpop.f32.mrb[0].mxu0
    %v3667 = vadd.f32 0.0, %v3666
    %v3668 = vpop.f32.mrb[0].mxu0
    %3669 = vdwg.mxu0
    %3671 = vrot.lane.b32.xlu0 %v3337, 16
    %v3672 = vpop.permute.xlu0 %3671
    %3675 = vrot.lane.b32.xlu0 %v3502, 32
    %v3676 = vpop.permute.xlu0 %3675
    %3679 = vrot.lane.b32.xlu0 %v3667, 48
    %v3680 = vpop.permute.xlu0 %3679
    %v3682 = vsel %vm345, %v3171, %v3672
    %v3683 = vsel %vm1015, %v3682, %v3676
    %v3684 = vsel %vm1017, %v3683, %v3680
    %v3686 = vlaneseq
    %v3687 = vshrl.u32 %v3686, 7
    %v3688 = vsub.s32 0, %v3687
    %v3689 = vrot.slane %v2180, %v3688
    %v3692 = vsel %vm256, %v3011, 0
    %v3695 = vsel %vm256, %v3684, 0
    %3697 = vmatprep.subr.mxu0 0.0
    %3698 = vmatpush1.msra.mxu0 %v2171
    %3699 = vmatprep.subr.mxu0 0.0
    %3700 = vmatpush1.msra.mxu0 %v2172
    %3701 = vmatprep.subr.mxu0 0.0
    %3702 = vmatpush1.msra.mxu0 %v2173
    %3703 = vmatprep.subr.mxu0 0.0
    %3704 = vmatpush1.msra.mxu0 %v2174
    %3705 = vmatprep.subr.mxu0 0.0
    %3706 = vmatpush1.msra.mxu0 %v2175
    %3707 = vmatprep.subr.mxu0 0.0
    %3708 = vmatpush1.msra.mxu0 %v2176
    %3709 = vmatprep.subr.mxu0 0.0
    %3710 = vmatpush1.msra.mxu0 %v2177
    %3711 = vmatprep.subr.mxu0 0.0
    %3712 = vmatpush1.msra.mxu0 %v2178
    %3713 = vmatprep.subr.mxu0 0.0
    %3714 = vmatpush1.msra.mxu0 0.0
    %3715 = vmatprep.subr.mxu0 0.0
    %3716 = vmatpush1.msra.mxu0 0.0
    %3717 = vmatprep.subr.mxu0 0.0
    %3718 = vmatpush1.msra.mxu0 0.0
    %3719 = vmatprep.subr.mxu0 0.0
    %3720 = vmatpush1.msra.mxu0 0.0
    %3721 = vmatprep.subr.mxu0 0.0
    %3722 = vmatpush1.msra.mxu0 0.0
    %3723 = vmatprep.subr.mxu0 0.0
    %3724 = vmatpush1.msra.mxu0 0.0
    %3725 = vmatprep.subr.mxu0 0.0
    %3726 = vmatpush1.msra.mxu0 0.0
    %3727 = vmatprep.subr.mxu0 0.0
    %3728 = vmatpush1.msra.mxu0 0.0
    %3729 = vmatprep.subr.mxu0 0.0
    %3730 = vmatpush1.msra.mxu0 0.0
    %3731 = vmatprep.subr.mxu0 0.0
    %3732 = vmatpush1.msra.mxu0 0.0
    %3733 = vmatprep.subr.mxu0 0.0
    %3734 = vmatpush1.msra.mxu0 0.0
    %3735 = vmatprep.subr.mxu0 0.0
    %3736 = vmatpush1.msra.mxu0 0.0
    %3737 = vmatprep.subr.mxu0 0.0
    %3738 = vmatpush1.msra.mxu0 0.0
    %3739 = vmatprep.subr.mxu0 0.0
    %3740 = vmatpush1.msra.mxu0 0.0
    %3741 = vmatprep.subr.mxu0 0.0
    %3742 = vmatpush1.msra.mxu0 0.0
    %3743 = vmatprep.subr.mxu0 0.0
    %3744 = vmatpush1.msra.mxu0 0.0
    %3745 = vmatprep.subr.mxu0 0.0
    %3746 = vmatpush1.msra.mxu0 0.0
    %3747 = vmatprep.subr.mxu0 0.0
    %3748 = vmatpush1.msra.mxu0 0.0
    %3749 = vmatprep.subr.mxu0 0.0
    %3750 = vmatpush1.msra.mxu0 0.0
    %3751 = vmatprep.subr.mxu0 0.0
    %3752 = vmatpush1.msra.mxu0 0.0
    %3753 = vmatprep.subr.mxu0 0.0
    %3754 = vmatpush1.msra.mxu0 0.0
    %3755 = vmatprep.subr.mxu0 0.0
    %3756 = vmatpush1.msra.mxu0 0.0
    %3757 = vmatprep.subr.mxu0 0.0
    %3758 = vmatpush1.msra.mxu0 0.0
    %3759 = vmatprep.subr.mxu0 0.0
    %3760 = vmatpush1.msra.mxu0 0.0
    %3761 = vmatprep.mubr.f32.mxu0 0.0
    %3762 = vmatmul.mubr.f32.gmra.mrb[0].mxu0 %v3692
    %v3763 = vpop.f32.mrb[0].mxu0
    %v3764 = vadd.f32 %v3689, %v3763
    %v3765 = vpop.f32.mrb[0].mxu0
    %3766 = vmatprep.mubr.f32.mxu0 0.0
    %3767 = vmatmul.mubr.f32.gmra.mrb[0].mxu0 %v3695
    %v3768 = vpop.f32.mrb[0].mxu0
    %v3769 = vadd.f32 %v3689, %v3768
    %v3770 = vpop.f32.mrb[0].mxu0
    %3771 = vdwg.mxu0
    %v3772 = vadd.f32 %v2149, %v3764
    %v3773 = vadd.f32 %v2150, %v3769
    %v3774 = vsel %vm256, %v3772, 0.0
    %3775 = vadd.xlane.f32.xlu0 %v3774
    %v3776 = vpop.xlane.xlu0 %3775
    %v3777 = vsel %vm256, %v3773, 0.0
    %3778 = vadd.xlane.f32.xlu0 %v3777
    %v3779 = vpop.xlane.xlu0 %3778
    %v3780 = vmul.f32 %v3776, %v1787
    %v3781 = vmul.f32 %v3779, %v1787
    %v3782 = vsub.f32 %v3772, %v3780
    %v3783 = vsub.f32 %v3773, %v3781
    %v3784 = vmul.f32 %v3782, %v3782
    %v3785 = vmul.f32 %v3783, %v3783
    %v3786 = vsel %vm256, %v3784, 0.0
    %3787 = vadd.xlane.f32.xlu0 %v3786
    %v3788 = vpop.xlane.xlu0 %3787
    %v3789 = vsel %vm256, %v3785, 0.0
    %3790 = vadd.xlane.f32.xlu0 %v3789
    %v3791 = vpop.xlane.xlu0 %3790
    %v3792 = vmul.f32 %v3788, %v1787
    %v3793 = vmul.f32 %v3791, %v1787
    %v3794 = vadd.f32 %v3792, 1e-05
    %v3795 = vadd.f32 %v3793, 1e-05
    %v3796 = vrsqrt.pop %v3794
    %v3797 = vrsqrt.pop %v3795
    %v3798 = vmul.f32 %v3782, %v3796
    %v3799 = vmul.f32 %v3783, %v3797
    %v3801 = vlaneseq
    %v3802 = vshrl.u32 %v3801, 7
    %v3803 = vsub.s32 0, %v3802
    %v3804 = vrot.slane %v2182, %v3803
    %v3806 = vmul.f32 %v3798, %v3804
    %v3807 = vmul.f32 %v3799, %v3804
    %v3809 = vlaneseq
    %v3810 = vshrl.u32 %v3809, 7
    %v3811 = vsub.s32 0, %v3810
    %v3812 = vrot.slane %v2184, %v3811
    %v3814 = vadd.f32 %v3806, %v3812
    %v3815 = vadd.f32 %v3807, %v3812
    %v3817 = vlaneseq
    %v3818 = vshrl.u32 %v3817, 7
    %v3819 = vsub.s32 0, %v3818
    %v3820 = vrot.slane %v2203, %v3819
    %v3821 = vlaneseq
    %v3822 = vshrl.u32 %v3821, 7
    %v3823 = vsub.s32 1, %v3822
    %v3824 = vrot.slane %v2203, %v3823
    %v3828 = vsel %vm256, %v3814, 0
    %v3831 = vsel %vm256, %v3815, 0
    %3833 = vmatprep.subr.mxu0 %v2187
    %3834 = vmatpush1.msra.mxu0 %v2186
    %3835 = vmatprep.subr.mxu0 %v2189
    %3836 = vmatpush1.msra.mxu0 %v2188
    %3837 = vmatprep.subr.mxu0 %v2191
    %3838 = vmatpush1.msra.mxu0 %v2190
    %3839 = vmatprep.subr.mxu0 %v2193
    %3840 = vmatpush1.msra.mxu0 %v2192
    %3841 = vmatprep.subr.mxu0 %v2195
    %3842 = vmatpush1.msra.mxu0 %v2194
    %3843 = vmatprep.subr.mxu0 %v2197
    %3844 = vmatpush1.msra.mxu0 %v2196
    %3845 = vmatprep.subr.mxu0 %v2199
    %3846 = vmatpush1.msra.mxu0 %v2198
    %3847 = vmatprep.subr.mxu0 %v2201
    %3848 = vmatpush1.msra.mxu0 %v2200
    %3849 = vmatprep.subr.mxu0 0.0
    %3850 = vmatpush1.msra.mxu0 0.0
    %3851 = vmatprep.subr.mxu0 0.0
    %3852 = vmatpush1.msra.mxu0 0.0
    %3853 = vmatprep.subr.mxu0 0.0
    %3854 = vmatpush1.msra.mxu0 0.0
    %3855 = vmatprep.subr.mxu0 0.0
    %3856 = vmatpush1.msra.mxu0 0.0
    %3857 = vmatprep.subr.mxu0 0.0
    %3858 = vmatpush1.msra.mxu0 0.0
    %3859 = vmatprep.subr.mxu0 0.0
    %3860 = vmatpush1.msra.mxu0 0.0
    %3861 = vmatprep.subr.mxu0 0.0
    %3862 = vmatpush1.msra.mxu0 0.0
    %3863 = vmatprep.subr.mxu0 0.0
    %3864 = vmatpush1.msra.mxu0 0.0
    %3865 = vmatprep.subr.mxu0 0.0
    %3866 = vmatpush1.msra.mxu0 0.0
    %3867 = vmatprep.subr.mxu0 0.0
    %3868 = vmatpush1.msra.mxu0 0.0
    %3869 = vmatprep.subr.mxu0 0.0
    %3870 = vmatpush1.msra.mxu0 0.0
    %3871 = vmatprep.subr.mxu0 0.0
    %3872 = vmatpush1.msra.mxu0 0.0
    %3873 = vmatprep.subr.mxu0 0.0
    %3874 = vmatpush1.msra.mxu0 0.0
    %3875 = vmatprep.subr.mxu0 0.0
    %3876 = vmatpush1.msra.mxu0 0.0
    %3877 = vmatprep.subr.mxu0 0.0
    %3878 = vmatpush1.msra.mxu0 0.0
    %3879 = vmatprep.subr.mxu0 0.0
    %3880 = vmatpush1.msra.mxu0 0.0
    %3881 = vmatprep.subr.mxu0 0.0
    %3882 = vmatpush1.msra.mxu0 0.0
    %3883 = vmatprep.subr.mxu0 0.0
    %3884 = vmatpush1.msra.mxu0 0.0
    %3885 = vmatprep.subr.mxu0 0.0
    %3886 = vmatpush1.msra.mxu0 0.0
    %3887 = vmatprep.subr.mxu0 0.0
    %3888 = vmatpush1.msra.mxu0 0.0
    %3889 = vmatprep.subr.mxu0 0.0
    %3890 = vmatpush1.msra.mxu0 0.0
    %3891 = vmatprep.subr.mxu0 0.0
    %3892 = vmatpush1.msra.mxu0 0.0
    %3893 = vmatprep.subr.mxu0 0.0
    %3894 = vmatpush1.msra.mxu0 0.0
    %3895 = vmatprep.subr.mxu0 0.0
    %3896 = vmatpush1.msra.mxu0 0.0
    %3897 = vmatprep.mubr.f32.mxu0 0.0
    %3898 = vmatmul.mubr.f32.gmra.mrb[0].mxu0 %v3828
    %v3899 = vpop.f32.mrb[0].mxu0
    %v3900 = vadd.f32 %v3820, %v3899
    %v3901 = vpop.f32.mrb[0].mxu0
    %v3902 = vadd.f32 %v3824, %v3901
    %3903 = vmatprep.mubr.f32.mxu0 0.0
    %3904 = vmatmul.mubr.f32.gmra.mrb[0].mxu0 %v3831
    %v3905 = vpop.f32.mrb[0].mxu0
    %v3906 = vadd.f32 %v3820, %v3905
    %v3907 = vpop.f32.mrb[0].mxu0
    %v3908 = vadd.f32 %v3824, %v3907
    %3909 = vdwg.mxu0
    %v3910 = vmul.f32 %v3900, 0.5
    %v3911 = vmul.f32 %v3902, 0.5
    %v3912 = vmul.f32 %v3906, 0.5
    %v3913 = vmul.f32 %v3908, 0.5
    %v3914 = vmul.f32 %v3900, 0.70710677
    %v3915 = vmul.f32 %v3902, 0.70710677
    %v3916 = vmul.f32 %v3906, 0.70710677
    %v3917 = vmul.f32 %v3908, 0.70710677
    %v3918 = vand.u32 2147483647, %v3914
    %v3919 = vand.u32 2147483647, %v3915
    %v3920 = vand.u32 2147483647, %v3916
    %v3921 = vand.u32 2147483647, %v3917
    %v3922 = vmul.f32 %v3918, 0.3275911
    %v3923 = vmul.f32 %v3919, 0.3275911
    %v3924 = vmul.f32 %v3920, 0.3275911
    %v3925 = vmul.f32 %v3921, 0.3275911
    %v3926 = vadd.f32 %v3922, 1.0
    %v3927 = vadd.f32 %v3923, 1.0
    %v3928 = vadd.f32 %v3924, 1.0
    %v3929 = vadd.f32 %v3925, 1.0
    %v3930 = vrcp.pop %v3926
    %v3931 = vmul.f32 1.0, %v3930
    %v3932 = vrcp.pop %v3927
    %v3933 = vmul.f32 1.0, %v3932
    %v3934 = vrcp.pop %v3928
    %v3935 = vmul.f32 1.0, %v3934
    %v3936 = vrcp.pop %v3929
    %v3937 = vmul.f32 1.0, %v3936
    %v3938 = vmul.f32 %v3931, 1.0614054
    %v3939 = vmul.f32 %v3933, 1.0614054
    %v3940 = vmul.f32 %v3935, 1.0614054
    %v3941 = vmul.f32 %v3937, 1.0614054
    %v3942 = vadd.f32 %v3938, -1.4531521
    %v3943 = vadd.f32 %v3939, -1.4531521
    %v3944 = vadd.f32 %v3940, -1.4531521
    %v3945 = vadd.f32 %v3941, -1.4531521
    %v3946 = vmul.f32 %v3942, %v3931
    %v3947 = vmul.f32 %v3943, %v3933
    %v3948 = vmul.f32 %v3944, %v3935
    %v3949 = vmul.f32 %v3945, %v3937
    %v3950 = vadd.f32 %v3946, 1.4214138
    %v3951 = vadd.f32 %v3947, 1.4214138
    %v3952 = vadd.f32 %v3948, 1.4214138
    %v3953 = vadd.f32 %v3949, 1.4214138
    %v3954 = vmul.f32 %v3950, %v3931
    %v3955 = vmul.f32 %v3951, %v3933
    %v3956 = vmul.f32 %v3952, %v3935
    %v3957 = vmul.f32 %v3953, %v3937
    %v3958 = vadd.f32 %v3954, -0.28449672
    %v3959 = vadd.f32 %v3955, -0.28449672
    %v3960 = vadd.f32 %v3956, -0.28449672
    %v3961 = vadd.f32 %v3957, -0.28449672
    %v3962 = vmul.f32 %v3958, %v3931
    %v3963 = vmul.f32 %v3959, %v3933
    %v3964 = vmul.f32 %v3960, %v3935
    %v3965 = vmul.f32 %v3961, %v3937
    %v3966 = vadd.f32 %v3962, 0.2548296
    %v3967 = vadd.f32 %v3963, 0.2548296
    %v3968 = vadd.f32 %v3964, 0.2548296
    %v3969 = vadd.f32 %v3965, 0.2548296
    %v3970 = vmul.f32 %v3966, %v3931
    %v3971 = vmul.f32 %v3967, %v3933
    %v3972 = vmul.f32 %v3968, %v3935
    %v3973 = vmul.f32 %v3969, %v3937
    %v3974 = vsub.f32 0.0, %v3918
    %v3975 = vsub.f32 0.0, %v3919
    %v3976 = vsub.f32 0.0, %v3920
    %v3977 = vsub.f32 0.0, %v3921
    %v3978 = vmul.f32 %v3974, %v3918
    %v3979 = vmul.f32 %v3975, %v3919
    %v3980 = vmul.f32 %v3976, %v3920
    %v3981 = vmul.f32 %v3977, %v3921
    %v3982 = vmul.f32 %v3978, 1.442695
    %v3983 = vpow.pop %v3982
    %v3984 = vmul.f32 %v3979, 1.442695
    %v3985 = vpow.pop %v3984
    %v3986 = vmul.f32 %v3980, 1.442695
    %v3987 = vpow.pop %v3986
    %v3988 = vmul.f32 %v3981, 1.442695
    %v3989 = vpow.pop %v3988
    %v3990 = vmul.f32 %v3970, %v3983
    %v3991 = vmul.f32 %v3971, %v3985
    %v3992 = vmul.f32 %v3972, %v3987
    %v3993 = vmul.f32 %v3973, %v3989
    %v3994 = vsub.f32 1.0, %v3990
    %v3995 = vsub.f32 1.0, %v3991
    %v3996 = vsub.f32 1.0, %v3992
    %v3997 = vsub.f32 1.0, %v3993
    %vm3998 = vcmp.lt.f32.partialorder %v3914, 0.0
    %vm3999 = vcmp.lt.f32.partialorder %v3915, 0.0
    %vm4000 = vcmp.lt.f32.partialorder %v3916, 0.0
    %vm4001 = vcmp.lt.f32.partialorder %v3917, 0.0
    %v4002 = vsub.f32 0.0, %v3994
    %v4003 = vsub.f32 0.0, %v3995
    %v4004 = vsub.f32 0.0, %v3996
    %v4005 = vsub.f32 0.0, %v3997
    %v4006 = vsel %vm3998, %v4002, %v3994
    %v4007 = vsel %vm3999, %v4003, %v3995
    %v4008 = vsel %vm4000, %v4004, %v3996
    %v4009 = vsel %vm4001, %v4005, %v3997
    %v4010 = vadd.f32 %v4006, 1.0
    %v4011 = vadd.f32 %v4007, 1.0
    %v4012 = vadd.f32 %v4008, 1.0
    %v4013 = vadd.f32 %v4009, 1.0
    %v4014 = vmul.f32 %v3910, %v4010
    %v4015 = vmul.f32 %v3911, %v4011
    %v4016 = vmul.f32 %v3912, %v4012
    %v4017 = vmul.f32 %v3913, %v4013
    %v4019 = vlaneseq
    %v4020 = vshrl.u32 %v4019, 7
    %v4021 = vsub.s32 0, %v4020
    %v4022 = vrot.slane %v2238, %v4021
    %4024 = vmatprep.subr.mxu0 0.0
    %4025 = vmatpush1.msra.mxu0 %v2205
    %4026 = vmatprep.subr.mxu0 0.0
    %4027 = vmatpush1.msra.mxu0 %v2206
    %4028 = vmatprep.subr.mxu0 0.0
    %4029 = vmatpush1.msra.mxu0 %v2207
    %4030 = vmatprep.subr.mxu0 0.0
    %4031 = vmatpush1.msra.mxu0 %v2208
    %4032 = vmatprep.subr.mxu0 0.0
    %4033 = vmatpush1.msra.mxu0 %v2209
    %4034 = vmatprep.subr.mxu0 0.0
    %4035 = vmatpush1.msra.mxu0 %v2210
    %4036 = vmatprep.subr.mxu0 0.0
    %4037 = vmatpush1.msra.mxu0 %v2211
    %4038 = vmatprep.subr.mxu0 0.0
    %4039 = vmatpush1.msra.mxu0 %v2212
    %4040 = vmatprep.subr.mxu0 0.0
    %4041 = vmatpush1.msra.mxu0 %v2213
    %4042 = vmatprep.subr.mxu0 0.0
    %4043 = vmatpush1.msra.mxu0 %v2214
    %4044 = vmatprep.subr.mxu0 0.0
    %4045 = vmatpush1.msra.mxu0 %v2215
    %4046 = vmatprep.subr.mxu0 0.0
    %4047 = vmatpush1.msra.mxu0 %v2216
    %4048 = vmatprep.subr.mxu0 0.0
    %4049 = vmatpush1.msra.mxu0 %v2217
    %4050 = vmatprep.subr.mxu0 0.0
    %4051 = vmatpush1.msra.mxu0 %v2218
    %4052 = vmatprep.subr.mxu0 0.0
    %4053 = vmatpush1.msra.mxu0 %v2219
    %4054 = vmatprep.subr.mxu0 0.0
    %4055 = vmatpush1.msra.mxu0 %v2220
    %4056 = vmatprep.subr.mxu0 0.0
    %4057 = vmatpush1.msra.mxu0 %v2221
    %4058 = vmatprep.subr.mxu0 0.0
    %4059 = vmatpush1.msra.mxu0 %v2222
    %4060 = vmatprep.subr.mxu0 0.0
    %4061 = vmatpush1.msra.mxu0 %v2223
    %4062 = vmatprep.subr.mxu0 0.0
    %4063 = vmatpush1.msra.mxu0 %v2224
    %4064 = vmatprep.subr.mxu0 0.0
    %4065 = vmatpush1.msra.mxu0 %v2225
    %4066 = vmatprep.subr.mxu0 0.0
    %4067 = vmatpush1.msra.mxu0 %v2226
    %4068 = vmatprep.subr.mxu0 0.0
    %4069 = vmatpush1.msra.mxu0 %v2227
    %4070 = vmatprep.subr.mxu0 0.0
    %4071 = vmatpush1.msra.mxu0 %v2228
    %4072 = vmatprep.subr.mxu0 0.0
    %4073 = vmatpush1.msra.mxu0 %v2229
    %4074 = vmatprep.subr.mxu0 0.0
    %4075 = vmatpush1.msra.mxu0 %v2230
    %4076 = vmatprep.subr.mxu0 0.0
    %4077 = vmatpush1.msra.mxu0 %v2231
    %4078 = vmatprep.subr.mxu0 0.0
    %4079 = vmatpush1.msra.mxu0 %v2232
    %4080 = vmatprep.subr.mxu0 0.0
    %4081 = vmatpush1.msra.mxu0 %v2233
    %4082 = vmatprep.subr.mxu0 0.0
    %4083 = vmatpush1.msra.mxu0 %v2234
    %4084 = vmatprep.subr.mxu0 0.0
    %4085 = vmatpush1.msra.mxu0 %v2235
    %4086 = vmatprep.subr.mxu0 0.0
    %4087 = vmatpush1.msra.mxu0 %v2236
    %4088 = vmatprep.mubr.f32.mxu0 %v4015
    %4089 = vmatmul.mubr.f32.gmra.mrb[0].mxu0 %v4014
    %v4090 = vpop.f32.mrb[0].mxu0
    %v4091 = vadd.f32 %v4022, %v4090
    %v4092 = vpop.f32.mrb[0].mxu0
    %4093 = vmatprep.mubr.f32.mxu0 %v4017
    %4094 = vmatmul.mubr.f32.gmra.mrb[0].mxu0 %v4016
    %v4095 = vpop.f32.mrb[0].mxu0
    %v4096 = vadd.f32 %v4022, %v4095
    %v4097 = vpop.f32.mrb[0].mxu0
    %4098 = vdwg.mxu0
    %v4099 = vadd.f32 %v3814, %v4091
    %v4100 = vadd.f32 %v3815, %v4096
    %v4101 = vsel %vm256, %v4099, 0.0
    %4102 = vadd.xlane.f32.xlu0 %v4101
    %v4103 = vpop.xlane.xlu0 %4102
    %v4104 = vsel %vm256, %v4100, 0.0
    %4105 = vadd.xlane.f32.xlu0 %v4104
    %v4106 = vpop.xlane.xlu0 %4105
    %v4107 = vmul.f32 %v4103, %v1787
    %v4108 = vmul.f32 %v4106, %v1787
    %v4109 = vsub.f32 %v4099, %v4107
    %v4110 = vsub.f32 %v4100, %v4108
    %v4111 = vmul.f32 %v4109, %v4109
    %v4112 = vmul.f32 %v4110, %v4110
    %v4113 = vsel %vm256, %v4111, 0.0
    %4114 = vadd.xlane.f32.xlu0 %v4113
    %v4115 = vpop.xlane.xlu0 %4114
    %v4116 = vsel %vm256, %v4112, 0.0
    %4117 = vadd.xlane.f32.xlu0 %v4116
    %v4118 = vpop.xlane.xlu0 %4117
    %v4119 = vmul.f32 %v4115, %v1787
    %v4120 = vmul.f32 %v4118, %v1787
    %v4121 = vadd.f32 %v4119, 1e-05
    %v4122 = vadd.f32 %v4120, 1e-05
    %v4123 = vrsqrt.pop %v4121
    %v4124 = vrsqrt.pop %v4122
    %v4125 = vmul.f32 %v4109, %v4123
    %v4126 = vmul.f32 %v4110, %v4124
    %v4128 = vlaneseq
    %v4129 = vshrl.u32 %v4128, 7
    %v4130 = vsub.s32 0, %v4129
    %v4131 = vrot.slane %v2240, %v4130
    %v4133 = vmul.f32 %v4125, %v4131
    %v4134 = vmul.f32 %v4126, %v4131
    %v4136 = vlaneseq
    %v4137 = vshrl.u32 %v4136, 7
    %v4138 = vsub.s32 0, %v4137
    %v4139 = vrot.slane %v2242, %v4138
    %v4141 = vadd.f32 %v4133, %v4139
    %v4142 = vadd.f32 %v4134, %v4139
    %v4143 = vld [vmem:[%s14] sm:$0x1]
    %v4144 = vld [vmem:[%s15] sm:$0x1]
    %v4145 = vsel %vm256, %v4141, 0.0
    %4146 = vadd.xlane.f32.xlu0 %v4145
    %v4147 = vpop.xlane.xlu0 %4146
    %v4148 = vsel %vm256, %v4142, 0.0
    %4149 = vadd.xlane.f32.xlu0 %v4148
    %v4150 = vpop.xlane.xlu0 %4149
    %v4151 = vmul.f32 %v4147, %v1787
    %v4152 = vmul.f32 %v4150, %v1787
    %v4153 = vsub.f32 %v4141, %v4151
    %v4154 = vsub.f32 %v4142, %v4152
    %v4155 = vmul.f32 %v4153, %v4153
    %v4156 = vmul.f32 %v4154, %v4154
    %v4157 = vsel %vm256, %v4155, 0.0
    %4158 = vadd.xlane.f32.xlu0 %v4157
    %v4159 = vpop.xlane.xlu0 %4158
    %v4160 = vsel %vm256, %v4156, 0.0
    %4161 = vadd.xlane.f32.xlu0 %v4160
    %v4162 = vpop.xlane.xlu0 %4161
    %v4163 = vmul.f32 %v4159, %v1787
    %v4164 = vmul.f32 %v4162, %v1787
    %v4165 = vadd.f32 %v4163, 1e-05
    %v4166 = vadd.f32 %v4164, 1e-05
    %v4167 = vrsqrt.pop %v4165
    %v4168 = vrsqrt.pop %v4166
    %v4169 = vmul.f32 %v4153, %v4167
    %v4170 = vmul.f32 %v4154, %v4168
    %v4172 = vlaneseq
    %v4173 = vshrl.u32 %v4172, 7
    %v4174 = vsub.s32 0, %v4173
    %v4175 = vrot.slane %v4143, %v4174
    %v4177 = vmul.f32 %v4169, %v4175
    %v4178 = vmul.f32 %v4170, %v4175
    %v4180 = vlaneseq
    %v4181 = vshrl.u32 %v4180, 7
    %v4182 = vsub.s32 0, %v4181
    %v4183 = vrot.slane %v4144, %v4182
    %v4185 = vadd.f32 %v4177, %v4183
    %v4186 = vadd.f32 %v4178, %v4183
    %v4187 = vld [vmem:[%s16] sm:$0xff]
    %v4188 = vld [vmem:[%s16 + $0x8] sm:$0xff]
    %v4189 = vld [vmem:[%s16 + $0x10] sm:$0xff]
    %v4190 = vld [vmem:[%s16 + $0x18] sm:$0xff]
    %v4191 = vld [vmem:[%s16 + $0x20] sm:$0xff]
    %v4192 = vld [vmem:[%s16 + $0x28] sm:$0xff]
    %v4193 = vld [vmem:[%s16 + $0x30] sm:$0xff]
    %v4194 = vld [vmem:[%s16 + $0x38] sm:$0xff]
    %v4195 = vld [vmem:[%s17] sm:$0x1]
    %v4197 = vlaneseq
    %v4198 = vshrl.u32 %v4197, 7
    %v4199 = vsub.s32 0, %v4198
    %v4200 = vrot.slane %v4195, %v4199
    %v4203 = vsel %vm256, %v4185, 0
    %v4206 = vsel %vm256, %v4186, 0
    %4208 = vmatprep.subr.mxu0 0.0
    %4209 = vmatpush1.msra.mxu0 %v4187
    %4210 = vmatprep.subr.mxu0 0.0
    %4211 = vmatpush1.msra.mxu0 %v4188
    %4212 = vmatprep.subr.mxu0 0.0
    %4213 = vmatpush1.msra.mxu0 %v4189
    %4214 = vmatprep.subr.mxu0 0.0
    %4215 = vmatpush1.msra.mxu0 %v4190
    %4216 = vmatprep.subr.mxu0 0.0
    %4217 = vmatpush1.msra.mxu0 %v4191
    %4218 = vmatprep.subr.mxu0 0.0
    %4219 = vmatpush1.msra.mxu0 %v4192
    %4220 = vmatprep.subr.mxu0 0.0
    %4221 = vmatpush1.msra.mxu0 %v4193
    %4222 = vmatprep.subr.mxu0 0.0
    %4223 = vmatpush1.msra.mxu0 %v4194
    %4224 = vmatprep.subr.mxu0 0.0
    %4225 = vmatpush1.msra.mxu0 0.0
    %4226 = vmatprep.subr.mxu0 0.0
    %4227 = vmatpush1.msra.mxu0 0.0
    %4228 = vmatprep.subr.mxu0 0.0
    %4229 = vmatpush1.msra.mxu0 0.0
    %4230 = vmatprep.subr.mxu0 0.0
    %4231 = vmatpush1.msra.mxu0 0.0
    %4232 = vmatprep.subr.mxu0 0.0
    %4233 = vmatpush1.msra.mxu0 0.0
    %4234 = vmatprep.subr.mxu0 0.0
    %4235 = vmatpush1.msra.mxu0 0.0
    %4236 = vmatprep.subr.mxu0 0.0
    %4237 = vmatpush1.msra.mxu0 0.0
    %4238 = vmatprep.subr.mxu0 0.0
    %4239 = vmatpush1.msra.mxu0 0.0
    %4240 = vmatprep.subr.mxu0 0.0
    %4241 = vmatpush1.msra.mxu0 0.0
    %4242 = vmatprep.subr.mxu0 0.0
    %4243 = vmatpush1.msra.mxu0 0.0
    %4244 = vmatprep.subr.mxu0 0.0
    %4245 = vmatpush1.msra.mxu0 0.0
    %4246 = vmatprep.subr.mxu0 0.0
    %4247 = vmatpush1.msra.mxu0 0.0
    %4248 = vmatprep.subr.mxu0 0.0
    %4249 = vmatpush1.msra.mxu0 0.0
    %4250 = vmatprep.subr.mxu0 0.0
    %4251 = vmatpush1.msra.mxu0 0.0
    %4252 = vmatprep.subr.mxu0 0.0
    %4253 = vmatpush1.msra.mxu0 0.0
    %4254 = vmatprep.subr.mxu0 0.0
    %4255 = vmatpush1.msra.mxu0 0.0
    %4256 = vmatprep.subr.mxu0 0.0
    %4257 = vmatpush1.msra.mxu0 0.0
    %4258 = vmatprep.subr.mxu0 0.0
    %4259 = vmatpush1.msra.mxu0 0.0
    %4260 = vmatprep.subr.mxu0 0.0
    %4261 = vmatpush1.msra.mxu0 0.0
    %4262 = vmatprep.subr.mxu0 0.0
    %4263 = vmatpush1.msra.mxu0 0.0
    %4264 = vmatprep.subr.mxu0 0.0
    %4265 = vmatpush1.msra.mxu0 0.0
    %4266 = vmatprep.subr.mxu0 0.0
    %4267 = vmatpush1.msra.mxu0 0.0
    %4268 = vmatprep.subr.mxu0 0.0
    %4269 = vmatpush1.msra.mxu0 0.0
    %4270 = vmatprep.subr.mxu0 0.0
    %4271 = vmatpush1.msra.mxu0 0.0
    %4272 = vmatprep.mubr.f32.mxu0 0.0
    %4273 = vmatmul.mubr.f32.gmra.mrb[0].mxu0 %v4203
    %v4274 = vpop.f32.mrb[0].mxu0
    %v4275 = vadd.f32 %v4200, %v4274
    %v4276 = vpop.f32.mrb[0].mxu0
    %4277 = vmatprep.mubr.f32.mxu0 0.0
    %4278 = vmatmul.mubr.f32.gmra.mrb[0].mxu0 %v4206
    %v4279 = vpop.f32.mrb[0].mxu0
    %v4280 = vadd.f32 %v4200, %v4279
    %v4281 = vpop.f32.mrb[0].mxu0
    %4282 = vdwg.mxu0
    %4283 = vst [vmem:[#allocation2] sm:$0xff] %v4275
    %4284 = vst [vmem:[#allocation2 + $0x8] sm:$0xff] %v4280
    // Predicated region
    $region74: #{tiny_llm_forward.1} parent=1 // pred_check
      _
    $region75: #{tiny_llm_forward.1} parent=1 // pred_check_branch
      %4286 = sbr.rel (0) target = $region77
    $region76: #{tiny_llm_forward.1} parent=1 // pred_region
      %s4288 = ssub.s32 256, 256
      %4289 = vsyncadd [#allocation3], %s4288
      %s4290 = sshll.u32 [#allocation2], 4
      %s4291 = int_to_ptr.vmem [resolvable:$true] %s4290
      %4296 = dma.vmem_to_hbm [thread:$0]  %s4291, 256, %s18, [#allocation3], 128, 128, 8
    $region77: #{tiny_llm_forward.1} parent=1 // pred_fallthru
      _
    // Predicated region
    $region78: #{tiny_llm_forward.1} parent=1 // pred_check
      _
    $region79: #{tiny_llm_forward.1} parent=1 // pred_check_branch
      %4298 = sbr.rel (0) target = $region81
    $region80: #{tiny_llm_forward.1} parent=1 // pred_region
      %4299 = dma.done [#allocation3], 256
    $region81: #{tiny_llm_forward.1} parent=1 // pred_fallthru
      _
    %4300 = vsyncpa [#allocation3], 1

</llo_original>
